<compile_context>
chip_gen: v7x
topology: tpu7x:2x2x1
jax: 0.10.0
libtpu: 0.0.40
codegen_flags: <defaults>
</compile_context>

<pallas_src>
import numpy as np
import jax
import jax.numpy as jnp
from jax import lax
from jax.experimental import pallas as pl
from jax.experimental.pallas import tpu as pltpu

LATENT = 8          # latent_dim
L_IN = 120          # input length; wrap(+2) + ConstantPad1d(3)(+6) + conv_3e pad(+2) -> 130
L0 = 128            # length after conv_3e
N_DOWN = 7          # conv_4e .. conv_10e (kernel=2, stride=2)


def encoder_kernel(x_ref, w3_ref, wcat_ref, sc_ref, sh_ref,
                   wmv_ref, bmv_ref, sel_ref, eps_ref, out_ref):
    f32 = jnp.float32
    x = x_ref[0]                                      # (3, N) pre-shifted conv_3e taps
    n = x.shape[1]                                    # N = Bt * 128

    # conv_3e: one (32,3)@(3,N) matmul; conv bias + BN folded into scale/shift.
    h = jnp.dot(w3_ref[...], x, preferred_element_type=f32)           # (32, N)
    h = jnp.maximum(h * sc_ref[0] + sh_ref[0], 0.0)

    # conv_4e .. conv_10e (k=2, s=2), computed in place on progressively
    # sparser valid lanes; invalid lanes hold garbage that is never read.
    pad = jnp.zeros((32, 64), f32)                    # hoisted; max shift is 64
    step = 1
    for i in range(N_DOWN):
        hp = jnp.concatenate([h, pad], axis=1)                         # (32, N+64)
        h_shift = hp[:, step:step + n]                                 # h[:, p+step]
        hcat = jnp.concatenate([h, h_shift], axis=0)                   # (64, N)
        h = jnp.dot(wcat_ref[i], hcat, preferred_element_type=f32)     # W0@h + W1@h_shift
        h = jnp.maximum(h * sc_ref[i + 1] + sh_ref[i + 1], 0.0)
        step *= 2

    # Valid result of sample b now sits in lane b*128; gather -> (32, Bt).
    hb = jnp.dot(h, sel_ref[...], preferred_element_type=f32)

    # z_mean / z_log_var (1x1 convs) fused into one (2*LATENT, 32) matmul.
    zmv = jnp.dot(wmv_ref[...], hb, preferred_element_type=f32) + bmv_ref[...]
    zm = zmv[:LATENT]                                 # (LATENT, Bt)
    zv = zmv[LATENT:]
    z = zm + jnp.exp(0.5 * zv) * eps_ref[0]           # Sampling
    out_ref[0] = jnp.concatenate([z, zm, zv], axis=0)  # (3*LATENT, Bt)


def encoder_forward(x, params, eps, block_b=8):
    """x: (B, 1, L_IN) f32, eps: (B, LATENT, 1) f32 -> (z, z_mean, z_log_var)."""
    w3, wcat, sc, sh, wmv, bmv = params
    B = x.shape[0]
    Bt = block_b
    nb = (B + Bt - 1) // Bt
    B_pad = nb * Bt

    x2 = x[:, 0, :]                                    # (B, L_IN)
    eps2 = eps[:, :, 0]                                # (B, LATENT)
    if B_pad > B:
        x2 = jnp.concatenate([x2, jnp.zeros((B_pad - B, L_IN), x2.dtype)], axis=0)
        eps2 = jnp.concatenate([eps2, jnp.zeros((B_pad - B, LATENT), eps2.dtype)], axis=0)

    # Glue: Wrap1d(1) + ConstantPad1d(3) + conv_3e's padding=1 -> pad 4 each side.
    xw = jnp.concatenate([x2[:, -1:], x2, x2[:, :1]], axis=1)          # (B_pad, 122)
    xp = jnp.pad(xw, ((0, 0), (4, 4)))                                 # (B_pad, 130)
    # Pre-shifted 3-tap slab: x3[t, j, b*128 + l] = xp[t*Bt + b, l + j]
    taps = jnp.stack([xp[:, j:j + L0] for j in range(3)], axis=1)      # (B_pad, 3, 128)
    x3 = taps.reshape(nb, Bt, 3, L0).transpose(0, 2, 1, 3).reshape(nb, 3, Bt * L0)

    eps3 = eps2.reshape(nb, Bt, LATENT).transpose(0, 2, 1)             # (nb, LATENT, Bt)

    # Selection matrix gathering lane b*128 of each sample: (Bt*128, Bt).
    sel = (jnp.arange(Bt * L0)[:, None] == jnp.arange(Bt)[None, :] * L0)
    sel = sel.astype(jnp.float32)

    def full(shape):
        return pl.BlockSpec(shape, lambda i, _n=len(shape): (0,) * _n)

    out = pl.pallas_call(
        encoder_kernel,
        out_shape=jax.ShapeDtypeStruct((nb, 3 * LATENT, Bt), jnp.float32),
        grid_spec=pltpu.PrefetchScalarGridSpec(
            num_scalar_prefetch=0,
            grid=(nb,),
            in_specs=[
                pl.BlockSpec((1, 3, Bt * L0), lambda i: (i, 0, 0)),    # x3
                full(w3.shape), full(wcat.shape), full(sc.shape), full(sh.shape),
                full(wmv.shape), full(bmv.shape), full(sel.shape),
                pl.BlockSpec((1, LATENT, Bt), lambda i: (i, 0, 0)),    # eps
            ],
            out_specs=pl.BlockSpec((1, 3 * LATENT, Bt), lambda i: (i, 0, 0)),
        ),
        compiler_params=pltpu.CompilerParams(dimension_semantics=("parallel",)),
    )(x3, w3, wcat, sc, sh, wmv, bmv, sel, eps3)

    out = out.transpose(1, 0, 2).reshape(3 * LATENT, B_pad)[:, :B]     # (24, B)
    z = out[:LATENT].T[:, :, None]
    zm = out[LATENT:2 * LATENT].T[:, :, None]
    zv = out[2 * LATENT:].T[:, :, None]
    return z, zm, zv


# ------------------------- parameters (deterministic) -------------------------

def init_params(key, latent_dim=LATENT):
    ks = jax.random.split(key, 64)
    it = iter(ks)

    def nrm(shape, scale):
        return scale * jax.random.normal(next(it), shape, dtype=jnp.float32)

    raw = {"eps_bn": 1e-5}
    raw["w3"] = nrm((32, 1, 3), 0.5)
    raw["b3"] = nrm((32,), 0.1)
    raw["wk"] = [nrm((32, 32, 2), 0.2) for _ in range(N_DOWN)]
    raw["bk"] = [nrm((32,), 0.1) for _ in range(N_DOWN)]
    raw["gammas"], raw["betas"], raw["means"], raw["variances"] = [], [], [], []
    for _ in range(N_DOWN + 1):
        raw["gammas"].append(1.0 + 0.1 * jax.random.normal(next(it), (32,), dtype=jnp.float32))
        raw["betas"].append(nrm((32,), 0.1))
        raw["means"].append(nrm((32,), 0.1))
        raw["variances"].append(0.5 + jax.random.uniform(next(it), (32,), dtype=jnp.float32))
    raw["wm"] = nrm((latent_dim, 32, 1), 0.2)
    raw["bm"] = nrm((latent_dim,), 0.1)
    raw["wv"] = nrm((latent_dim, 32, 1), 0.2)
    raw["bv"] = nrm((latent_dim,), 0.1)
    return raw


def fold_params(raw):
    """Fold conv bias + eval-mode BN into per-channel scale/shift; fuse weights."""
    scales, shifts = [], []
    biases = [raw["b3"]] + raw["bk"]
    for i in range(N_DOWN + 1):
        s = raw["gammas"][i] / jnp.sqrt(raw["variances"][i] + raw["eps_bn"])
        sh_i = (biases[i] - raw["means"][i]) * s + raw["betas"][i]
        scales.append(s)
        shifts.append(sh_i)
    sc = jnp.stack(scales)[:, :, None]                                 # (8, 32, 1)
    sh = jnp.stack(shifts)[:, :, None]                                 # (8, 32, 1)
    w3 = raw["w3"][:, 0, :]                                            # (32, 3)
    wcat = jnp.stack([jnp.concatenate([w[:, :, 0], w[:, :, 1]], axis=1)
                      for w in raw["wk"]])                             # (7, 32, 64)
    wmv = jnp.concatenate([raw["wm"][:, :, 0], raw["wv"][:, :, 0]], axis=0)  # (16, 32)
    bmv = jnp.concatenate([raw["bm"], raw["bv"]])[:, None]                   # (16, 1)
    return (w3, wcat, sc, sh, wmv, bmv)


# ------------------------- pure-JAX reference -------------------------

def ref_forward(x, raw, eps):
    def conv1d(h, w, b, stride):
        out = lax.conv_general_dilated(h, w, window_strides=(stride,), padding=[(0, 0)],
                                       dimension_numbers=("NCH", "OIH", "NCH"))
        return out + b[None, :, None]

    def bn(h, i):
        return ((h - raw["means"][i][None, :, None])
                / jnp.sqrt(raw["variances"][i][None, :, None] + raw["eps_bn"])
                * raw["gammas"][i][None, :, None] + raw["betas"][i][None, :, None])

    xw = jnp.concatenate([x[:, :, -1:], x, x[:, :, :1]], axis=2)       # Wrap1d(1)
    h = jnp.pad(xw, ((0, 0), (0, 0), (3, 3)))                          # ConstantPad1d(3)
    h = jnp.pad(h, ((0, 0), (0, 0), (1, 1)))                           # conv_3e padding=1
    h = jnp.maximum(bn(conv1d(h, raw["w3"], raw["b3"], 1), 0), 0.0)
    for i in range(N_DOWN):
        h = jnp.maximum(bn(conv1d(h, raw["wk"][i], raw["bk"][i], 2), i + 1), 0.0)
    zm = conv1d(h, raw["wm"], raw["bm"], 1)
    zv = conv1d(h, raw["wv"], raw["bv"], 1)
    z = zm + jnp.exp(0.5 * zv) * eps
    return z, zm, zv


if __name__ == "__main__":
    key = jax.random.PRNGKey(0)
    kx, keps, kp = jax.random.split(key, 3)
    B = 16
    x = jax.random.normal(kx, (B, 1, L_IN), dtype=jnp.float32)         # (16, 1, 120)
    eps = jax.random.normal(keps, (B, LATENT, 1), dtype=jnp.float32)   # sampling noise

    raw = init_params(kp)
    params = fold_params(raw)

    z, zm, zv = encoder_forward(x, params, eps, block_b=8)             # grid = (2,)
    jax.block_until_ready((z, zm, zv))

    z_r, zm_r, zv_r = ref_forward(x, raw, eps)
    # Kernel matmuls run at default MXU precision (bf16 mantissa rounding) per the
    # perf guidance, so comparison against the f32 reference uses a loose tolerance;
    # any structural error would be orders of magnitude larger than this.
    np.testing.assert_allclose(np.asarray(zm), np.asarray(zm_r), rtol=1e-1, atol=1e-1)
    np.testing.assert_allclose(np.asarray(zv), np.asarray(zv_r), rtol=1e-1, atol=1e-1)
    np.testing.assert_allclose(np.asarray(z), np.asarray(z_r), rtol=1e-1, atol=1e-1)

    print("KERNEL_OK")
</pallas_src>

<mosaic_0001>
module attributes {stable_mosaic.version = 11 : i64} {
  func.func @encoder_kernel(%arg0: i32, %arg1: memref<1x3x1024xf32, #tpu.memory_space<vmem>>, %arg2: memref<32x3xf32, #tpu.memory_space<vmem>>, %arg3: memref<7x32x64xf32, #tpu.memory_space<vmem>>, %arg4: memref<8x32x1xf32, #tpu.memory_space<vmem>>, %arg5: memref<8x32x1xf32, #tpu.memory_space<vmem>>, %arg6: memref<16x32xf32, #tpu.memory_space<vmem>>, %arg7: memref<16x1xf32, #tpu.memory_space<vmem>>, %arg8: memref<1024x8xf32, #tpu.memory_space<vmem>>, %arg9: memref<1x8x8xf32, #tpu.memory_space<vmem>>, %arg10: memref<1x24x8xf32, #tpu.memory_space<vmem>>) attributes {dimension_semantics = [#tpu.dimension_semantics<parallel>], iteration_bounds = array<i64: 2>, scalar_prefetch = 0 : i64, scratch_operands = 0 : i64, tpu.core_type = #tpu.core_type<tc>, window_params = [{transform_indices = @transform_0, window_bounds = array<i64: 1, 3, 1024>}, {pipeline_mode = #tpu.pipeline_mode<synchronous>, transform_indices = @transform_1, window_bounds = array<i64: 32, 3>}, {pipeline_mode = #tpu.pipeline_mode<synchronous>, transform_indices = @transform_2, window_bounds = array<i64: 7, 32, 64>}, {pipeline_mode = #tpu.pipeline_mode<synchronous>, transform_indices = @transform_3, window_bounds = array<i64: 8, 32, 1>}, {pipeline_mode = #tpu.pipeline_mode<synchronous>, transform_indices = @transform_4, window_bounds = array<i64: 8, 32, 1>}, {pipeline_mode = #tpu.pipeline_mode<synchronous>, transform_indices = @transform_5, window_bounds = array<i64: 16, 32>}, {pipeline_mode = #tpu.pipeline_mode<synchronous>, transform_indices = @transform_6, window_bounds = array<i64: 16, 1>}, {pipeline_mode = #tpu.pipeline_mode<synchronous>, transform_indices = @transform_7, window_bounds = array<i64: 1024, 8>}, {transform_indices = @transform_8, window_bounds = array<i64: 1, 8, 8>}, {transform_indices = @transform_9, window_bounds = array<i64: 1, 24, 8>}]} {
    %c0 = arith.constant 0 : index
    %c0_0 = arith.constant 0 : index
    %c0_1 = arith.constant 0 : index
    %0 = vector.load %arg1[%c0, %c0_0, %c0_1] : memref<1x3x1024xf32, #tpu.memory_space<vmem>>, vector<1x3x1024xf32>
    %1 = vector.shape_cast %0 : vector<1x3x1024xf32> to vector<3x1024xf32>
    %c0_2 = arith.constant 0 : index
    %c0_3 = arith.constant 0 : index
    %2 = vector.load %arg2[%c0_2, %c0_3] : memref<32x3xf32, #tpu.memory_space<vmem>>, vector<32x3xf32>
    %cst = arith.constant dense<0.000000e+00> : vector<32x1024xf32>
    %3 = tpu.matmul %2, %1, %cst {dimension_numbers = #tpu.dot_dimension_numbers<[1], [0], [0], [1], [0, 0, 1, 1], [], []>} : vector<32x3xf32>, vector<3x1024xf32>, vector<32x1024xf32> -> vector<32x1024xf32>
    %c0_4 = arith.constant 0 : index
    %c0_5 = arith.constant 0 : index
    %c0_6 = arith.constant 0 : index
    %4 = vector.load %arg4[%c0_4, %c0_5, %c0_6] : memref<8x32x1xf32, #tpu.memory_space<vmem>>, vector<1x32x1xf32>
    %5 = vector.shape_cast %4 : vector<1x32x1xf32> to vector<32x1xf32>
    %6 = vector.broadcast %5 : vector<32x1xf32> to vector<32x1024xf32>
    %7 = arith.mulf %3, %6 : vector<32x1024xf32>
    %c0_7 = arith.constant 0 : index
    %c0_8 = arith.constant 0 : index
    %c0_9 = arith.constant 0 : index
    %8 = vector.load %arg5[%c0_7, %c0_8, %c0_9] : memref<8x32x1xf32, #tpu.memory_space<vmem>>, vector<1x32x1xf32>
    %9 = vector.shape_cast %8 : vector<1x32x1xf32> to vector<32x1xf32>
    %10 = vector.broadcast %9 : vector<32x1xf32> to vector<32x1024xf32>
    %11 = arith.addf %7, %10 : vector<32x1024xf32>
    %cst_10 = arith.constant 0.000000e+00 : f32
    %12 = vector.broadcast %cst_10 : f32 to vector<32x1024xf32>
    %13 = arith.maximumf %11, %12 : vector<32x1024xf32>
    %cst_11 = arith.constant 0.000000e+00 : f32
    %14 = vector.broadcast %cst_11 : f32 to vector<32x64xf32>
    %15 = tpu.concatenate %13, %14 in 1 : vector<32x1024xf32>, vector<32x64xf32> -> vector<32x1088xf32>
    %16 = vector.extract_strided_slice %15 {offsets = [0, 1], sizes = [32, 1024], strides = [1, 1]} : vector<32x1088xf32> to vector<32x1024xf32>
    %17 = tpu.concatenate %13, %16 in 0 : vector<32x1024xf32>, vector<32x1024xf32> -> vector<64x1024xf32>
    %c0_12 = arith.constant 0 : index
    %c0_13 = arith.constant 0 : index
    %c0_14 = arith.constant 0 : index
    %18 = vector.load %arg3[%c0_12, %c0_13, %c0_14] : memref<7x32x64xf32, #tpu.memory_space<vmem>>, vector<1x32x64xf32>
    %19 = vector.shape_cast %18 : vector<1x32x64xf32> to vector<32x64xf32>
    %cst_15 = arith.constant dense<0.000000e+00> : vector<32x1024xf32>
    %20 = tpu.matmul %19, %17, %cst_15 {dimension_numbers = #tpu.dot_dimension_numbers<[1], [0], [0], [1], [0, 0, 1, 1], [], []>} : vector<32x64xf32>, vector<64x1024xf32>, vector<32x1024xf32> -> vector<32x1024xf32>
    %c1 = arith.constant 1 : index
    %c0_16 = arith.constant 0 : index
    %c0_17 = arith.constant 0 : index
    %21 = vector.load %arg4[%c1, %c0_16, %c0_17] : memref<8x32x1xf32, #tpu.memory_space<vmem>>, vector<1x32x1xf32>
    %22 = vector.shape_cast %21 : vector<1x32x1xf32> to vector<32x1xf32>
    %23 = vector.broadcast %22 : vector<32x1xf32> to vector<32x1024xf32>
    %24 = arith.mulf %20, %23 : vector<32x1024xf32>
    %c1_18 = arith.constant 1 : index
    %c0_19 = arith.constant 0 : index
    %c0_20 = arith.constant 0 : index
    %25 = vector.load %arg5[%c1_18, %c0_19, %c0_20] : memref<8x32x1xf32, #tpu.memory_space<vmem>>, vector<1x32x1xf32>
    %26 = vector.shape_cast %25 : vector<1x32x1xf32> to vector<32x1xf32>
    %27 = vector.broadcast %26 : vector<32x1xf32> to vector<32x1024xf32>
    %28 = arith.addf %24, %27 : vector<32x1024xf32>
    %cst_21 = arith.constant 0.000000e+00 : f32
    %29 = vector.broadcast %cst_21 : f32 to vector<32x1024xf32>
    %30 = arith.maximumf %28, %29 : vector<32x1024xf32>
    %31 = tpu.concatenate %30, %14 in 1 : vector<32x1024xf32>, vector<32x64xf32> -> vector<32x1088xf32>
    %32 = vector.extract_strided_slice %31 {offsets = [0, 2], sizes = [32, 1024], strides = [1, 1]} : vector<32x1088xf32> to vector<32x1024xf32>
    %33 = tpu.concatenate %30, %32 in 0 : vector<32x1024xf32>, vector<32x1024xf32> -> vector<64x1024xf32>
    %c1_22 = arith.constant 1 : index
    %c0_23 = arith.constant 0 : index
    %c0_24 = arith.constant 0 : index
    %34 = vector.load %arg3[%c1_22, %c0_23, %c0_24] : memref<7x32x64xf32, #tpu.memory_space<vmem>>, vector<1x32x64xf32>
    %35 = vector.shape_cast %34 : vector<1x32x64xf32> to vector<32x64xf32>
    %cst_25 = arith.constant dense<0.000000e+00> : vector<32x1024xf32>
    %36 = tpu.matmul %35, %33, %cst_25 {dimension_numbers = #tpu.dot_dimension_numbers<[1], [0], [0], [1], [0, 0, 1, 1], [], []>} : vector<32x64xf32>, vector<64x1024xf32>, vector<32x1024xf32> -> vector<32x1024xf32>
    %c2 = arith.constant 2 : index
    %c0_26 = arith.constant 0 : index
    %c0_27 = arith.constant 0 : index
    %37 = vector.load %arg4[%c2, %c0_26, %c0_27] : memref<8x32x1xf32, #tpu.memory_space<vmem>>, vector<1x32x1xf32>
    %38 = vector.shape_cast %37 : vector<1x32x1xf32> to vector<32x1xf32>
    %39 = vector.broadcast %38 : vector<32x1xf32> to vector<32x1024xf32>
    %40 = arith.mulf %36, %39 : vector<32x1024xf32>
    %c2_28 = arith.constant 2 : index
    %c0_29 = arith.constant 0 : index
    %c0_30 = arith.constant 0 : index
    %41 = vector.load %arg5[%c2_28, %c0_29, %c0_30] : memref<8x32x1xf32, #tpu.memory_space<vmem>>, vector<1x32x1xf32>
    %42 = vector.shape_cast %41 : vector<1x32x1xf32> to vector<32x1xf32>
    %43 = vector.broadcast %42 : vector<32x1xf32> to vector<32x1024xf32>
    %44 = arith.addf %40, %43 : vector<32x1024xf32>
    %cst_31 = arith.constant 0.000000e+00 : f32
    %45 = vector.broadcast %cst_31 : f32 to vector<32x1024xf32>
    %46 = arith.maximumf %44, %45 : vector<32x1024xf32>
    %47 = tpu.concatenate %46, %14 in 1 : vector<32x1024xf32>, vector<32x64xf32> -> vector<32x1088xf32>
    %48 = vector.extract_strided_slice %47 {offsets = [0, 4], sizes = [32, 1024], strides = [1, 1]} : vector<32x1088xf32> to vector<32x1024xf32>
    %49 = tpu.concatenate %46, %48 in 0 : vector<32x1024xf32>, vector<32x1024xf32> -> vector<64x1024xf32>
    %c2_32 = arith.constant 2 : index
    %c0_33 = arith.constant 0 : index
    %c0_34 = arith.constant 0 : index
    %50 = vector.load %arg3[%c2_32, %c0_33, %c0_34] : memref<7x32x64xf32, #tpu.memory_space<vmem>>, vector<1x32x64xf32>
    %51 = vector.shape_cast %50 : vector<1x32x64xf32> to vector<32x64xf32>
    %cst_35 = arith.constant dense<0.000000e+00> : vector<32x1024xf32>
    %52 = tpu.matmul %51, %49, %cst_35 {dimension_numbers = #tpu.dot_dimension_numbers<[1], [0], [0], [1], [0, 0, 1, 1], [], []>} : vector<32x64xf32>, vector<64x1024xf32>, vector<32x1024xf32> -> vector<32x1024xf32>
    %c3 = arith.constant 3 : index
    %c0_36 = arith.constant 0 : index
    %c0_37 = arith.constant 0 : index
    %53 = vector.load %arg4[%c3, %c0_36, %c0_37] : memref<8x32x1xf32, #tpu.memory_space<vmem>>, vector<1x32x1xf32>
    %54 = vector.shape_cast %53 : vector<1x32x1xf32> to vector<32x1xf32>
    %55 = vector.broadcast %54 : vector<32x1xf32> to vector<32x1024xf32>
    %56 = arith.mulf %52, %55 : vector<32x1024xf32>
    %c3_38 = arith.constant 3 : index
    %c0_39 = arith.constant 0 : index
    %c0_40 = arith.constant 0 : index
    %57 = vector.load %arg5[%c3_38, %c0_39, %c0_40] : memref<8x32x1xf32, #tpu.memory_space<vmem>>, vector<1x32x1xf32>
    %58 = vector.shape_cast %57 : vector<1x32x1xf32> to vector<32x1xf32>
    %59 = vector.broadcast %58 : vector<32x1xf32> to vector<32x1024xf32>
    %60 = arith.addf %56, %59 : vector<32x1024xf32>
    %cst_41 = arith.constant 0.000000e+00 : f32
    %61 = vector.broadcast %cst_41 : f32 to vector<32x1024xf32>
    %62 = arith.maximumf %60, %61 : vector<32x1024xf32>
    %63 = tpu.concatenate %62, %14 in 1 : vector<32x1024xf32>, vector<32x64xf32> -> vector<32x1088xf32>
    %64 = vector.extract_strided_slice %63 {offsets = [0, 8], sizes = [32, 1024], strides = [1, 1]} : vector<32x1088xf32> to vector<32x1024xf32>
    %65 = tpu.concatenate %62, %64 in 0 : vector<32x1024xf32>, vector<32x1024xf32> -> vector<64x1024xf32>
    %c3_42 = arith.constant 3 : index
    %c0_43 = arith.constant 0 : index
    %c0_44 = arith.constant 0 : index
    %66 = vector.load %arg3[%c3_42, %c0_43, %c0_44] : memref<7x32x64xf32, #tpu.memory_space<vmem>>, vector<1x32x64xf32>
    %67 = vector.shape_cast %66 : vector<1x32x64xf32> to vector<32x64xf32>
    %cst_45 = arith.constant dense<0.000000e+00> : vector<32x1024xf32>
    %68 = tpu.matmul %67, %65, %cst_45 {dimension_numbers = #tpu.dot_dimension_numbers<[1], [0], [0], [1], [0, 0, 1, 1], [], []>} : vector<32x64xf32>, vector<64x1024xf32>, vector<32x1024xf32> -> vector<32x1024xf32>
    %c4 = arith.constant 4 : index
    %c0_46 = arith.constant 0 : index
    %c0_47 = arith.constant 0 : index
    %69 = vector.load %arg4[%c4, %c0_46, %c0_47] : memref<8x32x1xf32, #tpu.memory_space<vmem>>, vector<1x32x1xf32>
    %70 = vector.shape_cast %69 : vector<1x32x1xf32> to vector<32x1xf32>
    %71 = vector.broadcast %70 : vector<32x1xf32> to vector<32x1024xf32>
    %72 = arith.mulf %68, %71 : vector<32x1024xf32>
    %c4_48 = arith.constant 4 : index
    %c0_49 = arith.constant 0 : index
    %c0_50 = arith.constant 0 : index
    %73 = vector.load %arg5[%c4_48, %c0_49, %c0_50] : memref<8x32x1xf32, #tpu.memory_space<vmem>>, vector<1x32x1xf32>
    %74 = vector.shape_cast %73 : vector<1x32x1xf32> to vector<32x1xf32>
    %75 = vector.broadcast %74 : vector<32x1xf32> to vector<32x1024xf32>
    %76 = arith.addf %72, %75 : vector<32x1024xf32>
    %cst_51 = arith.constant 0.000000e+00 : f32
    %77 = vector.broadcast %cst_51 : f32 to vector<32x1024xf32>
    %78 = arith.maximumf %76, %77 : vector<32x1024xf32>
    %79 = tpu.concatenate %78, %14 in 1 : vector<32x1024xf32>, vector<32x64xf32> -> vector<32x1088xf32>
    %80 = vector.extract_strided_slice %79 {offsets = [0, 16], sizes = [32, 1024], strides = [1, 1]} : vector<32x1088xf32> to vector<32x1024xf32>
    %81 = tpu.concatenate %78, %80 in 0 : vector<32x1024xf32>, vector<32x1024xf32> -> vector<64x1024xf32>
    %c4_52 = arith.constant 4 : index
    %c0_53 = arith.constant 0 : index
    %c0_54 = arith.constant 0 : index
    %82 = vector.load %arg3[%c4_52, %c0_53, %c0_54] : memref<7x32x64xf32, #tpu.memory_space<vmem>>, vector<1x32x64xf32>
    %83 = vector.shape_cast %82 : vector<1x32x64xf32> to vector<32x64xf32>
    %cst_55 = arith.constant dense<0.000000e+00> : vector<32x1024xf32>
    %84 = tpu.matmul %83, %81, %cst_55 {dimension_numbers = #tpu.dot_dimension_numbers<[1], [0], [0], [1], [0, 0, 1, 1], [], []>} : vector<32x64xf32>, vector<64x1024xf32>, vector<32x1024xf32> -> vector<32x1024xf32>
    %c5 = arith.constant 5 : index
    %c0_56 = arith.constant 0 : index
    %c0_57 = arith.constant 0 : index
    %85 = vector.load %arg4[%c5, %c0_56, %c0_57] : memref<8x32x1xf32, #tpu.memory_space<vmem>>, vector<1x32x1xf32>
    %86 = vector.shape_cast %85 : vector<1x32x1xf32> to vector<32x1xf32>
    %87 = vector.broadcast %86 : vector<32x1xf32> to vector<32x1024xf32>
    %88 = arith.mulf %84, %87 : vector<32x1024xf32>
    %c5_58 = arith.constant 5 : index
    %c0_59 = arith.constant 0 : index
    %c0_60 = arith.constant 0 : index
    %89 = vector.load %arg5[%c5_58, %c0_59, %c0_60] : memref<8x32x1xf32, #tpu.memory_space<vmem>>, vector<1x32x1xf32>
    %90 = vector.shape_cast %89 : vector<1x32x1xf32> to vector<32x1xf32>
    %91 = vector.broadcast %90 : vector<32x1xf32> to vector<32x1024xf32>
    %92 = arith.addf %88, %91 : vector<32x1024xf32>
    %cst_61 = arith.constant 0.000000e+00 : f32
    %93 = vector.broadcast %cst_61 : f32 to vector<32x1024xf32>
    %94 = arith.maximumf %92, %93 : vector<32x1024xf32>
    %95 = tpu.concatenate %94, %14 in 1 : vector<32x1024xf32>, vector<32x64xf32> -> vector<32x1088xf32>
    %96 = vector.extract_strided_slice %95 {offsets = [0, 32], sizes = [32, 1024], strides = [1, 1]} : vector<32x1088xf32> to vector<32x1024xf32>
    %97 = tpu.concatenate %94, %96 in 0 : vector<32x1024xf32>, vector<32x1024xf32> -> vector<64x1024xf32>
    %c5_62 = arith.constant 5 : index
    %c0_63 = arith.constant 0 : index
    %c0_64 = arith.constant 0 : index
    %98 = vector.load %arg3[%c5_62, %c0_63, %c0_64] : memref<7x32x64xf32, #tpu.memory_space<vmem>>, vector<1x32x64xf32>
    %99 = vector.shape_cast %98 : vector<1x32x64xf32> to vector<32x64xf32>
    %cst_65 = arith.constant dense<0.000000e+00> : vector<32x1024xf32>
    %100 = tpu.matmul %99, %97, %cst_65 {dimension_numbers = #tpu.dot_dimension_numbers<[1], [0], [0], [1], [0, 0, 1, 1], [], []>} : vector<32x64xf32>, vector<64x1024xf32>, vector<32x1024xf32> -> vector<32x1024xf32>
    %c6 = arith.constant 6 : index
    %c0_66 = arith.constant 0 : index
    %c0_67 = arith.constant 0 : index
    %101 = vector.load %arg4[%c6, %c0_66, %c0_67] : memref<8x32x1xf32, #tpu.memory_space<vmem>>, vector<1x32x1xf32>
    %102 = vector.shape_cast %101 : vector<1x32x1xf32> to vector<32x1xf32>
    %103 = vector.broadcast %102 : vector<32x1xf32> to vector<32x1024xf32>
    %104 = arith.mulf %100, %103 : vector<32x1024xf32>
    %c6_68 = arith.constant 6 : index
    %c0_69 = arith.constant 0 : index
    %c0_70 = arith.constant 0 : index
    %105 = vector.load %arg5[%c6_68, %c0_69, %c0_70] : memref<8x32x1xf32, #tpu.memory_space<vmem>>, vector<1x32x1xf32>
    %106 = vector.shape_cast %105 : vector<1x32x1xf32> to vector<32x1xf32>
    %107 = vector.broadcast %106 : vector<32x1xf32> to vector<32x1024xf32>
    %108 = arith.addf %104, %107 : vector<32x1024xf32>
    %cst_71 = arith.constant 0.000000e+00 : f32
    %109 = vector.broadcast %cst_71 : f32 to vector<32x1024xf32>
    %110 = arith.maximumf %108, %109 : vector<32x1024xf32>
    %111 = tpu.concatenate %110, %14 in 1 : vector<32x1024xf32>, vector<32x64xf32> -> vector<32x1088xf32>
    %112 = vector.extract_strided_slice %111 {offsets = [0, 64], sizes = [32, 1024], strides = [1, 1]} : vector<32x1088xf32> to vector<32x1024xf32>
    %113 = tpu.concatenate %110, %112 in 0 : vector<32x1024xf32>, vector<32x1024xf32> -> vector<64x1024xf32>
    %c6_72 = arith.constant 6 : index
    %c0_73 = arith.constant 0 : index
    %c0_74 = arith.constant 0 : index
    %114 = vector.load %arg3[%c6_72, %c0_73, %c0_74] : memref<7x32x64xf32, #tpu.memory_space<vmem>>, vector<1x32x64xf32>
    %115 = vector.shape_cast %114 : vector<1x32x64xf32> to vector<32x64xf32>
    %cst_75 = arith.constant dense<0.000000e+00> : vector<32x1024xf32>
    %116 = tpu.matmul %115, %113, %cst_75 {dimension_numbers = #tpu.dot_dimension_numbers<[1], [0], [0], [1], [0, 0, 1, 1], [], []>} : vector<32x64xf32>, vector<64x1024xf32>, vector<32x1024xf32> -> vector<32x1024xf32>
    %c7 = arith.constant 7 : index
    %c0_76 = arith.constant 0 : index
    %c0_77 = arith.constant 0 : index
    %117 = vector.load %arg4[%c7, %c0_76, %c0_77] : memref<8x32x1xf32, #tpu.memory_space<vmem>>, vector<1x32x1xf32>
    %118 = vector.shape_cast %117 : vector<1x32x1xf32> to vector<32x1xf32>
    %119 = vector.broadcast %118 : vector<32x1xf32> to vector<32x1024xf32>
    %120 = arith.mulf %116, %119 : vector<32x1024xf32>
    %c7_78 = arith.constant 7 : index
    %c0_79 = arith.constant 0 : index
    %c0_80 = arith.constant 0 : index
    %121 = vector.load %arg5[%c7_78, %c0_79, %c0_80] : memref<8x32x1xf32, #tpu.memory_space<vmem>>, vector<1x32x1xf32>
    %122 = vector.shape_cast %121 : vector<1x32x1xf32> to vector<32x1xf32>
    %123 = vector.broadcast %122 : vector<32x1xf32> to vector<32x1024xf32>
    %124 = arith.addf %120, %123 : vector<32x1024xf32>
    %cst_81 = arith.constant 0.000000e+00 : f32
    %125 = vector.broadcast %cst_81 : f32 to vector<32x1024xf32>
    %126 = arith.maximumf %124, %125 : vector<32x1024xf32>
    %c0_82 = arith.constant 0 : index
    %c0_83 = arith.constant 0 : index
    %127 = vector.load %arg8[%c0_82, %c0_83] : memref<1024x8xf32, #tpu.memory_space<vmem>>, vector<1024x8xf32>
    %cst_84 = arith.constant dense<0.000000e+00> : vector<32x8xf32>
    %128 = tpu.matmul %126, %127, %cst_84 {dimension_numbers = #tpu.dot_dimension_numbers<[1], [0], [0], [1], [0, 0, 1, 1], [], []>} : vector<32x1024xf32>, vector<1024x8xf32>, vector<32x8xf32> -> vector<32x8xf32>
    %c0_85 = arith.constant 0 : index
    %c0_86 = arith.constant 0 : index
    %129 = vector.load %arg6[%c0_85, %c0_86] : memref<16x32xf32, #tpu.memory_space<vmem>>, vector<16x32xf32>
    %cst_87 = arith.constant dense<0.000000e+00> : vector<16x8xf32>
    %130 = tpu.matmul %129, %128, %cst_87 {dimension_numbers = #tpu.dot_dimension_numbers<[1], [0], [0], [1], [0, 0, 1, 1], [], []>} : vector<16x32xf32>, vector<32x8xf32>, vector<16x8xf32> -> vector<16x8xf32>
    %c0_88 = arith.constant 0 : index
    %c0_89 = arith.constant 0 : index
    %131 = vector.load %arg7[%c0_88, %c0_89] : memref<16x1xf32, #tpu.memory_space<vmem>>, vector<16x1xf32>
    %132 = vector.broadcast %131 : vector<16x1xf32> to vector<16x8xf32>
    %133 = arith.addf %130, %132 : vector<16x8xf32>
    %134 = vector.extract_strided_slice %133 {offsets = [0, 0], sizes = [8, 8], strides = [1, 1]} : vector<16x8xf32> to vector<8x8xf32>
    %135 = vector.extract_strided_slice %133 {offsets = [8, 0], sizes = [8, 8], strides = [1, 1]} : vector<16x8xf32> to vector<8x8xf32>
    %cst_90 = arith.constant 5.000000e-01 : f32
    %136 = vector.broadcast %cst_90 : f32 to vector<8x8xf32>
    %137 = arith.mulf %136, %135 : vector<8x8xf32>
    %138 = math.exp %137 : vector<8x8xf32>
    %c0_91 = arith.constant 0 : index
    %c0_92 = arith.constant 0 : index
    %c0_93 = arith.constant 0 : index
    %139 = vector.load %arg9[%c0_91, %c0_92, %c0_93] : memref<1x8x8xf32, #tpu.memory_space<vmem>>, vector<1x8x8xf32>
    %140 = vector.shape_cast %139 : vector<1x8x8xf32> to vector<8x8xf32>
    %141 = arith.mulf %138, %140 : vector<8x8xf32>
    %142 = arith.addf %134, %141 : vector<8x8xf32>
    %143 = tpu.concatenate %142, %134, %135 in 0 : vector<8x8xf32>, vector<8x8xf32>, vector<8x8xf32> -> vector<24x8xf32>
    %c0_94 = arith.constant 0 : index
    %c0_95 = arith.constant 0 : index
    %c0_96 = arith.constant 0 : index
    %144 = vector.load %arg10[%c0_94, %c0_95, %c0_96] : memref<1x24x8xf32, #tpu.memory_space<vmem>>, vector<1x24x8xf32>
    %145 = vector.shape_cast %144 : vector<1x24x8xf32> to vector<24x8xf32>
    %146 = vector.shape_cast %143 : vector<24x8xf32> to vector<1x24x8xf32>
    tpu.vector_store %arg10[%c0_94, %c0_95, %c0_96], %146 {strides = array<i32>} : memref<1x24x8xf32, #tpu.memory_space<vmem>>, vector<1x24x8xf32>,
    return
  }
  func.func @transform_0(%arg0: i32) -> (i32, i32, i32) {
    %c0_i32 = arith.constant 0 : i32
    %c0_i32_0 = arith.constant 0 : i32
    %c0_i32_1 = arith.constant 0 : i32
    return %arg0, %c0_i32, %c0_i32_0 : i32, i32, i32
  }
  func.func @transform_1(%arg0: i32) -> (i32, i32) {
    %c0_i32 = arith.constant 0 : i32
    %c0_i32_0 = arith.constant 0 : i32
    %c0_i32_1 = arith.constant 0 : i32
    return %c0_i32, %c0_i32_0 : i32, i32
  }
  func.func @transform_2(%arg0: i32) -> (i32, i32, i32) {
    %c0_i32 = arith.constant 0 : i32
    %c0_i32_0 = arith.constant 0 : i32
    %c0_i32_1 = arith.constant 0 : i32
    %c0_i32_2 = arith.constant 0 : i32
    return %c0_i32, %c0_i32_0, %c0_i32_1 : i32, i32, i32
  }
  func.func @transform_3(%arg0: i32) -> (i32, i32, i32) {
    %c0_i32 = arith.constant 0 : i32
    %c0_i32_0 = arith.constant 0 : i32
    %c0_i32_1 = arith.constant 0 : i32
    %c0_i32_2 = arith.constant 0 : i32
    return %c0_i32, %c0_i32_0, %c0_i32_1 : i32, i32, i32
  }
  func.func @transform_4(%arg0: i32) -> (i32, i32, i32) {
    %c0_i32 = arith.constant 0 : i32
    %c0_i32_0 = arith.constant 0 : i32
    %c0_i32_1 = arith.constant 0 : i32
    %c0_i32_2 = arith.constant 0 : i32
    return %c0_i32, %c0_i32_0, %c0_i32_1 : i32, i32, i32
  }
  func.func @transform_5(%arg0: i32) -> (i32, i32) {
    %c0_i32 = arith.constant 0 : i32
    %c0_i32_0 = arith.constant 0 : i32
    %c0_i32_1 = arith.constant 0 : i32
    return %c0_i32, %c0_i32_0 : i32, i32
  }
  func.func @transform_6(%arg0: i32) -> (i32, i32) {
    %c0_i32 = arith.constant 0 : i32
    %c0_i32_0 = arith.constant 0 : i32
    %c0_i32_1 = arith.constant 0 : i32
    return %c0_i32, %c0_i32_0 : i32, i32
  }
  func.func @transform_7(%arg0: i32) -> (i32, i32) {
    %c0_i32 = arith.constant 0 : i32
    %c0_i32_0 = arith.constant 0 : i32
    %c0_i32_1 = arith.constant 0 : i32
    return %c0_i32, %c0_i32_0 : i32, i32
  }
  func.func @transform_8(%arg0: i32) -> (i32, i32, i32) {
    %c0_i32 = arith.constant 0 : i32
    %c0_i32_0 = arith.constant 0 : i32
    %c0_i32_1 = arith.constant 0 : i32
    return %arg0, %c0_i32, %c0_i32_0 : i32, i32, i32
  }
  func.func @transform_9(%arg0: i32) -> (i32, i32, i32) {
    %c0_i32 = arith.constant 0 : i32
    %c0_i32_0 = arith.constant 0 : i32
    %c0_i32_1 = arith.constant 0 : i32
    return %arg0, %c0_i32, %c0_i32_0 : i32, i32, i32
  }
}

</mosaic_0001>

<llo_original>
// kernel: tpu_custom_call.1
$region0: #{tpu_custom_call.1}
  #allocation0 [shape = 'u32[]', space=smem, size = 0x4, offset = 0x4, fixed_abs, tag = 'smem constant byte address 0x4 - core index']
  #allocation1 [shape = 'u32[144,128]{1,0:T(1,128)}', space=vmem, size = 0x12000, scoped, tag = 'internal scratch']
  %s0 = inlined_call_operand.vmem [shape: f32[2,3,1024], index: 0, kind: input, shape index: {}]
  %s1 = inlined_call_operand.vmem [shape: f32[32,3], index: 1, kind: input, shape index: {}]
  %s2 = inlined_call_operand.vmem [shape: f32[7,32,64], index: 2, kind: input, shape index: {}]
  %s3 = inlined_call_operand.vmem [shape: f32[8,32,1], index: 3, kind: input, shape index: {}]
  %s4 = inlined_call_operand.vmem [shape: f32[8,32,1], index: 4, kind: input, shape index: {}]
  %s5 = inlined_call_operand.vmem [shape: f32[16,32], index: 5, kind: input, shape index: {}]
  %s6 = inlined_call_operand.vmem [shape: f32[16,1], index: 6, kind: input, shape index: {}]
  %s7 = inlined_call_operand.vmem [shape: f32[1024,8], index: 7, kind: input, shape index: {}]
  %s8 = inlined_call_operand.vmem [shape: f32[2,8,8], index: 8, kind: input, shape index: {}]
  %s9 = inlined_call_operand.vmem [shape: f32[2,24,8], index: 9, kind: output, shape index: {}]
  %s10 = sld [smem:[#allocation0]]
  $region69: #{tpu_custom_call.1} parent=0
    _
  %s12 = ssub.s32 1, %s10
  %s13 = scalar_select 0, %s12, %s10
  loop: start=0, step=1, limit=4
  $region2: #{tpu_custom_call.1} parent=0 // loop_pre_header
    _
  $region3: #{tpu_custom_call.1} parent=0 // loop_header
    %s15 = sphi 0, %s19
    %p16 = scmp.ge.s32.totalorder %s15, 4
    %s25 = sphi 0, %s27
    %s28 = sphi 0, %s25
    %s29 = sphi 0, %s28
    %s45 = sphi 0, %s29
    %s49 = sphi 0, %s49
    %s51 = sphi 0, %s49
    %s52 = sphi 0, %s51
    %s66 = sphi 0, %s52
    %s70 = sphi 0, %s70
    %s72 = sphi 0, %s70
    %s73 = sphi 0, %s72
    %s87 = sphi 0, %s73
    %s91 = sphi 0, %s91
    %s93 = sphi 0, %s91
    %s94 = sphi 0, %s93
    %s108 = sphi 0, %s94
    %s112 = sphi 0, %s112
    %s114 = sphi 0, %s112
    %s115 = sphi 0, %s114
    %s129 = sphi 0, %s115
    %s133 = sphi 0, %s133
    %s135 = sphi 0, %s133
    %s136 = sphi 0, %s135
    %s150 = sphi 0, %s136
    %s154 = sphi 0, %s154
    %s156 = sphi 0, %s154
    %s157 = sphi 0, %s156
    %s171 = sphi 0, %s157
    %s175 = sphi 0, %s175
    %s177 = sphi 0, %s175
    %s178 = sphi 0, %s177
    %s192 = sphi 0, %s178
    %s198 = sphi 0, %s200
    %s201 = sphi 0, %s198
    %s202 = sphi 0, %s201
    %s218 = sphi 0, %s202
    %s224 = sphi 0, %s226
    %s227 = sphi 0, %s224
    %s228 = sphi 0, %s227
    %s244 = sphi 0, %s228
  $region4: #{tpu_custom_call.1} parent=0 // loop_header_branch
    %18 = sbr.rel (%p16) target = $region8
  $region5: #{tpu_custom_call.1} parent=0 // loop_body
    %s20 = ssub.s32 %s15, 1
    %s21 = ssub.s32 %s15, 2
    %s22 = sadd.s32 %s15, 1
    %s23 = ssub.s32 %s15, %s22
    %p24 = scmp.eq.s32.totalorder %s23, 0
    %s26 = sadd.s32 %s25, 1
    %s27 = scalar_select %p24, %s25, %s26
    %p30 = pneg %p24
    %p31 = scmp.eq.s32.totalorder %s15, 1
    %p32 = por %p30, %p31
    %p33 = scmp.ne.s32.totalorder %s25, %s28
    %p34 = scmp.eq.s32.totalorder %s15, 0
    %p35 = por %p33, %p34
    %p36 = scmp.ne.s32.totalorder %s25, %s28
    %p37 = scmp.eq.s32.totalorder %s20, 1
    %p38 = por %p36, %p37
    %p39 = scmp.ne.s32.totalorder %s28, %s29
    %p40 = scmp.eq.s32.totalorder %s20, 0
    %p41 = por %p39, %p40
    %p42 = scmp.ne.s32.totalorder %s28, %s29
    %p43 = scmp.eq.s32.totalorder %s21, 1
    %p44 = por %p42, %p43
    %p46 = scmp.ne.s32.totalorder %s29, %s45
    %p47 = scmp.eq.s32.totalorder %s21, 0
    %p48 = por %p46, %p47
    %s50 = sadd.s32 %s49, 1
    %p53 = scmp.eq.s32.totalorder %s15, 1
    %p54 = scmp.ne.s32.totalorder %s49, %s51
    %p55 = scmp.eq.s32.totalorder %s15, 0
    %p56 = por %p54, %p55
    %p57 = scmp.ne.s32.totalorder %s49, %s51
    %p58 = scmp.eq.s32.totalorder %s20, 1
    %p59 = por %p57, %p58
    %p60 = scmp.ne.s32.totalorder %s51, %s52
    %p61 = scmp.eq.s32.totalorder %s20, 0
    %p62 = por %p60, %p61
    %p63 = scmp.ne.s32.totalorder %s51, %s52
    %p64 = scmp.eq.s32.totalorder %s21, 1
    %p65 = por %p63, %p64
    %p67 = scmp.ne.s32.totalorder %s52, %s66
    %p68 = scmp.eq.s32.totalorder %s21, 0
    %p69 = por %p67, %p68
    %s71 = sadd.s32 %s70, 1
    %p74 = scmp.eq.s32.totalorder %s15, 1
    %p75 = scmp.ne.s32.totalorder %s70, %s72
    %p76 = scmp.eq.s32.totalorder %s15, 0
    %p77 = por %p75, %p76
    %p78 = scmp.ne.s32.totalorder %s70, %s72
    %p79 = scmp.eq.s32.totalorder %s20, 1
    %p80 = por %p78, %p79
    %p81 = scmp.ne.s32.totalorder %s72, %s73
    %p82 = scmp.eq.s32.totalorder %s20, 0
    %p83 = por %p81, %p82
    %p84 = scmp.ne.s32.totalorder %s72, %s73
    %p85 = scmp.eq.s32.totalorder %s21, 1
    %p86 = por %p84, %p85
    %p88 = scmp.ne.s32.totalorder %s73, %s87
    %p89 = scmp.eq.s32.totalorder %s21, 0
    %p90 = por %p88, %p89
    %s92 = sadd.s32 %s91, 1
    %p95 = scmp.eq.s32.totalorder %s15, 1
    %p96 = scmp.ne.s32.totalorder %s91, %s93
    %p97 = scmp.eq.s32.totalorder %s15, 0
    %p98 = por %p96, %p97
    %p99 = scmp.ne.s32.totalorder %s91, %s93
    %p100 = scmp.eq.s32.totalorder %s20, 1
    %p101 = por %p99, %p100
    %p102 = scmp.ne.s32.totalorder %s93, %s94
    %p103 = scmp.eq.s32.totalorder %s20, 0
    %p104 = por %p102, %p103
    %p105 = scmp.ne.s32.totalorder %s93, %s94
    %p106 = scmp.eq.s32.totalorder %s21, 1
    %p107 = por %p105, %p106
    %p109 = scmp.ne.s32.totalorder %s94, %s108
    %p110 = scmp.eq.s32.totalorder %s21, 0
    %p111 = por %p109, %p110
    %s113 = sadd.s32 %s112, 1
    %p116 = scmp.eq.s32.totalorder %s15, 1
    %p117 = scmp.ne.s32.totalorder %s112, %s114
    %p118 = scmp.eq.s32.totalorder %s15, 0
    %p119 = por %p117, %p118
    %p120 = scmp.ne.s32.totalorder %s112, %s114
    %p121 = scmp.eq.s32.totalorder %s20, 1
    %p122 = por %p120, %p121
    %p123 = scmp.ne.s32.totalorder %s114, %s115
    %p124 = scmp.eq.s32.totalorder %s20, 0
    %p125 = por %p123, %p124
    %p126 = scmp.ne.s32.totalorder %s114, %s115
    %p127 = scmp.eq.s32.totalorder %s21, 1
    %p128 = por %p126, %p127
    %p130 = scmp.ne.s32.totalorder %s115, %s129
    %p131 = scmp.eq.s32.totalorder %s21, 0
    %p132 = por %p130, %p131
    %s134 = sadd.s32 %s133, 1
    %p137 = scmp.eq.s32.totalorder %s15, 1
    %p138 = scmp.ne.s32.totalorder %s133, %s135
    %p139 = scmp.eq.s32.totalorder %s15, 0
    %p140 = por %p138, %p139
    %p141 = scmp.ne.s32.totalorder %s133, %s135
    %p142 = scmp.eq.s32.totalorder %s20, 1
    %p143 = por %p141, %p142
    %p144 = scmp.ne.s32.totalorder %s135, %s136
    %p145 = scmp.eq.s32.totalorder %s20, 0
    %p146 = por %p144, %p145
    %p147 = scmp.ne.s32.totalorder %s135, %s136
    %p148 = scmp.eq.s32.totalorder %s21, 1
    %p149 = por %p147, %p148
    %p151 = scmp.ne.s32.totalorder %s136, %s150
    %p152 = scmp.eq.s32.totalorder %s21, 0
    %p153 = por %p151, %p152
    %s155 = sadd.s32 %s154, 1
    %p158 = scmp.eq.s32.totalorder %s15, 1
    %p159 = scmp.ne.s32.totalorder %s154, %s156
    %p160 = scmp.eq.s32.totalorder %s15, 0
    %p161 = por %p159, %p160
    %p162 = scmp.ne.s32.totalorder %s154, %s156
    %p163 = scmp.eq.s32.totalorder %s20, 1
    %p164 = por %p162, %p163
    %p165 = scmp.ne.s32.totalorder %s156, %s157
    %p166 = scmp.eq.s32.totalorder %s20, 0
    %p167 = por %p165, %p166
    %p168 = scmp.ne.s32.totalorder %s156, %s157
    %p169 = scmp.eq.s32.totalorder %s21, 1
    %p170 = por %p168, %p169
    %p172 = scmp.ne.s32.totalorder %s157, %s171
    %p173 = scmp.eq.s32.totalorder %s21, 0
    %p174 = por %p172, %p173
    %s176 = sadd.s32 %s175, 1
    %p179 = scmp.eq.s32.totalorder %s15, 1
    %p180 = scmp.ne.s32.totalorder %s175, %s177
    %p181 = scmp.eq.s32.totalorder %s15, 0
    %p182 = por %p180, %p181
    %p183 = scmp.ne.s32.totalorder %s175, %s177
    %p184 = scmp.eq.s32.totalorder %s20, 1
    %p185 = por %p183, %p184
    %p186 = scmp.ne.s32.totalorder %s177, %s178
    %p187 = scmp.eq.s32.totalorder %s20, 0
    %p188 = por %p186, %p187
    %p189 = scmp.ne.s32.totalorder %s177, %s178
    %p190 = scmp.eq.s32.totalorder %s21, 1
    %p191 = por %p189, %p190
    %p193 = scmp.ne.s32.totalorder %s178, %s192
    %p194 = scmp.eq.s32.totalorder %s21, 0
    %p195 = por %p193, %p194
    %s196 = ssub.s32 %s15, %s22
    %p197 = scmp.eq.s32.totalorder %s196, 0
    %s199 = sadd.s32 %s198, 1
    %s200 = scalar_select %p197, %s198, %s199
    %p203 = pneg %p197
    %p204 = scmp.eq.s32.totalorder %s15, 1
    %p205 = por %p203, %p204
    %p206 = scmp.ne.s32.totalorder %s198, %s201
    %p207 = scmp.eq.s32.totalorder %s15, 0
    %p208 = por %p206, %p207
    %p209 = scmp.ne.s32.totalorder %s198, %s201
    %p210 = scmp.eq.s32.totalorder %s20, 1
    %p211 = por %p209, %p210
    %p212 = scmp.ne.s32.totalorder %s201, %s202
    %p213 = scmp.eq.s32.totalorder %s20, 0
    %p214 = por %p212, %p213
    %p215 = scmp.ne.s32.totalorder %s201, %s202
    %p216 = scmp.eq.s32.totalorder %s21, 1
    %p217 = por %p215, %p216
    %p219 = scmp.ne.s32.totalorder %s202, %s218
    %p220 = scmp.eq.s32.totalorder %s21, 0
    %p221 = por %p219, %p220
    %s222 = ssub.s32 %s15, %s22
    %p223 = scmp.eq.s32.totalorder %s222, 0
    %s225 = sadd.s32 %s224, 1
    %s226 = scalar_select %p223, %s224, %s225
    %p229 = pneg %p223
    %p230 = scmp.eq.s32.totalorder %s15, 1
    %p231 = por %p229, %p230
    %p232 = scmp.ne.s32.totalorder %s224, %s227
    %p233 = scmp.eq.s32.totalorder %s15, 0
    %p234 = por %p232, %p233
    %p235 = scmp.ne.s32.totalorder %s224, %s227
    %p236 = scmp.eq.s32.totalorder %s20, 1
    %p237 = por %p235, %p236
    %p238 = scmp.ne.s32.totalorder %s227, %s228
    %p239 = scmp.eq.s32.totalorder %s20, 0
    %p240 = por %p238, %p239
    %p241 = scmp.ne.s32.totalorder %s227, %s228
    %p242 = scmp.eq.s32.totalorder %s21, 1
    %p243 = por %p241, %p242
    %p245 = scmp.ne.s32.totalorder %s228, %s244
    %p246 = scmp.eq.s32.totalorder %s21, 0
    %p247 = por %p245, %p246
    %p248 = scmp.le.s32.totalorder 1, %s15
    %p249 = scmp.lt.s32.totalorder %s15, 3
    %p250 = pnand %p248, %p249
    %p251 = pneg %p250
    // Predicated region
    $region9: #{tpu_custom_call.1} parent=5 // pred_check
      _
    $region10: #{tpu_custom_call.1} parent=5 // pred_check_branch
      %253 = sbr.rel (%p250) target = $region12
    $region11: #{tpu_custom_call.1} parent=5 // pred_region
      %s254 = ssub.s32 %s15, 1
      // Predicated region
      $region13: #{tpu_custom_call.1} parent=11 // pred_check
        %p255 = pneg %p62
      $region14: #{tpu_custom_call.1} parent=11 // pred_check_branch
        %257 = sbr.rel (%p255) target = $region16
      $region15: #{tpu_custom_call.1} parent=11 // pred_region
        _
      $region16: #{tpu_custom_call.1} parent=11 // pred_fallthru
        _
      // Predicated region
      $region17: #{tpu_custom_call.1} parent=11 // pred_check
        %p258 = pneg %p83
      $region18: #{tpu_custom_call.1} parent=11 // pred_check_branch
        %260 = sbr.rel (%p258) target = $region20
      $region19: #{tpu_custom_call.1} parent=11 // pred_region
        _
      $region20: #{tpu_custom_call.1} parent=11 // pred_fallthru
        _
      // Predicated region
      $region21: #{tpu_custom_call.1} parent=11 // pred_check
        %p261 = pneg %p104
      $region22: #{tpu_custom_call.1} parent=11 // pred_check_branch
        %263 = sbr.rel (%p261) target = $region24
      $region23: #{tpu_custom_call.1} parent=11 // pred_region
        _
      $region24: #{tpu_custom_call.1} parent=11 // pred_fallthru
        _
      // Predicated region
      $region25: #{tpu_custom_call.1} parent=11 // pred_check
        %p264 = pneg %p125
      $region26: #{tpu_custom_call.1} parent=11 // pred_check_branch
        %266 = sbr.rel (%p264) target = $region28
      $region27: #{tpu_custom_call.1} parent=11 // pred_region
        _
      $region28: #{tpu_custom_call.1} parent=11 // pred_fallthru
        _
      // Predicated region
      $region29: #{tpu_custom_call.1} parent=11 // pred_check
        %p267 = pneg %p146
      $region30: #{tpu_custom_call.1} parent=11 // pred_check_branch
        %269 = sbr.rel (%p267) target = $region32
      $region31: #{tpu_custom_call.1} parent=11 // pred_region
        _
      $region32: #{tpu_custom_call.1} parent=11 // pred_fallthru
        _
      // Predicated region
      $region33: #{tpu_custom_call.1} parent=11 // pred_check
        %p270 = pneg %p167
      $region34: #{tpu_custom_call.1} parent=11 // pred_check_branch
        %272 = sbr.rel (%p270) target = $region36
      $region35: #{tpu_custom_call.1} parent=11 // pred_region
        _
      $region36: #{tpu_custom_call.1} parent=11 // pred_fallthru
        _
      // Predicated region
      $region37: #{tpu_custom_call.1} parent=11 // pred_check
        %p273 = pneg %p188
      $region38: #{tpu_custom_call.1} parent=11 // pred_check_branch
        %275 = sbr.rel (%p273) target = $region40
      $region39: #{tpu_custom_call.1} parent=11 // pred_region
        _
      $region40: #{tpu_custom_call.1} parent=11 // pred_fallthru
        _
    $region12: #{tpu_custom_call.1} parent=5 // pred_fallthru
      _
    %p276 = scmp.lt.s32.totalorder %s15, 2
    // Predicated region
    $region41: #{tpu_custom_call.1} parent=5 // pred_check
      %p277 = pneg %p276
    $region42: #{tpu_custom_call.1} parent=5 // pred_check_branch
      %279 = sbr.rel (%p277) target = $region44
    $region43: #{tpu_custom_call.1} parent=5 // pred_region
      // Predicated region
      $region45: #{tpu_custom_call.1} parent=43 // pred_check
        %p280 = pneg %p35
      $region46: #{tpu_custom_call.1} parent=43 // pred_check_branch
        %282 = sbr.rel (%p280) target = $region48
      $region47: #{tpu_custom_call.1} parent=43 // pred_region
        %p283 = scmp.lt.s32.totalorder %s15, 1
        %s284 = scalar_select %p283, %s15, 1
        %s285 = smul.addr %s284, 8
        %s286 = smul.addr %s285, 4
        %s287 = scalar_lea.vmem %s0, %s286
      $region48: #{tpu_custom_call.1} parent=43 // pred_fallthru
        _
      // Predicated region
      $region49: #{tpu_custom_call.1} parent=43 // pred_check
        %p288 = pneg %p208
      $region50: #{tpu_custom_call.1} parent=43 // pred_check_branch
        %290 = sbr.rel (%p288) target = $region52
      $region51: #{tpu_custom_call.1} parent=43 // pred_region
        %p291 = scmp.lt.s32.totalorder %s15, 1
        %s292 = scalar_select %p291, %s15, 1
        %s293 = smul.addr %s292, 8
        %s294 = scalar_lea.vmem %s8, %s293
      $region52: #{tpu_custom_call.1} parent=43 // pred_fallthru
        _
    $region44: #{tpu_custom_call.1} parent=5 // pred_fallthru
      _
    %p295 = scmp.le.s32.totalorder 1, %s15
    %p296 = scmp.lt.s32.totalorder %s15, 3
    %p297 = pnand %p295, %p296
    %p298 = pneg %p297
    // Predicated region
    $region53: #{tpu_custom_call.1} parent=5 // pred_check
      _
    $region54: #{tpu_custom_call.1} parent=5 // pred_check_branch
      %300 = sbr.rel (%p297) target = $region56
    $region55: #{tpu_custom_call.1} parent=5 // pred_region
      %s301 = ssub.s32 %s15, 1
      %p302 = scmp.lt.s32.totalorder %s20, 1
      %s303 = scalar_select %p302, %s20, 1
      %s304 = smul.addr %s303, 8
      %s305 = smul.addr %s304, 4
      %s306 = scalar_lea.vmem %s0, %s305
      %p307 = pneg %p41
      %p308 = pneg %p38
      %p309 = pneg %p62
      %p310 = pneg %p59
      %p311 = pneg %p83
      %p312 = pneg %p80
      %p313 = pneg %p104
      %p314 = pneg %p101
      %p315 = pneg %p125
      %p316 = pneg %p122
      %p317 = pneg %p146
      %p318 = pneg %p143
      %p319 = pneg %p167
      %p320 = pneg %p164
      %p321 = pneg %p188
      %p322 = pneg %p185
      %p323 = scmp.lt.s32.totalorder %s20, 1
      %s324 = scalar_select %p323, %s20, 1
      %s325 = smul.addr %s324, 8
      %s326 = scalar_lea.vmem %s8, %s325
      %p327 = pneg %p214
      %p328 = pneg %p211
      %p329 = pneg %p240
      %p330 = pneg %p237
      %p331 = scmp.lt.s32.totalorder %s20, 1
      %s332 = scalar_select %p331, %s20, 1
      %s333 = smul.addr %s332, 3
      %s334 = smul.addr %s333, 8
      %s335 = scalar_lea.vmem %s9, %s334
      %p336 = scmp.lt.s32.totalorder %s20, 1
      %s337 = scalar_select %p336, %s20, 1
      %s338 = smul.addr %s337, 8
      %s339 = smul.addr %s338, 4
      %s340 = scalar_lea.vmem %s0, %s339
      %p341 = scmp.lt.s32.totalorder %s20, 1
      %s342 = scalar_select %p341, %s20, 1
      %s343 = smul.addr %s342, 8
      %s344 = scalar_lea.vmem %s8, %s343
      %p345 = scmp.lt.s32.totalorder %s20, 1
      %s346 = scalar_select %p345, %s20, 1
      %s347 = smul.addr %s346, 3
      %s348 = smul.addr %s347, 8
      %s349 = scalar_lea.vmem %s9, %s348
      %v350 = vld [vmem:[%s340] sm:$0x77]
      %v351 = vld [vmem:[%s340 + $0x8] sm:$0x77]
      %v352 = vld [vmem:[%s340 + $0x10] sm:$0x77]
      %v353 = vld [vmem:[%s340 + $0x18] sm:$0x77]
      %v354 = vld [vmem:[%s1] sm:$0xff]
      %v355 = vld [vmem:[%s1 + $0x8] sm:$0xff]
      %v356 = vld [vmem:[%s1 + $0x10] sm:$0xff]
      %v357 = vld [vmem:[%s1 + $0x18] sm:$0xff]
      %v362 = vcombine.high %v350, %v350
      %v363 = vcombine.high %v351, %v351
      %v364 = vcombine.high %v352, %v352
      %v365 = vcombine.high %v353, %v353
      %vm366 = vcmask 23552
      %v368 = vsel %vm366, %v354, 0
      %v371 = vsel %vm366, %v355, 0
      %v374 = vsel %vm366, %v356, 0
      %v377 = vsel %vm366, %v357, 0
      %vm379 = vcmask 1042432
      %v380 = vsel %vm379, %v350, 0
      %v382 = vsel %vm379, %v362, 0
      %v384 = vsel %vm379, %v351, 0
      %v386 = vsel %vm379, %v363, 0
      %v388 = vsel %vm379, %v352, 0
      %v390 = vsel %vm379, %v364, 0
      %v392 = vsel %vm379, %v353, 0
      %v394 = vsel %vm379, %v365, 0
      %396 = vmatprep.subr.mxu0 %v382
      %397 = vmatpush1.msra.mxu0 %v380
      %398 = vmatprep.subr.mxu0 0.0
      %399 = vmatpush1.msra.mxu0 0.0
      %400 = vmatprep.subr.mxu0 0.0
      %401 = vmatpush1.msra.mxu0 0.0
      %402 = vmatprep.subr.mxu0 0.0
      %403 = vmatpush1.msra.mxu0 0.0
      %404 = vmatprep.subr.mxu0 0.0
      %405 = vmatpush1.msra.mxu0 0.0
      %406 = vmatprep.subr.mxu0 0.0
      %407 = vmatpush1.msra.mxu0 0.0
      %408 = vmatprep.subr.mxu0 0.0
      %409 = vmatpush1.msra.mxu0 0.0
      %410 = vmatprep.subr.mxu0 0.0
      %411 = vmatpush1.msra.mxu0 0.0
      %412 = vmatprep.subr.mxu0 0.0
      %413 = vmatpush1.msra.mxu0 0.0
      %414 = vmatprep.subr.mxu0 0.0
      %415 = vmatpush1.msra.mxu0 0.0
      %416 = vmatprep.subr.mxu0 0.0
      %417 = vmatpush1.msra.mxu0 0.0
      %418 = vmatprep.subr.mxu0 0.0
      %419 = vmatpush1.msra.mxu0 0.0
      %420 = vmatprep.subr.mxu0 0.0
      %421 = vmatpush1.msra.mxu0 0.0
      %422 = vmatprep.subr.mxu0 0.0
      %423 = vmatpush1.msra.mxu0 0.0
      %424 = vmatprep.subr.mxu0 0.0
      %425 = vmatpush1.msra.mxu0 0.0
      %426 = vmatprep.subr.mxu0 0.0
      %427 = vmatpush1.msra.mxu0 0.0
      %428 = vmatprep.subr.mxu0 0.0
      %429 = vmatpush1.msra.mxu0 0.0
      %430 = vmatprep.subr.mxu0 0.0
      %431 = vmatpush1.msra.mxu0 0.0
      %432 = vmatprep.subr.mxu0 0.0
      %433 = vmatpush1.msra.mxu0 0.0
      %434 = vmatprep.subr.mxu0 0.0
      %435 = vmatpush1.msra.mxu0 0.0
      %436 = vmatprep.subr.mxu0 0.0
      %437 = vmatpush1.msra.mxu0 0.0
      %438 = vmatprep.subr.mxu0 0.0
      %439 = vmatpush1.msra.mxu0 0.0
      %440 = vmatprep.subr.mxu0 0.0
      %441 = vmatpush1.msra.mxu0 0.0
      %442 = vmatprep.subr.mxu0 0.0
      %443 = vmatpush1.msra.mxu0 0.0
      %444 = vmatprep.subr.mxu0 0.0
      %445 = vmatpush1.msra.mxu0 0.0
      %446 = vmatprep.subr.mxu0 0.0
      %447 = vmatpush1.msra.mxu0 0.0
      %448 = vmatprep.subr.mxu0 0.0
      %449 = vmatpush1.msra.mxu0 0.0
      %450 = vmatprep.subr.mxu0 0.0
      %451 = vmatpush1.msra.mxu0 0.0
      %452 = vmatprep.subr.mxu0 0.0
      %453 = vmatpush1.msra.mxu0 0.0
      %454 = vmatprep.subr.mxu0 0.0
      %455 = vmatpush1.msra.mxu0 0.0
      %456 = vmatprep.subr.mxu0 0.0
      %457 = vmatpush1.msra.mxu0 0.0
      %458 = vmatprep.subr.mxu0 0.0
      %459 = vmatpush1.msra.mxu0 0.0
      %460 = vmatprep.mubr.f32.mxu0 0.0
      %461 = vmatmul.mubr.f32.gmra.mrb[0].mxu0 %v368
      %v462 = vpop.f32.mrb[0].mxu0
      %v463 = vadd.f32 0.0, %v462
      %v464 = vpop.f32.mrb[0].mxu0
      %v465 = vadd.f32 0.0, %v464
      %466 = vmatprep.mubr.f32.mxu0 0.0
      %467 = vmatmul.mubr.f32.gmra.mrb[0].mxu0 %v371
      %v468 = vpop.f32.mrb[0].mxu0
      %v469 = vadd.f32 0.0, %v468
      %v470 = vpop.f32.mrb[0].mxu0
      %v471 = vadd.f32 0.0, %v470
      %472 = vmatprep.mubr.f32.mxu0 0.0
      %473 = vmatmul.mubr.f32.gmra.mrb[0].mxu0 %v374
      %v474 = vpop.f32.mrb[0].mxu0
      %v475 = vadd.f32 0.0, %v474
      %v476 = vpop.f32.mrb[0].mxu0
      %v477 = vadd.f32 0.0, %v476
      %478 = vmatprep.mubr.f32.mxu0 0.0
      %479 = vmatmul.mubr.f32.gmra.mrb[0].mxu0 %v377
      %v480 = vpop.f32.mrb[0].mxu0
      %v481 = vadd.f32 0.0, %v480
      %v482 = vpop.f32.mrb[0].mxu0
      %v483 = vadd.f32 0.0, %v482
      %484 = vdwg.mxu0
      %485 = vmatprep.subr.mxu0 %v386
      %486 = vmatpush1.msra.mxu0 %v384
      %487 = vmatprep.subr.mxu0 0.0
      %488 = vmatpush1.msra.mxu0 0.0
      %489 = vmatprep.subr.mxu0 0.0
      %490 = vmatpush1.msra.mxu0 0.0
      %491 = vmatprep.subr.mxu0 0.0
      %492 = vmatpush1.msra.mxu0 0.0
      %493 = vmatprep.subr.mxu0 0.0
      %494 = vmatpush1.msra.mxu0 0.0
      %495 = vmatprep.subr.mxu0 0.0
      %496 = vmatpush1.msra.mxu0 0.0
      %497 = vmatprep.subr.mxu0 0.0
      %498 = vmatpush1.msra.mxu0 0.0
      %499 = vmatprep.subr.mxu0 0.0
      %500 = vmatpush1.msra.mxu0 0.0
      %501 = vmatprep.subr.mxu0 0.0
      %502 = vmatpush1.msra.mxu0 0.0
      %503 = vmatprep.subr.mxu0 0.0
      %504 = vmatpush1.msra.mxu0 0.0
      %505 = vmatprep.subr.mxu0 0.0
      %506 = vmatpush1.msra.mxu0 0.0
      %507 = vmatprep.subr.mxu0 0.0
      %508 = vmatpush1.msra.mxu0 0.0
      %509 = vmatprep.subr.mxu0 0.0
      %510 = vmatpush1.msra.mxu0 0.0
      %511 = vmatprep.subr.mxu0 0.0
      %512 = vmatpush1.msra.mxu0 0.0
      %513 = vmatprep.subr.mxu0 0.0
      %514 = vmatpush1.msra.mxu0 0.0
      %515 = vmatprep.subr.mxu0 0.0
      %516 = vmatpush1.msra.mxu0 0.0
      %517 = vmatprep.subr.mxu0 0.0
      %518 = vmatpush1.msra.mxu0 0.0
      %519 = vmatprep.subr.mxu0 0.0
      %520 = vmatpush1.msra.mxu0 0.0
      %521 = vmatprep.subr.mxu0 0.0
      %522 = vmatpush1.msra.mxu0 0.0
      %523 = vmatprep.subr.mxu0 0.0
      %524 = vmatpush1.msra.mxu0 0.0
      %525 = vmatprep.subr.mxu0 0.0
      %526 = vmatpush1.msra.mxu0 0.0
      %527 = vmatprep.subr.mxu0 0.0
      %528 = vmatpush1.msra.mxu0 0.0
      %529 = vmatprep.subr.mxu0 0.0
      %530 = vmatpush1.msra.mxu0 0.0
      %531 = vmatprep.subr.mxu0 0.0
      %532 = vmatpush1.msra.mxu0 0.0
      %533 = vmatprep.subr.mxu0 0.0
      %534 = vmatpush1.msra.mxu0 0.0
      %535 = vmatprep.subr.mxu0 0.0
      %536 = vmatpush1.msra.mxu0 0.0
      %537 = vmatprep.subr.mxu0 0.0
      %538 = vmatpush1.msra.mxu0 0.0
      %539 = vmatprep.subr.mxu0 0.0
      %540 = vmatpush1.msra.mxu0 0.0
      %541 = vmatprep.subr.mxu0 0.0
      %542 = vmatpush1.msra.mxu0 0.0
      %543 = vmatprep.subr.mxu0 0.0
      %544 = vmatpush1.msra.mxu0 0.0
      %545 = vmatprep.subr.mxu0 0.0
      %546 = vmatpush1.msra.mxu0 0.0
      %547 = vmatprep.subr.mxu0 0.0
      %548 = vmatpush1.msra.mxu0 0.0
      %549 = vmatprep.mubr.f32.mxu0 0.0
      %550 = vmatmul.mubr.f32.gmra.mrb[0].mxu0 %v368
      %v551 = vpop.f32.mrb[0].mxu0
      %v552 = vadd.f32 0.0, %v551
      %v553 = vpop.f32.mrb[0].mxu0
      %v554 = vadd.f32 0.0, %v553
      %555 = vmatprep.mubr.f32.mxu0 0.0
      %556 = vmatmul.mubr.f32.gmra.mrb[0].mxu0 %v371
      %v557 = vpop.f32.mrb[0].mxu0
      %v558 = vadd.f32 0.0, %v557
      %v559 = vpop.f32.mrb[0].mxu0
      %v560 = vadd.f32 0.0, %v559
      %561 = vmatprep.mubr.f32.mxu0 0.0
      %562 = vmatmul.mubr.f32.gmra.mrb[0].mxu0 %v374
      %v563 = vpop.f32.mrb[0].mxu0
      %v564 = vadd.f32 0.0, %v563
      %v565 = vpop.f32.mrb[0].mxu0
      %v566 = vadd.f32 0.0, %v565
      %567 = vmatprep.mubr.f32.mxu0 0.0
      %568 = vmatmul.mubr.f32.gmra.mrb[0].mxu0 %v377
      %v569 = vpop.f32.mrb[0].mxu0
      %v570 = vadd.f32 0.0, %v569
      %v571 = vpop.f32.mrb[0].mxu0
      %v572 = vadd.f32 0.0, %v571
      %573 = vdwg.mxu0
      %574 = vmatprep.subr.mxu0 %v390
      %575 = vmatpush1.msra.mxu0 %v388
      %576 = vmatprep.subr.mxu0 0.0
      %577 = vmatpush1.msra.mxu0 0.0
      %578 = vmatprep.subr.mxu0 0.0
      %579 = vmatpush1.msra.mxu0 0.0
      %580 = vmatprep.subr.mxu0 0.0
      %581 = vmatpush1.msra.mxu0 0.0
      %582 = vmatprep.subr.mxu0 0.0
      %583 = vmatpush1.msra.mxu0 0.0
      %584 = vmatprep.subr.mxu0 0.0
      %585 = vmatpush1.msra.mxu0 0.0
      %586 = vmatprep.subr.mxu0 0.0
      %587 = vmatpush1.msra.mxu0 0.0
      %588 = vmatprep.subr.mxu0 0.0
      %589 = vmatpush1.msra.mxu0 0.0
      %590 = vmatprep.subr.mxu0 0.0
      %591 = vmatpush1.msra.mxu0 0.0
      %592 = vmatprep.subr.mxu0 0.0
      %593 = vmatpush1.msra.mxu0 0.0
      %594 = vmatprep.subr.mxu0 0.0
      %595 = vmatpush1.msra.mxu0 0.0
      %596 = vmatprep.subr.mxu0 0.0
      %597 = vmatpush1.msra.mxu0 0.0
      %598 = vmatprep.subr.mxu0 0.0
      %599 = vmatpush1.msra.mxu0 0.0
      %600 = vmatprep.subr.mxu0 0.0
      %601 = vmatpush1.msra.mxu0 0.0
      %602 = vmatprep.subr.mxu0 0.0
      %603 = vmatpush1.msra.mxu0 0.0
      %604 = vmatprep.subr.mxu0 0.0
      %605 = vmatpush1.msra.mxu0 0.0
      %606 = vmatprep.subr.mxu0 0.0
      %607 = vmatpush1.msra.mxu0 0.0
      %608 = vmatprep.subr.mxu0 0.0
      %609 = vmatpush1.msra.mxu0 0.0
      %610 = vmatprep.subr.mxu0 0.0
      %611 = vmatpush1.msra.mxu0 0.0
      %612 = vmatprep.subr.mxu0 0.0
      %613 = vmatpush1.msra.mxu0 0.0
      %614 = vmatprep.subr.mxu0 0.0
      %615 = vmatpush1.msra.mxu0 0.0
      %616 = vmatprep.subr.mxu0 0.0
      %617 = vmatpush1.msra.mxu0 0.0
      %618 = vmatprep.subr.mxu0 0.0
      %619 = vmatpush1.msra.mxu0 0.0
      %620 = vmatprep.subr.mxu0 0.0
      %621 = vmatpush1.msra.mxu0 0.0
      %622 = vmatprep.subr.mxu0 0.0
      %623 = vmatpush1.msra.mxu0 0.0
      %624 = vmatprep.subr.mxu0 0.0
      %625 = vmatpush1.msra.mxu0 0.0
      %626 = vmatprep.subr.mxu0 0.0
      %627 = vmatpush1.msra.mxu0 0.0
      %628 = vmatprep.subr.mxu0 0.0
      %629 = vmatpush1.msra.mxu0 0.0
      %630 = vmatprep.subr.mxu0 0.0
      %631 = vmatpush1.msra.mxu0 0.0
      %632 = vmatprep.subr.mxu0 0.0
      %633 = vmatpush1.msra.mxu0 0.0
      %634 = vmatprep.subr.mxu0 0.0
      %635 = vmatpush1.msra.mxu0 0.0
      %636 = vmatprep.subr.mxu0 0.0
      %637 = vmatpush1.msra.mxu0 0.0
      %638 = vmatprep.mubr.f32.mxu0 0.0
      %639 = vmatmul.mubr.f32.gmra.mrb[0].mxu0 %v368
      %v640 = vpop.f32.mrb[0].mxu0
      %v641 = vadd.f32 0.0, %v640
      %v642 = vpop.f32.mrb[0].mxu0
      %v643 = vadd.f32 0.0, %v642
      %644 = vmatprep.mubr.f32.mxu0 0.0
      %645 = vmatmul.mubr.f32.gmra.mrb[0].mxu0 %v371
      %v646 = vpop.f32.mrb[0].mxu0
      %v647 = vadd.f32 0.0, %v646
      %v648 = vpop.f32.mrb[0].mxu0
      %v649 = vadd.f32 0.0, %v648
      %650 = vmatprep.mubr.f32.mxu0 0.0
      %651 = vmatmul.mubr.f32.gmra.mrb[0].mxu0 %v374
      %v652 = vpop.f32.mrb[0].mxu0
      %v653 = vadd.f32 0.0, %v652
      %v654 = vpop.f32.mrb[0].mxu0
      %v655 = vadd.f32 0.0, %v654
      %656 = vmatprep.mubr.f32.mxu0 0.0
      %657 = vmatmul.mubr.f32.gmra.mrb[0].mxu0 %v377
      %v658 = vpop.f32.mrb[0].mxu0
      %v659 = vadd.f32 0.0, %v658
      %v660 = vpop.f32.mrb[0].mxu0
      %v661 = vadd.f32 0.0, %v660
      %662 = vdwg.mxu0
      %663 = vmatprep.subr.mxu0 %v394
      %664 = vmatpush1.msra.mxu0 %v392
      %665 = vmatprep.subr.mxu0 0.0
      %666 = vmatpush1.msra.mxu0 0.0
      %667 = vmatprep.subr.mxu0 0.0
      %668 = vmatpush1.msra.mxu0 0.0
      %669 = vmatprep.subr.mxu0 0.0
      %670 = vmatpush1.msra.mxu0 0.0
      %671 = vmatprep.subr.mxu0 0.0
      %672 = vmatpush1.msra.mxu0 0.0
      %673 = vmatprep.subr.mxu0 0.0
      %674 = vmatpush1.msra.mxu0 0.0
      %675 = vmatprep.subr.mxu0 0.0
      %676 = vmatpush1.msra.mxu0 0.0
      %677 = vmatprep.subr.mxu0 0.0
      %678 = vmatpush1.msra.mxu0 0.0
      %679 = vmatprep.subr.mxu0 0.0
      %680 = vmatpush1.msra.mxu0 0.0
      %681 = vmatprep.subr.mxu0 0.0
      %682 = vmatpush1.msra.mxu0 0.0
      %683 = vmatprep.subr.mxu0 0.0
      %684 = vmatpush1.msra.mxu0 0.0
      %685 = vmatprep.subr.mxu0 0.0
      %686 = vmatpush1.msra.mxu0 0.0
      %687 = vmatprep.subr.mxu0 0.0
      %688 = vmatpush1.msra.mxu0 0.0
      %689 = vmatprep.subr.mxu0 0.0
      %690 = vmatpush1.msra.mxu0 0.0
      %691 = vmatprep.subr.mxu0 0.0
      %692 = vmatpush1.msra.mxu0 0.0
      %693 = vmatprep.subr.mxu0 0.0
      %694 = vmatpush1.msra.mxu0 0.0
      %695 = vmatprep.subr.mxu0 0.0
      %696 = vmatpush1.msra.mxu0 0.0
      %697 = vmatprep.subr.mxu0 0.0
      %698 = vmatpush1.msra.mxu0 0.0
      %699 = vmatprep.subr.mxu0 0.0
      %700 = vmatpush1.msra.mxu0 0.0
      %701 = vmatprep.subr.mxu0 0.0
      %702 = vmatpush1.msra.mxu0 0.0
      %703 = vmatprep.subr.mxu0 0.0
      %704 = vmatpush1.msra.mxu0 0.0
      %705 = vmatprep.subr.mxu0 0.0
      %706 = vmatpush1.msra.mxu0 0.0
      %707 = vmatprep.subr.mxu0 0.0
      %708 = vmatpush1.msra.mxu0 0.0
      %709 = vmatprep.subr.mxu0 0.0
      %710 = vmatpush1.msra.mxu0 0.0
      %711 = vmatprep.subr.mxu0 0.0
      %712 = vmatpush1.msra.mxu0 0.0
      %713 = vmatprep.subr.mxu0 0.0
      %714 = vmatpush1.msra.mxu0 0.0
      %715 = vmatprep.subr.mxu0 0.0
      %716 = vmatpush1.msra.mxu0 0.0
      %717 = vmatprep.subr.mxu0 0.0
      %718 = vmatpush1.msra.mxu0 0.0
      %719 = vmatprep.subr.mxu0 0.0
      %720 = vmatpush1.msra.mxu0 0.0
      %721 = vmatprep.subr.mxu0 0.0
      %722 = vmatpush1.msra.mxu0 0.0
      %723 = vmatprep.subr.mxu0 0.0
      %724 = vmatpush1.msra.mxu0 0.0
      %725 = vmatprep.subr.mxu0 0.0
      %726 = vmatpush1.msra.mxu0 0.0
      %727 = vmatprep.mubr.f32.mxu0 0.0
      %728 = vmatmul.mubr.f32.gmra.mrb[0].mxu0 %v368
      %v729 = vpop.f32.mrb[0].mxu0
      %v730 = vadd.f32 0.0, %v729
      %v731 = vpop.f32.mrb[0].mxu0
      %v732 = vadd.f32 0.0, %v731
      %733 = vmatprep.mubr.f32.mxu0 0.0
      %734 = vmatmul.mubr.f32.gmra.mrb[0].mxu0 %v371
      %v735 = vpop.f32.mrb[0].mxu0
      %v736 = vadd.f32 0.0, %v735
      %v737 = vpop.f32.mrb[0].mxu0
      %v738 = vadd.f32 0.0, %v737
      %739 = vmatprep.mubr.f32.mxu0 0.0
      %740 = vmatmul.mubr.f32.gmra.mrb[0].mxu0 %v374
      %v741 = vpop.f32.mrb[0].mxu0
      %v742 = vadd.f32 0.0, %v741
      %v743 = vpop.f32.mrb[0].mxu0
      %v744 = vadd.f32 0.0, %v743
      %745 = vmatprep.mubr.f32.mxu0 0.0
      %746 = vmatmul.mubr.f32.gmra.mrb[0].mxu0 %v377
      %v747 = vpop.f32.mrb[0].mxu0
      %v748 = vadd.f32 0.0, %v747
      %v749 = vpop.f32.mrb[0].mxu0
      %v750 = vadd.f32 0.0, %v749
      %751 = vdwg.mxu0
      %v752 = vld [vmem:[%s3] sm:$0xff]
      %v753 = vld [vmem:[%s3 + $0x8] sm:$0xff]
      %v754 = vld [vmem:[%s3 + $0x10] sm:$0xff]
      %v755 = vld [vmem:[%s3 + $0x18] sm:$0xff]
      %757 = vset.pattern.permute.xlu0 0
      %758 = vperm.xlu0 %757, %v752
      %v759 = vpop.permute.xlu0 %758
      %762 = vset.pattern.permute.xlu0 0
      %763 = vperm.xlu0 %762, %v753
      %v764 = vpop.permute.xlu0 %763
      %767 = vset.pattern.permute.xlu0 0
      %768 = vperm.xlu0 %767, %v754
      %v769 = vpop.permute.xlu0 %768
      %772 = vset.pattern.permute.xlu0 0
      %773 = vperm.xlu0 %772, %v755
      %v774 = vpop.permute.xlu0 %773
      %v776 = vmul.f32 %v463, %v759
      %v777 = vmul.f32 %v465, %v759
      %v778 = vmul.f32 %v552, %v759
      %v779 = vmul.f32 %v554, %v759
      %v780 = vmul.f32 %v641, %v759
      %v781 = vmul.f32 %v643, %v759
      %v782 = vmul.f32 %v730, %v759
      %v783 = vmul.f32 %v732, %v759
      %v784 = vmul.f32 %v469, %v764
      %v785 = vmul.f32 %v471, %v764
      %v786 = vmul.f32 %v558, %v764
      %v787 = vmul.f32 %v560, %v764
      %v788 = vmul.f32 %v647, %v764
      %v789 = vmul.f32 %v649, %v764
      %v790 = vmul.f32 %v736, %v764
      %v791 = vmul.f32 %v738, %v764
      %v792 = vmul.f32 %v475, %v769
      %v793 = vmul.f32 %v477, %v769
      %v794 = vmul.f32 %v564, %v769
      %v795 = vmul.f32 %v566, %v769
      %v796 = vmul.f32 %v653, %v769
      %v797 = vmul.f32 %v655, %v769
      %v798 = vmul.f32 %v742, %v769
      %v799 = vmul.f32 %v744, %v769
      %v800 = vmul.f32 %v481, %v774
      %v801 = vmul.f32 %v483, %v774
      %v802 = vmul.f32 %v570, %v774
      %v803 = vmul.f32 %v572, %v774
      %v804 = vmul.f32 %v659, %v774
      %v805 = vmul.f32 %v661, %v774
      %v806 = vmul.f32 %v748, %v774
      %v807 = vmul.f32 %v750, %v774
      %v808 = vld [vmem:[%s4] sm:$0xff]
      %v809 = vld [vmem:[%s4 + $0x8] sm:$0xff]
      %v810 = vld [vmem:[%s4 + $0x10] sm:$0xff]
      %v811 = vld [vmem:[%s4 + $0x18] sm:$0xff]
      %813 = vset.pattern.permute.xlu0 0
      %814 = vperm.xlu0 %813, %v808
      %v815 = vpop.permute.xlu0 %814
      %818 = vset.pattern.permute.xlu0 0
      %819 = vperm.xlu0 %818, %v809
      %v820 = vpop.permute.xlu0 %819
      %823 = vset.pattern.permute.xlu0 0
      %824 = vperm.xlu0 %823, %v810
      %v825 = vpop.permute.xlu0 %824
      %828 = vset.pattern.permute.xlu0 0
      %829 = vperm.xlu0 %828, %v811
      %v830 = vpop.permute.xlu0 %829
      %v832 = vadd.f32 %v776, %v815
      %v833 = vadd.f32 %v777, %v815
      %v834 = vadd.f32 %v778, %v815
      %v835 = vadd.f32 %v779, %v815
      %v836 = vadd.f32 %v780, %v815
      %v837 = vadd.f32 %v781, %v815
      %v838 = vadd.f32 %v782, %v815
      %v839 = vadd.f32 %v783, %v815
      %v840 = vadd.f32 %v784, %v820
      %v841 = vadd.f32 %v785, %v820
      %v842 = vadd.f32 %v786, %v820
      %v843 = vadd.f32 %v787, %v820
      %v844 = vadd.f32 %v788, %v820
      %v845 = vadd.f32 %v789, %v820
      %v846 = vadd.f32 %v790, %v820
      %v847 = vadd.f32 %v791, %v820
      %v848 = vadd.f32 %v792, %v825
      %v849 = vadd.f32 %v793, %v825
      %v850 = vadd.f32 %v794, %v825
      %v851 = vadd.f32 %v795, %v825
      %v852 = vadd.f32 %v796, %v825
      %v853 = vadd.f32 %v797, %v825
      %v854 = vadd.f32 %v798, %v825
      %v855 = vadd.f32 %v799, %v825
      %v856 = vadd.f32 %v800, %v830
      %v857 = vadd.f32 %v801, %v830
      %v858 = vadd.f32 %v802, %v830
      %v859 = vadd.f32 %v803, %v830
      %v860 = vadd.f32 %v804, %v830
      %v861 = vadd.f32 %v805, %v830
      %v862 = vadd.f32 %v806, %v830
      %v863 = vadd.f32 %v807, %v830
      %v864 = vmax.f32 %v832, 0.0
      %v865 = vmax.f32 %v833, 0.0
      %v866 = vmax.f32 %v834, 0.0
      %v867 = vmax.f32 %v835, 0.0
      %v868 = vmax.f32 %v836, 0.0
      %v869 = vmax.f32 %v837, 0.0
      %v870 = vmax.f32 %v838, 0.0
      %v871 = vmax.f32 %v839, 0.0
      %v872 = vmax.f32 %v840, 0.0
      %v873 = vmax.f32 %v841, 0.0
      %v874 = vmax.f32 %v842, 0.0
      %v875 = vmax.f32 %v843, 0.0
      %v876 = vmax.f32 %v844, 0.0
      %v877 = vmax.f32 %v845, 0.0
      %v878 = vmax.f32 %v846, 0.0
      %v879 = vmax.f32 %v847, 0.0
      %v880 = vmax.f32 %v848, 0.0
      %v881 = vmax.f32 %v849, 0.0
      %v882 = vmax.f32 %v850, 0.0
      %v883 = vmax.f32 %v851, 0.0
      %v884 = vmax.f32 %v852, 0.0
      %v885 = vmax.f32 %v853, 0.0
      %v886 = vmax.f32 %v854, 0.0
      %v887 = vmax.f32 %v855, 0.0
      %v888 = vmax.f32 %v856, 0.0
      %v889 = vmax.f32 %v857, 0.0
      %v890 = vmax.f32 %v858, 0.0
      %v891 = vmax.f32 %v859, 0.0
      %v892 = vmax.f32 %v860, 0.0
      %v893 = vmax.f32 %v861, 0.0
      %v894 = vmax.f32 %v862, 0.0
      %v895 = vmax.f32 %v863, 0.0
      %929 = vrot.lane.b32.xlu0 %v864, 127
      %v930 = vpop.permute.xlu0 %929
      %931 = vrot.lane.b32.xlu0 %v865, 127
      %v932 = vpop.permute.xlu0 %931
      %933 = vrot.lane.b32.xlu0 %v866, 127
      %v934 = vpop.permute.xlu0 %933
      %935 = vrot.lane.b32.xlu0 %v867, 127
      %v936 = vpop.permute.xlu0 %935
      %937 = vrot.lane.b32.xlu0 %v868, 127
      %v938 = vpop.permute.xlu0 %937
      %939 = vrot.lane.b32.xlu0 %v869, 127
      %v940 = vpop.permute.xlu0 %939
      %941 = vrot.lane.b32.xlu0 %v870, 127
      %v942 = vpop.permute.xlu0 %941
      %943 = vrot.lane.b32.xlu0 %v871, 127
      %v944 = vpop.permute.xlu0 %943
      %945 = vrot.lane.b32.xlu0 0.0, 127
      %v946 = vpop.permute.xlu0 %945
      %947 = vrot.lane.b32.xlu0 %v872, 127
      %v948 = vpop.permute.xlu0 %947
      %949 = vrot.lane.b32.xlu0 %v873, 127
      %v950 = vpop.permute.xlu0 %949
      %951 = vrot.lane.b32.xlu0 %v874, 127
      %v952 = vpop.permute.xlu0 %951
      %953 = vrot.lane.b32.xlu0 %v875, 127
      %v954 = vpop.permute.xlu0 %953
      %955 = vrot.lane.b32.xlu0 %v876, 127
      %v956 = vpop.permute.xlu0 %955
      %957 = vrot.lane.b32.xlu0 %v877, 127
      %v958 = vpop.permute.xlu0 %957
      %959 = vrot.lane.b32.xlu0 %v878, 127
      %v960 = vpop.permute.xlu0 %959
      %961 = vrot.lane.b32.xlu0 %v879, 127
      %v962 = vpop.permute.xlu0 %961
      %963 = vrot.lane.b32.xlu0 %v880, 127
      %v964 = vpop.permute.xlu0 %963
      %965 = vrot.lane.b32.xlu0 %v881, 127
      %v966 = vpop.permute.xlu0 %965
      %967 = vrot.lane.b32.xlu0 %v882, 127
      %v968 = vpop.permute.xlu0 %967
      %969 = vrot.lane.b32.xlu0 %v883, 127
      %v970 = vpop.permute.xlu0 %969
      %971 = vrot.lane.b32.xlu0 %v884, 127
      %v972 = vpop.permute.xlu0 %971
      %973 = vrot.lane.b32.xlu0 %v885, 127
      %v974 = vpop.permute.xlu0 %973
      %975 = vrot.lane.b32.xlu0 %v886, 127
      %v976 = vpop.permute.xlu0 %975
      %977 = vrot.lane.b32.xlu0 %v887, 127
      %v978 = vpop.permute.xlu0 %977
      %979 = vrot.lane.b32.xlu0 %v888, 127
      %v980 = vpop.permute.xlu0 %979
      %981 = vrot.lane.b32.xlu0 %v889, 127
      %v982 = vpop.permute.xlu0 %981
      %983 = vrot.lane.b32.xlu0 %v890, 127
      %v984 = vpop.permute.xlu0 %983
      %985 = vrot.lane.b32.xlu0 %v891, 127
      %v986 = vpop.permute.xlu0 %985
      %987 = vrot.lane.b32.xlu0 %v892, 127
      %v988 = vpop.permute.xlu0 %987
      %989 = vrot.lane.b32.xlu0 %v893, 127
      %v990 = vpop.permute.xlu0 %989
      %991 = vrot.lane.b32.xlu0 %v894, 127
      %v992 = vpop.permute.xlu0 %991
      %993 = vrot.lane.b32.xlu0 %v895, 127
      %v994 = vpop.permute.xlu0 %993
      %vm995 = vcmask 1039360
      %v996 = vsel %vm995, %v930, %v932
      %v997 = vsel %vm995, %v932, %v934
      %v998 = vsel %vm995, %v934, %v936
      %v999 = vsel %vm995, %v936, %v938
      %v1000 = vsel %vm995, %v938, %v940
      %v1001 = vsel %vm995, %v940, %v942
      %v1002 = vsel %vm995, %v942, %v944
      %v1003 = vsel %vm995, %v944, %v946
      %v1004 = vsel %vm995, %v948, %v950
      %v1005 = vsel %vm995, %v950, %v952
      %v1006 = vsel %vm995, %v952, %v954
      %v1007 = vsel %vm995, %v954, %v956
      %v1008 = vsel %vm995, %v956, %v958
      %v1009 = vsel %vm995, %v958, %v960
      %v1010 = vsel %vm995, %v960, %v962
      %v1011 = vsel %vm995, %v962, %v946
      %v1012 = vsel %vm995, %v964, %v966
      %v1013 = vsel %vm995, %v966, %v968
      %v1014 = vsel %vm995, %v968, %v970
      %v1015 = vsel %vm995, %v970, %v972
      %v1016 = vsel %vm995, %v972, %v974
      %v1017 = vsel %vm995, %v974, %v976
      %v1018 = vsel %vm995, %v976, %v978
      %v1019 = vsel %vm995, %v978, %v946
      %v1020 = vsel %vm995, %v980, %v982
      %v1021 = vsel %vm995, %v982, %v984
      %v1022 = vsel %vm995, %v984, %v986
      %v1023 = vsel %vm995, %v986, %v988
      %v1024 = vsel %vm995, %v988, %v990
      %v1025 = vsel %vm995, %v990, %v992
      %v1026 = vsel %vm995, %v992, %v994
      %v1027 = vsel %vm995, %v994, %v946
      %v1060 = vld [vmem:[%s2] sm:$0xff]
      %v1061 = vld [vmem:[%s2 + $0x8] sm:$0xff]
      %v1062 = vld [vmem:[%s2 + $0x10] sm:$0xff]
      %v1063 = vld [vmem:[%s2 + $0x18] sm:$0xff]
      %vm1064 = vcmask 523264
      %v1066 = vsel %vm1064, %v1060, 0
      %v1069 = vsel %vm1064, %v1061, 0
      %v1072 = vsel %vm1064, %v1062, 0
      %v1075 = vsel %vm1064, %v1063, 0
      %1077 = vmatprep.subr.mxu0 %v865
      %1078 = vmatpush1.msra.mxu0 %v864
      %1079 = vmatprep.subr.mxu0 %v873
      %1080 = vmatpush1.msra.mxu0 %v872
      %1081 = vmatprep.subr.mxu0 %v881
      %1082 = vmatpush1.msra.mxu0 %v880
      %1083 = vmatprep.subr.mxu0 %v889
      %1084 = vmatpush1.msra.mxu0 %v888
      %1085 = vmatprep.subr.mxu0 %v997
      %1086 = vmatpush1.msra.mxu0 %v996
      %1087 = vmatprep.subr.mxu0 %v1005
      %1088 = vmatpush1.msra.mxu0 %v1004
      %1089 = vmatprep.subr.mxu0 %v1013
      %1090 = vmatpush1.msra.mxu0 %v1012
      %1091 = vmatprep.subr.mxu0 %v1021
      %1092 = vmatpush1.msra.mxu0 %v1020
      %1093 = vmatprep.subr.mxu0 0.0
      %1094 = vmatpush1.msra.mxu0 0.0
      %1095 = vmatprep.subr.mxu0 0.0
      %1096 = vmatpush1.msra.mxu0 0.0
      %1097 = vmatprep.subr.mxu0 0.0
      %1098 = vmatpush1.msra.mxu0 0.0
      %1099 = vmatprep.subr.mxu0 0.0
      %1100 = vmatpush1.msra.mxu0 0.0
      %1101 = vmatprep.subr.mxu0 0.0
      %1102 = vmatpush1.msra.mxu0 0.0
      %1103 = vmatprep.subr.mxu0 0.0
      %1104 = vmatpush1.msra.mxu0 0.0
      %1105 = vmatprep.subr.mxu0 0.0
      %1106 = vmatpush1.msra.mxu0 0.0
      %1107 = vmatprep.subr.mxu0 0.0
      %1108 = vmatpush1.msra.mxu0 0.0
      %1109 = vmatprep.subr.mxu0 0.0
      %1110 = vmatpush1.msra.mxu0 0.0
      %1111 = vmatprep.subr.mxu0 0.0
      %1112 = vmatpush1.msra.mxu0 0.0
      %1113 = vmatprep.subr.mxu0 0.0
      %1114 = vmatpush1.msra.mxu0 0.0
      %1115 = vmatprep.subr.mxu0 0.0
      %1116 = vmatpush1.msra.mxu0 0.0
      %1117 = vmatprep.subr.mxu0 0.0
      %1118 = vmatpush1.msra.mxu0 0.0
      %1119 = vmatprep.subr.mxu0 0.0
      %1120 = vmatpush1.msra.mxu0 0.0
      %1121 = vmatprep.subr.mxu0 0.0
      %1122 = vmatpush1.msra.mxu0 0.0
      %1123 = vmatprep.subr.mxu0 0.0
      %1124 = vmatpush1.msra.mxu0 0.0
      %1125 = vmatprep.subr.mxu0 0.0
      %1126 = vmatpush1.msra.mxu0 0.0
      %1127 = vmatprep.subr.mxu0 0.0
      %1128 = vmatpush1.msra.mxu0 0.0
      %1129 = vmatprep.subr.mxu0 0.0
      %1130 = vmatpush1.msra.mxu0 0.0
      %1131 = vmatprep.subr.mxu0 0.0
      %1132 = vmatpush1.msra.mxu0 0.0
      %1133 = vmatprep.subr.mxu0 0.0
      %1134 = vmatpush1.msra.mxu0 0.0
      %1135 = vmatprep.subr.mxu0 0.0
      %1136 = vmatpush1.msra.mxu0 0.0
      %1137 = vmatprep.subr.mxu0 0.0
      %1138 = vmatpush1.msra.mxu0 0.0
      %1139 = vmatprep.subr.mxu0 0.0
      %1140 = vmatpush1.msra.mxu0 0.0
      %1141 = vmatprep.mubr.f32.mxu0 0.0
      %1142 = vmatmul.mubr.f32.gmra.mrb[0].mxu0 %v1066
      %v1143 = vpop.f32.mrb[0].mxu0
      %v1144 = vadd.f32 0.0, %v1143
      %v1145 = vpop.f32.mrb[0].mxu0
      %v1146 = vadd.f32 0.0, %v1145
      %1147 = vmatprep.mubr.f32.mxu0 0.0
      %1148 = vmatmul.mubr.f32.gmra.mrb[0].mxu0 %v1069
      %v1149 = vpop.f32.mrb[0].mxu0
      %v1150 = vadd.f32 0.0, %v1149
      %v1151 = vpop.f32.mrb[0].mxu0
      %v1152 = vadd.f32 0.0, %v1151
      %1153 = vmatprep.mubr.f32.mxu0 0.0
      %1154 = vmatmul.mubr.f32.gmra.mrb[0].mxu0 %v1072
      %v1155 = vpop.f32.mrb[0].mxu0
      %v1156 = vadd.f32 0.0, %v1155
      %v1157 = vpop.f32.mrb[0].mxu0
      %v1158 = vadd.f32 0.0, %v1157
      %1159 = vmatprep.mubr.f32.mxu0 0.0
      %1160 = vmatmul.mubr.f32.gmra.mrb[0].mxu0 %v1075
      %v1161 = vpop.f32.mrb[0].mxu0
      %v1162 = vadd.f32 0.0, %v1161
      %v1163 = vpop.f32.mrb[0].mxu0
      %v1164 = vadd.f32 0.0, %v1163
      %1165 = vdwg.mxu0
      %1166 = vmatprep.subr.mxu0 %v867
      %1167 = vmatpush1.msra.mxu0 %v866
      %1168 = vmatprep.subr.mxu0 %v875
      %1169 = vmatpush1.msra.mxu0 %v874
      %1170 = vmatprep.subr.mxu0 %v883
      %1171 = vmatpush1.msra.mxu0 %v882
      %1172 = vmatprep.subr.mxu0 %v891
      %1173 = vmatpush1.msra.mxu0 %v890
      %1174 = vmatprep.subr.mxu0 %v999
      %1175 = vmatpush1.msra.mxu0 %v998
      %1176 = vmatprep.subr.mxu0 %v1007
      %1177 = vmatpush1.msra.mxu0 %v1006
      %1178 = vmatprep.subr.mxu0 %v1015
      %1179 = vmatpush1.msra.mxu0 %v1014
      %1180 = vmatprep.subr.mxu0 %v1023
      %1181 = vmatpush1.msra.mxu0 %v1022
      %1182 = vmatprep.subr.mxu0 0.0
      %1183 = vmatpush1.msra.mxu0 0.0
      %1184 = vmatprep.subr.mxu0 0.0
      %1185 = vmatpush1.msra.mxu0 0.0
      %1186 = vmatprep.subr.mxu0 0.0
      %1187 = vmatpush1.msra.mxu0 0.0
      %1188 = vmatprep.subr.mxu0 0.0
      %1189 = vmatpush1.msra.mxu0 0.0
      %1190 = vmatprep.subr.mxu0 0.0
      %1191 = vmatpush1.msra.mxu0 0.0
      %1192 = vmatprep.subr.mxu0 0.0
      %1193 = vmatpush1.msra.mxu0 0.0
      %1194 = vmatprep.subr.mxu0 0.0
      %1195 = vmatpush1.msra.mxu0 0.0
      %1196 = vmatprep.subr.mxu0 0.0
      %1197 = vmatpush1.msra.mxu0 0.0
      %1198 = vmatprep.subr.mxu0 0.0
      %1199 = vmatpush1.msra.mxu0 0.0
      %1200 = vmatprep.subr.mxu0 0.0
      %1201 = vmatpush1.msra.mxu0 0.0
      %1202 = vmatprep.subr.mxu0 0.0
      %1203 = vmatpush1.msra.mxu0 0.0
      %1204 = vmatprep.subr.mxu0 0.0
      %1205 = vmatpush1.msra.mxu0 0.0
      %1206 = vmatprep.subr.mxu0 0.0
      %1207 = vmatpush1.msra.mxu0 0.0
      %1208 = vmatprep.subr.mxu0 0.0
      %1209 = vmatpush1.msra.mxu0 0.0
      %1210 = vmatprep.subr.mxu0 0.0
      %1211 = vmatpush1.msra.mxu0 0.0
      %1212 = vmatprep.subr.mxu0 0.0
      %1213 = vmatpush1.msra.mxu0 0.0
      %1214 = vmatprep.subr.mxu0 0.0
      %1215 = vmatpush1.msra.mxu0 0.0
      %1216 = vmatprep.subr.mxu0 0.0
      %1217 = vmatpush1.msra.mxu0 0.0
      %1218 = vmatprep.subr.mxu0 0.0
      %1219 = vmatpush1.msra.mxu0 0.0
      %1220 = vmatprep.subr.mxu0 0.0
      %1221 = vmatpush1.msra.mxu0 0.0
      %1222 = vmatprep.subr.mxu0 0.0
      %1223 = vmatpush1.msra.mxu0 0.0
      %1224 = vmatprep.subr.mxu0 0.0
      %1225 = vmatpush1.msra.mxu0 0.0
      %1226 = vmatprep.subr.mxu0 0.0
      %1227 = vmatpush1.msra.mxu0 0.0
      %1228 = vmatprep.subr.mxu0 0.0
      %1229 = vmatpush1.msra.mxu0 0.0
      %1230 = vmatprep.mubr.f32.mxu0 0.0
      %1231 = vmatmul.mubr.f32.gmra.mrb[0].mxu0 %v1066
      %v1232 = vpop.f32.mrb[0].mxu0
      %v1233 = vadd.f32 0.0, %v1232
      %v1234 = vpop.f32.mrb[0].mxu0
      %v1235 = vadd.f32 0.0, %v1234
      %1236 = vmatprep.mubr.f32.mxu0 0.0
      %1237 = vmatmul.mubr.f32.gmra.mrb[0].mxu0 %v1069
      %v1238 = vpop.f32.mrb[0].mxu0
      %v1239 = vadd.f32 0.0, %v1238
      %v1240 = vpop.f32.mrb[0].mxu0
      %v1241 = vadd.f32 0.0, %v1240
      %1242 = vmatprep.mubr.f32.mxu0 0.0
      %1243 = vmatmul.mubr.f32.gmra.mrb[0].mxu0 %v1072
      %v1244 = vpop.f32.mrb[0].mxu0
      %v1245 = vadd.f32 0.0, %v1244
      %v1246 = vpop.f32.mrb[0].mxu0
      %v1247 = vadd.f32 0.0, %v1246
      %1248 = vmatprep.mubr.f32.mxu0 0.0
      %1249 = vmatmul.mubr.f32.gmra.mrb[0].mxu0 %v1075
      %v1250 = vpop.f32.mrb[0].mxu0
      %v1251 = vadd.f32 0.0, %v1250
      %v1252 = vpop.f32.mrb[0].mxu0
      %v1253 = vadd.f32 0.0, %v1252
      %1254 = vdwg.mxu0
      %1255 = vmatprep.subr.mxu0 %v869
      %1256 = vmatpush1.msra.mxu0 %v868
      %1257 = vmatprep.subr.mxu0 %v877
      %1258 = vmatpush1.msra.mxu0 %v876
      %1259 = vmatprep.subr.mxu0 %v885
      %1260 = vmatpush1.msra.mxu0 %v884
      %1261 = vmatprep.subr.mxu0 %v893
      %1262 = vmatpush1.msra.mxu0 %v892
      %1263 = vmatprep.subr.mxu0 %v1001
      %1264 = vmatpush1.msra.mxu0 %v1000
      %1265 = vmatprep.subr.mxu0 %v1009
      %1266 = vmatpush1.msra.mxu0 %v1008
      %1267 = vmatprep.subr.mxu0 %v1017
      %1268 = vmatpush1.msra.mxu0 %v1016
      %1269 = vmatprep.subr.mxu0 %v1025
      %1270 = vmatpush1.msra.mxu0 %v1024
      %1271 = vmatprep.subr.mxu0 0.0
      %1272 = vmatpush1.msra.mxu0 0.0
      %1273 = vmatprep.subr.mxu0 0.0
      %1274 = vmatpush1.msra.mxu0 0.0
      %1275 = vmatprep.subr.mxu0 0.0
      %1276 = vmatpush1.msra.mxu0 0.0
      %1277 = vmatprep.subr.mxu0 0.0
      %1278 = vmatpush1.msra.mxu0 0.0
      %1279 = vmatprep.subr.mxu0 0.0
      %1280 = vmatpush1.msra.mxu0 0.0
      %1281 = vmatprep.subr.mxu0 0.0
      %1282 = vmatpush1.msra.mxu0 0.0
      %1283 = vmatprep.subr.mxu0 0.0
      %1284 = vmatpush1.msra.mxu0 0.0
      %1285 = vmatprep.subr.mxu0 0.0
      %1286 = vmatpush1.msra.mxu0 0.0
      %1287 = vmatprep.subr.mxu0 0.0
      %1288 = vmatpush1.msra.mxu0 0.0
      %1289 = vmatprep.subr.mxu0 0.0
      %1290 = vmatpush1.msra.mxu0 0.0
      %1291 = vmatprep.subr.mxu0 0.0
      %1292 = vmatpush1.msra.mxu0 0.0
      %1293 = vmatprep.subr.mxu0 0.0
      %1294 = vmatpush1.msra.mxu0 0.0
      %1295 = vmatprep.subr.mxu0 0.0
      %1296 = vmatpush1.msra.mxu0 0.0
      %1297 = vmatprep.subr.mxu0 0.0
      %1298 = vmatpush1.msra.mxu0 0.0
      %1299 = vmatprep.subr.mxu0 0.0
      %1300 = vmatpush1.msra.mxu0 0.0
      %1301 = vmatprep.subr.mxu0 0.0
      %1302 = vmatpush1.msra.mxu0 0.0
      %1303 = vmatprep.subr.mxu0 0.0
      %1304 = vmatpush1.msra.mxu0 0.0
      %1305 = vmatprep.subr.mxu0 0.0
      %1306 = vmatpush1.msra.mxu0 0.0
      %1307 = vmatprep.subr.mxu0 0.0
      %1308 = vmatpush1.msra.mxu0 0.0
      %1309 = vmatprep.subr.mxu0 0.0
      %1310 = vmatpush1.msra.mxu0 0.0
      %1311 = vmatprep.subr.mxu0 0.0
      %1312 = vmatpush1.msra.mxu0 0.0
      %1313 = vmatprep.subr.mxu0 0.0
      %1314 = vmatpush1.msra.mxu0 0.0
      %1315 = vmatprep.subr.mxu0 0.0
      %1316 = vmatpush1.msra.mxu0 0.0
      %1317 = vmatprep.subr.mxu0 0.0
      %1318 = vmatpush1.msra.mxu0 0.0
      %1319 = vmatprep.mubr.f32.mxu0 0.0
      %1320 = vmatmul.mubr.f32.gmra.mrb[0].mxu0 %v1066
      %v1321 = vpop.f32.mrb[0].mxu0
      %v1322 = vadd.f32 0.0, %v1321
      %v1323 = vpop.f32.mrb[0].mxu0
      %v1324 = vadd.f32 0.0, %v1323
      %1325 = vmatprep.mubr.f32.mxu0 0.0
      %1326 = vmatmul.mubr.f32.gmra.mrb[0].mxu0 %v1069
      %v1327 = vpop.f32.mrb[0].mxu0
      %v1328 = vadd.f32 0.0, %v1327
      %v1329 = vpop.f32.mrb[0].mxu0
      %v1330 = vadd.f32 0.0, %v1329
      %1331 = vmatprep.mubr.f32.mxu0 0.0
      %1332 = vmatmul.mubr.f32.gmra.mrb[0].mxu0 %v1072
      %v1333 = vpop.f32.mrb[0].mxu0
      %v1334 = vadd.f32 0.0, %v1333
      %v1335 = vpop.f32.mrb[0].mxu0
      %v1336 = vadd.f32 0.0, %v1335
      %1337 = vmatprep.mubr.f32.mxu0 0.0
      %1338 = vmatmul.mubr.f32.gmra.mrb[0].mxu0 %v1075
      %v1339 = vpop.f32.mrb[0].mxu0
      %v1340 = vadd.f32 0.0, %v1339
      %v1341 = vpop.f32.mrb[0].mxu0
      %v1342 = vadd.f32 0.0, %v1341
      %1343 = vdwg.mxu0
      %1344 = vmatprep.subr.mxu0 %v871
      %1345 = vmatpush1.msra.mxu0 %v870
      %1346 = vmatprep.subr.mxu0 %v879
      %1347 = vmatpush1.msra.mxu0 %v878
      %1348 = vmatprep.subr.mxu0 %v887
      %1349 = vmatpush1.msra.mxu0 %v886
      %1350 = vmatprep.subr.mxu0 %v895
      %1351 = vmatpush1.msra.mxu0 %v894
      %1352 = vmatprep.subr.mxu0 %v1003
      %1353 = vmatpush1.msra.mxu0 %v1002
      %1354 = vmatprep.subr.mxu0 %v1011
      %1355 = vmatpush1.msra.mxu0 %v1010
      %1356 = vmatprep.subr.mxu0 %v1019
      %1357 = vmatpush1.msra.mxu0 %v1018
      %1358 = vmatprep.subr.mxu0 %v1027
      %1359 = vmatpush1.msra.mxu0 %v1026
      %1360 = vmatprep.subr.mxu0 0.0
      %1361 = vmatpush1.msra.mxu0 0.0
      %1362 = vmatprep.subr.mxu0 0.0
      %1363 = vmatpush1.msra.mxu0 0.0
      %1364 = vmatprep.subr.mxu0 0.0
      %1365 = vmatpush1.msra.mxu0 0.0
      %1366 = vmatprep.subr.mxu0 0.0
      %1367 = vmatpush1.msra.mxu0 0.0
      %1368 = vmatprep.subr.mxu0 0.0
      %1369 = vmatpush1.msra.mxu0 0.0
      %1370 = vmatprep.subr.mxu0 0.0
      %1371 = vmatpush1.msra.mxu0 0.0
      %1372 = vmatprep.subr.mxu0 0.0
      %1373 = vmatpush1.msra.mxu0 0.0
      %1374 = vmatprep.subr.mxu0 0.0
      %1375 = vmatpush1.msra.mxu0 0.0
      %1376 = vmatprep.subr.mxu0 0.0
      %1377 = vmatpush1.msra.mxu0 0.0
      %1378 = vmatprep.subr.mxu0 0.0
      %1379 = vmatpush1.msra.mxu0 0.0
      %1380 = vmatprep.subr.mxu0 0.0
      %1381 = vmatpush1.msra.mxu0 0.0
      %1382 = vmatprep.subr.mxu0 0.0
      %1383 = vmatpush1.msra.mxu0 0.0
      %1384 = vmatprep.subr.mxu0 0.0
      %1385 = vmatpush1.msra.mxu0 0.0
      %1386 = vmatprep.subr.mxu0 0.0
      %1387 = vmatpush1.msra.mxu0 0.0
      %1388 = vmatprep.subr.mxu0 0.0
      %1389 = vmatpush1.msra.mxu0 0.0
      %1390 = vmatprep.subr.mxu0 0.0
      %1391 = vmatpush1.msra.mxu0 0.0
      %1392 = vmatprep.subr.mxu0 0.0
      %1393 = vmatpush1.msra.mxu0 0.0
      %1394 = vmatprep.subr.mxu0 0.0
      %1395 = vmatpush1.msra.mxu0 0.0
      %1396 = vmatprep.subr.mxu0 0.0
      %1397 = vmatpush1.msra.mxu0 0.0
      %1398 = vmatprep.subr.mxu0 0.0
      %1399 = vmatpush1.msra.mxu0 0.0
      %1400 = vmatprep.subr.mxu0 0.0
      %1401 = vmatpush1.msra.mxu0 0.0
      %1402 = vmatprep.subr.mxu0 0.0
      %1403 = vmatpush1.msra.mxu0 0.0
      %1404 = vmatprep.subr.mxu0 0.0
      %1405 = vmatpush1.msra.mxu0 0.0
      %1406 = vmatprep.subr.mxu0 0.0
      %1407 = vmatpush1.msra.mxu0 0.0
      %1408 = vmatprep.mubr.f32.mxu0 0.0
      %1409 = vmatmul.mubr.f32.gmra.mrb[0].mxu0 %v1066
      %v1410 = vpop.f32.mrb[0].mxu0
      %v1411 = vadd.f32 0.0, %v1410
      %v1412 = vpop.f32.mrb[0].mxu0
      %v1413 = vadd.f32 0.0, %v1412
      %1414 = vmatprep.mubr.f32.mxu0 0.0
      %1415 = vmatmul.mubr.f32.gmra.mrb[0].mxu0 %v1069
      %v1416 = vpop.f32.mrb[0].mxu0
      %v1417 = vadd.f32 0.0, %v1416
      %v1418 = vpop.f32.mrb[0].mxu0
      %v1419 = vadd.f32 0.0, %v1418
      %1420 = vmatprep.mubr.f32.mxu0 0.0
      %1421 = vmatmul.mubr.f32.gmra.mrb[0].mxu0 %v1072
      %v1422 = vpop.f32.mrb[0].mxu0
      %v1423 = vadd.f32 0.0, %v1422
      %v1424 = vpop.f32.mrb[0].mxu0
      %v1425 = vadd.f32 0.0, %v1424
      %1426 = vmatprep.mubr.f32.mxu0 0.0
      %1427 = vmatmul.mubr.f32.gmra.mrb[0].mxu0 %v1075
      %v1428 = vpop.f32.mrb[0].mxu0
      %v1429 = vadd.f32 0.0, %v1428
      %v1430 = vpop.f32.mrb[0].mxu0
      %v1431 = vadd.f32 0.0, %v1430
      %1432 = vdwg.mxu0
      %s1433 = scalar_lea.vmem %s3, 32
      %v1434 = vld [vmem:[%s1433] sm:$0xff]
      %v1435 = vld [vmem:[%s1433 + $0x8] sm:$0xff]
      %v1436 = vld [vmem:[%s1433 + $0x10] sm:$0xff]
      %v1437 = vld [vmem:[%s1433 + $0x18] sm:$0xff]
      %1439 = vset.pattern.permute.xlu0 0
      %1440 = vperm.xlu0 %1439, %v1434
      %v1441 = vpop.permute.xlu0 %1440
      %1444 = vset.pattern.permute.xlu0 0
      %1445 = vperm.xlu0 %1444, %v1435
      %v1446 = vpop.permute.xlu0 %1445
      %1449 = vset.pattern.permute.xlu0 0
      %1450 = vperm.xlu0 %1449, %v1436
      %v1451 = vpop.permute.xlu0 %1450
      %1454 = vset.pattern.permute.xlu0 0
      %1455 = vperm.xlu0 %1454, %v1437
      %v1456 = vpop.permute.xlu0 %1455
      %v1458 = vmul.f32 %v1144, %v1441
      %v1459 = vmul.f32 %v1146, %v1441
      %v1460 = vmul.f32 %v1233, %v1441
      %v1461 = vmul.f32 %v1235, %v1441
      %v1462 = vmul.f32 %v1322, %v1441
      %v1463 = vmul.f32 %v1324, %v1441
      %v1464 = vmul.f32 %v1411, %v1441
      %v1465 = vmul.f32 %v1413, %v1441
      %v1466 = vmul.f32 %v1150, %v1446
      %v1467 = vmul.f32 %v1152, %v1446
      %v1468 = vmul.f32 %v1239, %v1446
      %v1469 = vmul.f32 %v1241, %v1446
      %v1470 = vmul.f32 %v1328, %v1446
      %v1471 = vmul.f32 %v1330, %v1446
      %v1472 = vmul.f32 %v1417, %v1446
      %v1473 = vmul.f32 %v1419, %v1446
      %v1474 = vmul.f32 %v1156, %v1451
      %v1475 = vmul.f32 %v1158, %v1451
      %v1476 = vmul.f32 %v1245, %v1451
      %v1477 = vmul.f32 %v1247, %v1451
      %v1478 = vmul.f32 %v1334, %v1451
      %v1479 = vmul.f32 %v1336, %v1451
      %v1480 = vmul.f32 %v1423, %v1451
      %v1481 = vmul.f32 %v1425, %v1451
      %v1482 = vmul.f32 %v1162, %v1456
      %v1483 = vmul.f32 %v1164, %v1456
      %v1484 = vmul.f32 %v1251, %v1456
      %v1485 = vmul.f32 %v1253, %v1456
      %v1486 = vmul.f32 %v1340, %v1456
      %v1487 = vmul.f32 %v1342, %v1456
      %v1488 = vmul.f32 %v1429, %v1456
      %v1489 = vmul.f32 %v1431, %v1456
      %s1490 = scalar_lea.vmem %s4, 32
      %v1491 = vld [vmem:[%s1490] sm:$0xff]
      %v1492 = vld [vmem:[%s1490 + $0x8] sm:$0xff]
      %v1493 = vld [vmem:[%s1490 + $0x10] sm:$0xff]
      %v1494 = vld [vmem:[%s1490 + $0x18] sm:$0xff]
      %1496 = vset.pattern.permute.xlu0 0
      %1497 = vperm.xlu0 %1496, %v1491
      %v1498 = vpop.permute.xlu0 %1497
      %1501 = vset.pattern.permute.xlu0 0
      %1502 = vperm.xlu0 %1501, %v1492
      %v1503 = vpop.permute.xlu0 %1502
      %1506 = vset.pattern.permute.xlu0 0
      %1507 = vperm.xlu0 %1506, %v1493
      %v1508 = vpop.permute.xlu0 %1507
      %1511 = vset.pattern.permute.xlu0 0
      %1512 = vperm.xlu0 %1511, %v1494
      %v1513 = vpop.permute.xlu0 %1512
      %v1515 = vadd.f32 %v1458, %v1498
      %v1516 = vadd.f32 %v1459, %v1498
      %v1517 = vadd.f32 %v1460, %v1498
      %v1518 = vadd.f32 %v1461, %v1498
      %v1519 = vadd.f32 %v1462, %v1498
      %v1520 = vadd.f32 %v1463, %v1498
      %v1521 = vadd.f32 %v1464, %v1498
      %v1522 = vadd.f32 %v1465, %v1498
      %v1523 = vadd.f32 %v1466, %v1503
      %v1524 = vadd.f32 %v1467, %v1503
      %v1525 = vadd.f32 %v1468, %v1503
      %v1526 = vadd.f32 %v1469, %v1503
      %v1527 = vadd.f32 %v1470, %v1503
      %v1528 = vadd.f32 %v1471, %v1503
      %v1529 = vadd.f32 %v1472, %v1503
      %v1530 = vadd.f32 %v1473, %v1503
      %v1531 = vadd.f32 %v1474, %v1508
      %v1532 = vadd.f32 %v1475, %v1508
      %v1533 = vadd.f32 %v1476, %v1508
      %v1534 = vadd.f32 %v1477, %v1508
      %v1535 = vadd.f32 %v1478, %v1508
      %v1536 = vadd.f32 %v1479, %v1508
      %v1537 = vadd.f32 %v1480, %v1508
      %v1538 = vadd.f32 %v1481, %v1508
      %v1539 = vadd.f32 %v1482, %v1513
      %v1540 = vadd.f32 %v1483, %v1513
      %v1541 = vadd.f32 %v1484, %v1513
      %v1542 = vadd.f32 %v1485, %v1513
      %v1543 = vadd.f32 %v1486, %v1513
      %v1544 = vadd.f32 %v1487, %v1513
      %v1545 = vadd.f32 %v1488, %v1513
      %v1546 = vadd.f32 %v1489, %v1513
      %v1547 = vmax.f32 %v1515, 0.0
      %v1548 = vmax.f32 %v1516, 0.0
      %v1549 = vmax.f32 %v1517, 0.0
      %v1550 = vmax.f32 %v1518, 0.0
      %v1551 = vmax.f32 %v1519, 0.0
      %v1552 = vmax.f32 %v1520, 0.0
      %v1553 = vmax.f32 %v1521, 0.0
      %v1554 = vmax.f32 %v1522, 0.0
      %v1555 = vmax.f32 %v1523, 0.0
      %v1556 = vmax.f32 %v1524, 0.0
      %v1557 = vmax.f32 %v1525, 0.0
      %v1558 = vmax.f32 %v1526, 0.0
      %v1559 = vmax.f32 %v1527, 0.0
      %v1560 = vmax.f32 %v1528, 0.0
      %v1561 = vmax.f32 %v1529, 0.0
      %v1562 = vmax.f32 %v1530, 0.0
      %v1563 = vmax.f32 %v1531, 0.0
      %v1564 = vmax.f32 %v1532, 0.0
      %v1565 = vmax.f32 %v1533, 0.0
      %v1566 = vmax.f32 %v1534, 0.0
      %v1567 = vmax.f32 %v1535, 0.0
      %v1568 = vmax.f32 %v1536, 0.0
      %v1569 = vmax.f32 %v1537, 0.0
      %v1570 = vmax.f32 %v1538, 0.0
      %v1571 = vmax.f32 %v1539, 0.0
      %v1572 = vmax.f32 %v1540, 0.0
      %v1573 = vmax.f32 %v1541, 0.0
      %v1574 = vmax.f32 %v1542, 0.0
      %v1575 = vmax.f32 %v1543, 0.0
      %v1576 = vmax.f32 %v1544, 0.0
      %v1577 = vmax.f32 %v1545, 0.0
      %v1578 = vmax.f32 %v1546, 0.0
      %1611 = vrot.lane.b32.xlu0 %v1547, 126
      %v1612 = vpop.permute.xlu0 %1611
      %1613 = vrot.lane.b32.xlu0 %v1548, 126
      %v1614 = vpop.permute.xlu0 %1613
      %1615 = vrot.lane.b32.xlu0 %v1549, 126
      %v1616 = vpop.permute.xlu0 %1615
      %1617 = vrot.lane.b32.xlu0 %v1550, 126
      %v1618 = vpop.permute.xlu0 %1617
      %1619 = vrot.lane.b32.xlu0 %v1551, 126
      %v1620 = vpop.permute.xlu0 %1619
      %1621 = vrot.lane.b32.xlu0 %v1552, 126
      %v1622 = vpop.permute.xlu0 %1621
      %1623 = vrot.lane.b32.xlu0 %v1553, 126
      %v1624 = vpop.permute.xlu0 %1623
      %1625 = vrot.lane.b32.xlu0 %v1554, 126
      %v1626 = vpop.permute.xlu0 %1625
      %1627 = vrot.lane.b32.xlu0 0.0, 126
      %v1628 = vpop.permute.xlu0 %1627
      %1629 = vrot.lane.b32.xlu0 %v1555, 126
      %v1630 = vpop.permute.xlu0 %1629
      %1631 = vrot.lane.b32.xlu0 %v1556, 126
      %v1632 = vpop.permute.xlu0 %1631
      %1633 = vrot.lane.b32.xlu0 %v1557, 126
      %v1634 = vpop.permute.xlu0 %1633
      %1635 = vrot.lane.b32.xlu0 %v1558, 126
      %v1636 = vpop.permute.xlu0 %1635
      %1637 = vrot.lane.b32.xlu0 %v1559, 126
      %v1638 = vpop.permute.xlu0 %1637
      %1639 = vrot.lane.b32.xlu0 %v1560, 126
      %v1640 = vpop.permute.xlu0 %1639
      %1641 = vrot.lane.b32.xlu0 %v1561, 126
      %v1642 = vpop.permute.xlu0 %1641
      %1643 = vrot.lane.b32.xlu0 %v1562, 126
      %v1644 = vpop.permute.xlu0 %1643
      %1645 = vrot.lane.b32.xlu0 %v1563, 126
      %v1646 = vpop.permute.xlu0 %1645
      %1647 = vrot.lane.b32.xlu0 %v1564, 126
      %v1648 = vpop.permute.xlu0 %1647
      %1649 = vrot.lane.b32.xlu0 %v1565, 126
      %v1650 = vpop.permute.xlu0 %1649
      %1651 = vrot.lane.b32.xlu0 %v1566, 126
      %v1652 = vpop.permute.xlu0 %1651
      %1653 = vrot.lane.b32.xlu0 %v1567, 126
      %v1654 = vpop.permute.xlu0 %1653
      %1655 = vrot.lane.b32.xlu0 %v1568, 126
      %v1656 = vpop.permute.xlu0 %1655
      %1657 = vrot.lane.b32.xlu0 %v1569, 126
      %v1658 = vpop.permute.xlu0 %1657
      %1659 = vrot.lane.b32.xlu0 %v1570, 126
      %v1660 = vpop.permute.xlu0 %1659
      %1661 = vrot.lane.b32.xlu0 %v1571, 126
      %v1662 = vpop.permute.xlu0 %1661
      %1663 = vrot.lane.b32.xlu0 %v1572, 126
      %v1664 = vpop.permute.xlu0 %1663
      %1665 = vrot.lane.b32.xlu0 %v1573, 126
      %v1666 = vpop.permute.xlu0 %1665
      %1667 = vrot.lane.b32.xlu0 %v1574, 126
      %v1668 = vpop.permute.xlu0 %1667
      %1669 = vrot.lane.b32.xlu0 %v1575, 126
      %v1670 = vpop.permute.xlu0 %1669
      %1671 = vrot.lane.b32.xlu0 %v1576, 126
      %v1672 = vpop.permute.xlu0 %1671
      %1673 = vrot.lane.b32.xlu0 %v1577, 126
      %v1674 = vpop.permute.xlu0 %1673
      %1675 = vrot.lane.b32.xlu0 %v1578, 126
      %v1676 = vpop.permute.xlu0 %1675
      %vm1677 = vcmask 1031168
      %v1678 = vsel %vm1677, %v1612, %v1614
      %v1679 = vsel %vm1677, %v1614, %v1616
      %v1680 = vsel %vm1677, %v1616, %v1618
      %v1681 = vsel %vm1677, %v1618, %v1620
      %v1682 = vsel %vm1677, %v1620, %v1622
      %v1683 = vsel %vm1677, %v1622, %v1624
      %v1684 = vsel %vm1677, %v1624, %v1626
      %v1685 = vsel %vm1677, %v1626, %v1628
      %v1686 = vsel %vm1677, %v1630, %v1632
      %v1687 = vsel %vm1677, %v1632, %v1634
      %v1688 = vsel %vm1677, %v1634, %v1636
      %v1689 = vsel %vm1677, %v1636, %v1638
      %v1690 = vsel %vm1677, %v1638, %v1640
      %v1691 = vsel %vm1677, %v1640, %v1642
      %v1692 = vsel %vm1677, %v1642, %v1644
      %v1693 = vsel %vm1677, %v1644, %v1628
      %v1694 = vsel %vm1677, %v1646, %v1648
      %v1695 = vsel %vm1677, %v1648, %v1650
      %v1696 = vsel %vm1677, %v1650, %v1652
      %v1697 = vsel %vm1677, %v1652, %v1654
      %v1698 = vsel %vm1677, %v1654, %v1656
      %v1699 = vsel %vm1677, %v1656, %v1658
      %v1700 = vsel %vm1677, %v1658, %v1660
      %v1701 = vsel %vm1677, %v1660, %v1628
      %v1702 = vsel %vm1677, %v1662, %v1664
      %v1703 = vsel %vm1677, %v1664, %v1666
      %v1704 = vsel %vm1677, %v1666, %v1668
      %v1705 = vsel %vm1677, %v1668, %v1670
      %v1706 = vsel %vm1677, %v1670, %v1672
      %v1707 = vsel %vm1677, %v1672, %v1674
      %v1708 = vsel %vm1677, %v1674, %v1676
      %v1709 = vsel %vm1677, %v1676, %v1628
      %s1742 = scalar_lea.vmem %s2, 32
      %v1743 = vld [vmem:[%s1742] sm:$0xff]
      %v1744 = vld [vmem:[%s1742 + $0x8] sm:$0xff]
      %v1745 = vld [vmem:[%s1742 + $0x10] sm:$0xff]
      %v1746 = vld [vmem:[%s1742 + $0x18] sm:$0xff]
      %v1748 = vsel %vm1064, %v1743, 0
      %v1751 = vsel %vm1064, %v1744, 0
      %v1754 = vsel %vm1064, %v1745, 0
      %v1757 = vsel %vm1064, %v1746, 0
      %1759 = vmatprep.subr.mxu0 %v1548
      %1760 = vmatpush1.msra.mxu0 %v1547
      %1761 = vmatprep.subr.mxu0 %v1556
      %1762 = vmatpush1.msra.mxu0 %v1555
      %1763 = vmatprep.subr.mxu0 %v1564
      %1764 = vmatpush1.msra.mxu0 %v1563
      %1765 = vmatprep.subr.mxu0 %v1572
      %1766 = vmatpush1.msra.mxu0 %v1571
      %1767 = vmatprep.subr.mxu0 %v1679
      %1768 = vmatpush1.msra.mxu0 %v1678
      %1769 = vmatprep.subr.mxu0 %v1687
      %1770 = vmatpush1.msra.mxu0 %v1686
      %1771 = vmatprep.subr.mxu0 %v1695
      %1772 = vmatpush1.msra.mxu0 %v1694
      %1773 = vmatprep.subr.mxu0 %v1703
      %1774 = vmatpush1.msra.mxu0 %v1702
      %1775 = vmatprep.subr.mxu0 0.0
      %1776 = vmatpush1.msra.mxu0 0.0
      %1777 = vmatprep.subr.mxu0 0.0
      %1778 = vmatpush1.msra.mxu0 0.0
      %1779 = vmatprep.subr.mxu0 0.0
      %1780 = vmatpush1.msra.mxu0 0.0
      %1781 = vmatprep.subr.mxu0 0.0
      %1782 = vmatpush1.msra.mxu0 0.0
      %1783 = vmatprep.subr.mxu0 0.0
      %1784 = vmatpush1.msra.mxu0 0.0
      %1785 = vmatprep.subr.mxu0 0.0
      %1786 = vmatpush1.msra.mxu0 0.0
      %1787 = vmatprep.subr.mxu0 0.0
      %1788 = vmatpush1.msra.mxu0 0.0
      %1789 = vmatprep.subr.mxu0 0.0
      %1790 = vmatpush1.msra.mxu0 0.0
      %1791 = vmatprep.subr.mxu0 0.0
      %1792 = vmatpush1.msra.mxu0 0.0
      %1793 = vmatprep.subr.mxu0 0.0
      %1794 = vmatpush1.msra.mxu0 0.0
      %1795 = vmatprep.subr.mxu0 0.0
      %1796 = vmatpush1.msra.mxu0 0.0
      %1797 = vmatprep.subr.mxu0 0.0
      %1798 = vmatpush1.msra.mxu0 0.0
      %1799 = vmatprep.subr.mxu0 0.0
      %1800 = vmatpush1.msra.mxu0 0.0
      %1801 = vmatprep.subr.mxu0 0.0
      %1802 = vmatpush1.msra.mxu0 0.0
      %1803 = vmatprep.subr.mxu0 0.0
      %1804 = vmatpush1.msra.mxu0 0.0
      %1805 = vmatprep.subr.mxu0 0.0
      %1806 = vmatpush1.msra.mxu0 0.0
      %1807 = vmatprep.subr.mxu0 0.0
      %1808 = vmatpush1.msra.mxu0 0.0
      %1809 = vmatprep.subr.mxu0 0.0
      %1810 = vmatpush1.msra.mxu0 0.0
      %1811 = vmatprep.subr.mxu0 0.0
      %1812 = vmatpush1.msra.mxu0 0.0
      %1813 = vmatprep.subr.mxu0 0.0
      %1814 = vmatpush1.msra.mxu0 0.0
      %1815 = vmatprep.subr.mxu0 0.0
      %1816 = vmatpush1.msra.mxu0 0.0
      %1817 = vmatprep.subr.mxu0 0.0
      %1818 = vmatpush1.msra.mxu0 0.0
      %1819 = vmatprep.subr.mxu0 0.0
      %1820 = vmatpush1.msra.mxu0 0.0
      %1821 = vmatprep.subr.mxu0 0.0
      %1822 = vmatpush1.msra.mxu0 0.0
      %1823 = vmatprep.mubr.f32.mxu0 0.0
      %1824 = vmatmul.mubr.f32.gmra.mrb[0].mxu0 %v1748
      %v1825 = vpop.f32.mrb[0].mxu0
      %v1826 = vadd.f32 0.0, %v1825
      %v1827 = vpop.f32.mrb[0].mxu0
      %v1828 = vadd.f32 0.0, %v1827
      %1829 = vmatprep.mubr.f32.mxu0 0.0
      %1830 = vmatmul.mubr.f32.gmra.mrb[0].mxu0 %v1751
      %v1831 = vpop.f32.mrb[0].mxu0
      %v1832 = vadd.f32 0.0, %v1831
      %v1833 = vpop.f32.mrb[0].mxu0
      %v1834 = vadd.f32 0.0, %v1833
      %1835 = vmatprep.mubr.f32.mxu0 0.0
      %1836 = vmatmul.mubr.f32.gmra.mrb[0].mxu0 %v1754
      %v1837 = vpop.f32.mrb[0].mxu0
      %v1838 = vadd.f32 0.0, %v1837
      %v1839 = vpop.f32.mrb[0].mxu0
      %v1840 = vadd.f32 0.0, %v1839
      %1841 = vmatprep.mubr.f32.mxu0 0.0
      %1842 = vmatmul.mubr.f32.gmra.mrb[0].mxu0 %v1757
      %v1843 = vpop.f32.mrb[0].mxu0
      %v1844 = vadd.f32 0.0, %v1843
      %v1845 = vpop.f32.mrb[0].mxu0
      %v1846 = vadd.f32 0.0, %v1845
      %1847 = vdwg.mxu0
      %1848 = vmatprep.subr.mxu0 %v1550
      %1849 = vmatpush1.msra.mxu0 %v1549
      %1850 = vmatprep.subr.mxu0 %v1558
      %1851 = vmatpush1.msra.mxu0 %v1557
      %1852 = vmatprep.subr.mxu0 %v1566
      %1853 = vmatpush1.msra.mxu0 %v1565
      %1854 = vmatprep.subr.mxu0 %v1574
      %1855 = vmatpush1.msra.mxu0 %v1573
      %1856 = vmatprep.subr.mxu0 %v1681
      %1857 = vmatpush1.msra.mxu0 %v1680
      %1858 = vmatprep.subr.mxu0 %v1689
      %1859 = vmatpush1.msra.mxu0 %v1688
      %1860 = vmatprep.subr.mxu0 %v1697
      %1861 = vmatpush1.msra.mxu0 %v1696
      %1862 = vmatprep.subr.mxu0 %v1705
      %1863 = vmatpush1.msra.mxu0 %v1704
      %1864 = vmatprep.subr.mxu0 0.0
      %1865 = vmatpush1.msra.mxu0 0.0
      %1866 = vmatprep.subr.mxu0 0.0
      %1867 = vmatpush1.msra.mxu0 0.0
      %1868 = vmatprep.subr.mxu0 0.0
      %1869 = vmatpush1.msra.mxu0 0.0
      %1870 = vmatprep.subr.mxu0 0.0
      %1871 = vmatpush1.msra.mxu0 0.0
      %1872 = vmatprep.subr.mxu0 0.0
      %1873 = vmatpush1.msra.mxu0 0.0
      %1874 = vmatprep.subr.mxu0 0.0
      %1875 = vmatpush1.msra.mxu0 0.0
      %1876 = vmatprep.subr.mxu0 0.0
      %1877 = vmatpush1.msra.mxu0 0.0
      %1878 = vmatprep.subr.mxu0 0.0
      %1879 = vmatpush1.msra.mxu0 0.0
      %1880 = vmatprep.subr.mxu0 0.0
      %1881 = vmatpush1.msra.mxu0 0.0
      %1882 = vmatprep.subr.mxu0 0.0
      %1883 = vmatpush1.msra.mxu0 0.0
      %1884 = vmatprep.subr.mxu0 0.0
      %1885 = vmatpush1.msra.mxu0 0.0
      %1886 = vmatprep.subr.mxu0 0.0
      %1887 = vmatpush1.msra.mxu0 0.0
      %1888 = vmatprep.subr.mxu0 0.0
      %1889 = vmatpush1.msra.mxu0 0.0
      %1890 = vmatprep.subr.mxu0 0.0
      %1891 = vmatpush1.msra.mxu0 0.0
      %1892 = vmatprep.subr.mxu0 0.0
      %1893 = vmatpush1.msra.mxu0 0.0
      %1894 = vmatprep.subr.mxu0 0.0
      %1895 = vmatpush1.msra.mxu0 0.0
      %1896 = vmatprep.subr.mxu0 0.0
      %1897 = vmatpush1.msra.mxu0 0.0
      %1898 = vmatprep.subr.mxu0 0.0
      %1899 = vmatpush1.msra.mxu0 0.0
      %1900 = vmatprep.subr.mxu0 0.0
      %1901 = vmatpush1.msra.mxu0 0.0
      %1902 = vmatprep.subr.mxu0 0.0
      %1903 = vmatpush1.msra.mxu0 0.0
      %1904 = vmatprep.subr.mxu0 0.0
      %1905 = vmatpush1.msra.mxu0 0.0
      %1906 = vmatprep.subr.mxu0 0.0
      %1907 = vmatpush1.msra.mxu0 0.0
      %1908 = vmatprep.subr.mxu0 0.0
      %1909 = vmatpush1.msra.mxu0 0.0
      %1910 = vmatprep.subr.mxu0 0.0
      %1911 = vmatpush1.msra.mxu0 0.0
      %1912 = vmatprep.mubr.f32.mxu0 0.0
      %1913 = vmatmul.mubr.f32.gmra.mrb[0].mxu0 %v1748
      %v1914 = vpop.f32.mrb[0].mxu0
      %v1915 = vadd.f32 0.0, %v1914
      %v1916 = vpop.f32.mrb[0].mxu0
      %v1917 = vadd.f32 0.0, %v1916
      %1918 = vmatprep.mubr.f32.mxu0 0.0
      %1919 = vmatmul.mubr.f32.gmra.mrb[0].mxu0 %v1751
      %v1920 = vpop.f32.mrb[0].mxu0
      %v1921 = vadd.f32 0.0, %v1920
      %v1922 = vpop.f32.mrb[0].mxu0
      %v1923 = vadd.f32 0.0, %v1922
      %1924 = vmatprep.mubr.f32.mxu0 0.0
      %1925 = vmatmul.mubr.f32.gmra.mrb[0].mxu0 %v1754
      %v1926 = vpop.f32.mrb[0].mxu0
      %v1927 = vadd.f32 0.0, %v1926
      %v1928 = vpop.f32.mrb[0].mxu0
      %v1929 = vadd.f32 0.0, %v1928
      %1930 = vmatprep.mubr.f32.mxu0 0.0
      %1931 = vmatmul.mubr.f32.gmra.mrb[0].mxu0 %v1757
      %v1932 = vpop.f32.mrb[0].mxu0
      %v1933 = vadd.f32 0.0, %v1932
      %v1934 = vpop.f32.mrb[0].mxu0
      %v1935 = vadd.f32 0.0, %v1934
      %1936 = vdwg.mxu0
      %1937 = vmatprep.subr.mxu0 %v1552
      %1938 = vmatpush1.msra.mxu0 %v1551
      %1939 = vmatprep.subr.mxu0 %v1560
      %1940 = vmatpush1.msra.mxu0 %v1559
      %1941 = vmatprep.subr.mxu0 %v1568
      %1942 = vmatpush1.msra.mxu0 %v1567
      %1943 = vmatprep.subr.mxu0 %v1576
      %1944 = vmatpush1.msra.mxu0 %v1575
      %1945 = vmatprep.subr.mxu0 %v1683
      %1946 = vmatpush1.msra.mxu0 %v1682
      %1947 = vmatprep.subr.mxu0 %v1691
      %1948 = vmatpush1.msra.mxu0 %v1690
      %1949 = vmatprep.subr.mxu0 %v1699
      %1950 = vmatpush1.msra.mxu0 %v1698
      %1951 = vmatprep.subr.mxu0 %v1707
      %1952 = vmatpush1.msra.mxu0 %v1706
      %1953 = vmatprep.subr.mxu0 0.0
      %1954 = vmatpush1.msra.mxu0 0.0
      %1955 = vmatprep.subr.mxu0 0.0
      %1956 = vmatpush1.msra.mxu0 0.0
      %1957 = vmatprep.subr.mxu0 0.0
      %1958 = vmatpush1.msra.mxu0 0.0
      %1959 = vmatprep.subr.mxu0 0.0
      %1960 = vmatpush1.msra.mxu0 0.0
      %1961 = vmatprep.subr.mxu0 0.0
      %1962 = vmatpush1.msra.mxu0 0.0
      %1963 = vmatprep.subr.mxu0 0.0
      %1964 = vmatpush1.msra.mxu0 0.0
      %1965 = vmatprep.subr.mxu0 0.0
      %1966 = vmatpush1.msra.mxu0 0.0
      %1967 = vmatprep.subr.mxu0 0.0
      %1968 = vmatpush1.msra.mxu0 0.0
      %1969 = vmatprep.subr.mxu0 0.0
      %1970 = vmatpush1.msra.mxu0 0.0
      %1971 = vmatprep.subr.mxu0 0.0
      %1972 = vmatpush1.msra.mxu0 0.0
      %1973 = vmatprep.subr.mxu0 0.0
      %1974 = vmatpush1.msra.mxu0 0.0
      %1975 = vmatprep.subr.mxu0 0.0
      %1976 = vmatpush1.msra.mxu0 0.0
      %1977 = vmatprep.subr.mxu0 0.0
      %1978 = vmatpush1.msra.mxu0 0.0
      %1979 = vmatprep.subr.mxu0 0.0
      %1980 = vmatpush1.msra.mxu0 0.0
      %1981 = vmatprep.subr.mxu0 0.0
      %1982 = vmatpush1.msra.mxu0 0.0
      %1983 = vmatprep.subr.mxu0 0.0
      %1984 = vmatpush1.msra.mxu0 0.0
      %1985 = vmatprep.subr.mxu0 0.0
      %1986 = vmatpush1.msra.mxu0 0.0
      %1987 = vmatprep.subr.mxu0 0.0
      %1988 = vmatpush1.msra.mxu0 0.0
      %1989 = vmatprep.subr.mxu0 0.0
      %1990 = vmatpush1.msra.mxu0 0.0
      %1991 = vmatprep.subr.mxu0 0.0
      %1992 = vmatpush1.msra.mxu0 0.0
      %1993 = vmatprep.subr.mxu0 0.0
      %1994 = vmatpush1.msra.mxu0 0.0
      %1995 = vmatprep.subr.mxu0 0.0
      %1996 = vmatpush1.msra.mxu0 0.0
      %1997 = vmatprep.subr.mxu0 0.0
      %1998 = vmatpush1.msra.mxu0 0.0
      %1999 = vmatprep.subr.mxu0 0.0
      %2000 = vmatpush1.msra.mxu0 0.0
      %2001 = vmatprep.mubr.f32.mxu0 0.0
      %2002 = vmatmul.mubr.f32.gmra.mrb[0].mxu0 %v1748
      %v2003 = vpop.f32.mrb[0].mxu0
      %v2004 = vadd.f32 0.0, %v2003
      %v2005 = vpop.f32.mrb[0].mxu0
      %v2006 = vadd.f32 0.0, %v2005
      %2007 = vmatprep.mubr.f32.mxu0 0.0
      %2008 = vmatmul.mubr.f32.gmra.mrb[0].mxu0 %v1751
      %v2009 = vpop.f32.mrb[0].mxu0
      %v2010 = vadd.f32 0.0, %v2009
      %v2011 = vpop.f32.mrb[0].mxu0
      %v2012 = vadd.f32 0.0, %v2011
      %2013 = vmatprep.mubr.f32.mxu0 0.0
      %2014 = vmatmul.mubr.f32.gmra.mrb[0].mxu0 %v1754
      %v2015 = vpop.f32.mrb[0].mxu0
      %v2016 = vadd.f32 0.0, %v2015
      %v2017 = vpop.f32.mrb[0].mxu0
      %v2018 = vadd.f32 0.0, %v2017
      %2019 = vmatprep.mubr.f32.mxu0 0.0
      %2020 = vmatmul.mubr.f32.gmra.mrb[0].mxu0 %v1757
      %v2021 = vpop.f32.mrb[0].mxu0
      %v2022 = vadd.f32 0.0, %v2021
      %v2023 = vpop.f32.mrb[0].mxu0
      %v2024 = vadd.f32 0.0, %v2023
      %2025 = vdwg.mxu0
      %2026 = vmatprep.subr.mxu0 %v1554
      %2027 = vmatpush1.msra.mxu0 %v1553
      %2028 = vmatprep.subr.mxu0 %v1562
      %2029 = vmatpush1.msra.mxu0 %v1561
      %2030 = vmatprep.subr.mxu0 %v1570
      %2031 = vmatpush1.msra.mxu0 %v1569
      %2032 = vmatprep.subr.mxu0 %v1578
      %2033 = vmatpush1.msra.mxu0 %v1577
      %2034 = vmatprep.subr.mxu0 %v1685
      %2035 = vmatpush1.msra.mxu0 %v1684
      %2036 = vmatprep.subr.mxu0 %v1693
      %2037 = vmatpush1.msra.mxu0 %v1692
      %2038 = vmatprep.subr.mxu0 %v1701
      %2039 = vmatpush1.msra.mxu0 %v1700
      %2040 = vmatprep.subr.mxu0 %v1709
      %2041 = vmatpush1.msra.mxu0 %v1708
      %2042 = vmatprep.subr.mxu0 0.0
      %2043 = vmatpush1.msra.mxu0 0.0
      %2044 = vmatprep.subr.mxu0 0.0
      %2045 = vmatpush1.msra.mxu0 0.0
      %2046 = vmatprep.subr.mxu0 0.0
      %2047 = vmatpush1.msra.mxu0 0.0
      %2048 = vmatprep.subr.mxu0 0.0
      %2049 = vmatpush1.msra.mxu0 0.0
      %2050 = vmatprep.subr.mxu0 0.0
      %2051 = vmatpush1.msra.mxu0 0.0
      %2052 = vmatprep.subr.mxu0 0.0
      %2053 = vmatpush1.msra.mxu0 0.0
      %2054 = vmatprep.subr.mxu0 0.0
      %2055 = vmatpush1.msra.mxu0 0.0
      %2056 = vmatprep.subr.mxu0 0.0
      %2057 = vmatpush1.msra.mxu0 0.0
      %2058 = vmatprep.subr.mxu0 0.0
      %2059 = vmatpush1.msra.mxu0 0.0
      %2060 = vmatprep.subr.mxu0 0.0
      %2061 = vmatpush1.msra.mxu0 0.0
      %2062 = vmatprep.subr.mxu0 0.0
      %2063 = vmatpush1.msra.mxu0 0.0
      %2064 = vmatprep.subr.mxu0 0.0
      %2065 = vmatpush1.msra.mxu0 0.0
      %2066 = vmatprep.subr.mxu0 0.0
      %2067 = vmatpush1.msra.mxu0 0.0
      %2068 = vmatprep.subr.mxu0 0.0
      %2069 = vmatpush1.msra.mxu0 0.0
      %2070 = vmatprep.subr.mxu0 0.0
      %2071 = vmatpush1.msra.mxu0 0.0
      %2072 = vmatprep.subr.mxu0 0.0
      %2073 = vmatpush1.msra.mxu0 0.0
      %2074 = vmatprep.subr.mxu0 0.0
      %2075 = vmatpush1.msra.mxu0 0.0
      %2076 = vmatprep.subr.mxu0 0.0
      %2077 = vmatpush1.msra.mxu0 0.0
      %2078 = vmatprep.subr.mxu0 0.0
      %2079 = vmatpush1.msra.mxu0 0.0
      %2080 = vmatprep.subr.mxu0 0.0
      %2081 = vmatpush1.msra.mxu0 0.0
      %2082 = vmatprep.subr.mxu0 0.0
      %2083 = vmatpush1.msra.mxu0 0.0
      %2084 = vmatprep.subr.mxu0 0.0
      %2085 = vmatpush1.msra.mxu0 0.0
      %2086 = vmatprep.subr.mxu0 0.0
      %2087 = vmatpush1.msra.mxu0 0.0
      %2088 = vmatprep.subr.mxu0 0.0
      %2089 = vmatpush1.msra.mxu0 0.0
      %2090 = vmatprep.mubr.f32.mxu0 0.0
      %2091 = vmatmul.mubr.f32.gmra.mrb[0].mxu0 %v1748
      %v2092 = vpop.f32.mrb[0].mxu0
      %v2093 = vadd.f32 0.0, %v2092
      %v2094 = vpop.f32.mrb[0].mxu0
      %v2095 = vadd.f32 0.0, %v2094
      %2096 = vmatprep.mubr.f32.mxu0 0.0
      %2097 = vmatmul.mubr.f32.gmra.mrb[0].mxu0 %v1751
      %v2098 = vpop.f32.mrb[0].mxu0
      %v2099 = vadd.f32 0.0, %v2098
      %v2100 = vpop.f32.mrb[0].mxu0
      %v2101 = vadd.f32 0.0, %v2100
      %2102 = vmatprep.mubr.f32.mxu0 0.0
      %2103 = vmatmul.mubr.f32.gmra.mrb[0].mxu0 %v1754
      %v2104 = vpop.f32.mrb[0].mxu0
      %v2105 = vadd.f32 0.0, %v2104
      %v2106 = vpop.f32.mrb[0].mxu0
      %v2107 = vadd.f32 0.0, %v2106
      %2108 = vmatprep.mubr.f32.mxu0 0.0
      %2109 = vmatmul.mubr.f32.gmra.mrb[0].mxu0 %v1757
      %v2110 = vpop.f32.mrb[0].mxu0
      %v2111 = vadd.f32 0.0, %v2110
      %v2112 = vpop.f32.mrb[0].mxu0
      %v2113 = vadd.f32 0.0, %v2112
      %2114 = vdwg.mxu0
      %s2115 = scalar_lea.vmem %s3, 64
      %v2116 = vld [vmem:[%s2115] sm:$0xff]
      %v2117 = vld [vmem:[%s2115 + $0x8] sm:$0xff]
      %v2118 = vld [vmem:[%s2115 + $0x10] sm:$0xff]
      %v2119 = vld [vmem:[%s2115 + $0x18] sm:$0xff]
      %2121 = vset.pattern.permute.xlu0 0
      %2122 = vperm.xlu0 %2121, %v2116
      %v2123 = vpop.permute.xlu0 %2122
      %2126 = vset.pattern.permute.xlu0 0
      %2127 = vperm.xlu0 %2126, %v2117
      %v2128 = vpop.permute.xlu0 %2127
      %2131 = vset.pattern.permute.xlu0 0
      %2132 = vperm.xlu0 %2131, %v2118
      %v2133 = vpop.permute.xlu0 %2132
      %2136 = vset.pattern.permute.xlu0 0
      %2137 = vperm.xlu0 %2136, %v2119
      %v2138 = vpop.permute.xlu0 %2137
      %v2140 = vmul.f32 %v1826, %v2123
      %v2141 = vmul.f32 %v1828, %v2123
      %v2142 = vmul.f32 %v1915, %v2123
      %v2143 = vmul.f32 %v1917, %v2123
      %v2144 = vmul.f32 %v2004, %v2123
      %v2145 = vmul.f32 %v2006, %v2123
      %v2146 = vmul.f32 %v2093, %v2123
      %v2147 = vmul.f32 %v2095, %v2123
      %v2148 = vmul.f32 %v1832, %v2128
      %v2149 = vmul.f32 %v1834, %v2128
      %v2150 = vmul.f32 %v1921, %v2128
      %v2151 = vmul.f32 %v1923, %v2128
      %v2152 = vmul.f32 %v2010, %v2128
      %v2153 = vmul.f32 %v2012, %v2128
      %v2154 = vmul.f32 %v2099, %v2128
      %v2155 = vmul.f32 %v2101, %v2128
      %v2156 = vmul.f32 %v1838, %v2133
      %v2157 = vmul.f32 %v1840, %v2133
      %v2158 = vmul.f32 %v1927, %v2133
      %v2159 = vmul.f32 %v1929, %v2133
      %v2160 = vmul.f32 %v2016, %v2133
      %v2161 = vmul.f32 %v2018, %v2133
      %v2162 = vmul.f32 %v2105, %v2133
      %v2163 = vmul.f32 %v2107, %v2133
      %v2164 = vmul.f32 %v1844, %v2138
      %v2165 = vmul.f32 %v1846, %v2138
      %v2166 = vmul.f32 %v1933, %v2138
      %v2167 = vmul.f32 %v1935, %v2138
      %v2168 = vmul.f32 %v2022, %v2138
      %v2169 = vmul.f32 %v2024, %v2138
      %v2170 = vmul.f32 %v2111, %v2138
      %v2171 = vmul.f32 %v2113, %v2138
      %s2172 = scalar_lea.vmem %s4, 64
      %v2173 = vld [vmem:[%s2172] sm:$0xff]
      %v2174 = vld [vmem:[%s2172 + $0x8] sm:$0xff]
      %v2175 = vld [vmem:[%s2172 + $0x10] sm:$0xff]
      %v2176 = vld [vmem:[%s2172 + $0x18] sm:$0xff]
      %2178 = vset.pattern.permute.xlu0 0
      %2179 = vperm.xlu0 %2178, %v2173
      %v2180 = vpop.permute.xlu0 %2179
      %2183 = vset.pattern.permute.xlu0 0
      %2184 = vperm.xlu0 %2183, %v2174
      %v2185 = vpop.permute.xlu0 %2184
      %2188 = vset.pattern.permute.xlu0 0
      %2189 = vperm.xlu0 %2188, %v2175
      %v2190 = vpop.permute.xlu0 %2189
      %2193 = vset.pattern.permute.xlu0 0
      %2194 = vperm.xlu0 %2193, %v2176
      %v2195 = vpop.permute.xlu0 %2194
      %v2197 = vadd.f32 %v2140, %v2180
      %v2198 = vadd.f32 %v2141, %v2180
      %v2199 = vadd.f32 %v2142, %v2180
      %v2200 = vadd.f32 %v2143, %v2180
      %v2201 = vadd.f32 %v2144, %v2180
      %v2202 = vadd.f32 %v2145, %v2180
      %v2203 = vadd.f32 %v2146, %v2180
      %v2204 = vadd.f32 %v2147, %v2180
      %v2205 = vadd.f32 %v2148, %v2185
      %v2206 = vadd.f32 %v2149, %v2185
      %v2207 = vadd.f32 %v2150, %v2185
      %v2208 = vadd.f32 %v2151, %v2185
      %v2209 = vadd.f32 %v2152, %v2185
      %v2210 = vadd.f32 %v2153, %v2185
      %v2211 = vadd.f32 %v2154, %v2185
      %v2212 = vadd.f32 %v2155, %v2185
      %v2213 = vadd.f32 %v2156, %v2190
      %v2214 = vadd.f32 %v2157, %v2190
      %v2215 = vadd.f32 %v2158, %v2190
      %v2216 = vadd.f32 %v2159, %v2190
      %v2217 = vadd.f32 %v2160, %v2190
      %v2218 = vadd.f32 %v2161, %v2190
      %v2219 = vadd.f32 %v2162, %v2190
      %v2220 = vadd.f32 %v2163, %v2190
      %v2221 = vadd.f32 %v2164, %v2195
      %v2222 = vadd.f32 %v2165, %v2195
      %v2223 = vadd.f32 %v2166, %v2195
      %v2224 = vadd.f32 %v2167, %v2195
      %v2225 = vadd.f32 %v2168, %v2195
      %v2226 = vadd.f32 %v2169, %v2195
      %v2227 = vadd.f32 %v2170, %v2195
      %v2228 = vadd.f32 %v2171, %v2195
      %v2229 = vmax.f32 %v2197, 0.0
      %v2230 = vmax.f32 %v2198, 0.0
      %v2231 = vmax.f32 %v2199, 0.0
      %v2232 = vmax.f32 %v2200, 0.0
      %v2233 = vmax.f32 %v2201, 0.0
      %v2234 = vmax.f32 %v2202, 0.0
      %v2235 = vmax.f32 %v2203, 0.0
      %v2236 = vmax.f32 %v2204, 0.0
      %v2237 = vmax.f32 %v2205, 0.0
      %v2238 = vmax.f32 %v2206, 0.0
      %v2239 = vmax.f32 %v2207, 0.0
      %v2240 = vmax.f32 %v2208, 0.0
      %v2241 = vmax.f32 %v2209, 0.0
      %v2242 = vmax.f32 %v2210, 0.0
      %v2243 = vmax.f32 %v2211, 0.0
      %v2244 = vmax.f32 %v2212, 0.0
      %v2245 = vmax.f32 %v2213, 0.0
      %v2246 = vmax.f32 %v2214, 0.0
      %v2247 = vmax.f32 %v2215, 0.0
      %v2248 = vmax.f32 %v2216, 0.0
      %v2249 = vmax.f32 %v2217, 0.0
      %v2250 = vmax.f32 %v2218, 0.0
      %v2251 = vmax.f32 %v2219, 0.0
      %v2252 = vmax.f32 %v2220, 0.0
      %v2253 = vmax.f32 %v2221, 0.0
      %v2254 = vmax.f32 %v2222, 0.0
      %v2255 = vmax.f32 %v2223, 0.0
      %v2256 = vmax.f32 %v2224, 0.0
      %v2257 = vmax.f32 %v2225, 0.0
      %v2258 = vmax.f32 %v2226, 0.0
      %v2259 = vmax.f32 %v2227, 0.0
      %v2260 = vmax.f32 %v2228, 0.0
      %2293 = vrot.lane.b32.xlu0 %v2229, 124
      %v2294 = vpop.permute.xlu0 %2293
      %2295 = vrot.lane.b32.xlu0 %v2230, 124
      %v2296 = vpop.permute.xlu0 %2295
      %2297 = vrot.lane.b32.xlu0 %v2231, 124
      %v2298 = vpop.permute.xlu0 %2297
      %2299 = vrot.lane.b32.xlu0 %v2232, 124
      %v2300 = vpop.permute.xlu0 %2299
      %2301 = vrot.lane.b32.xlu0 %v2233, 124
      %v2302 = vpop.permute.xlu0 %2301
      %2303 = vrot.lane.b32.xlu0 %v2234, 124
      %v2304 = vpop.permute.xlu0 %2303
      %2305 = vrot.lane.b32.xlu0 %v2235, 124
      %v2306 = vpop.permute.xlu0 %2305
      %2307 = vrot.lane.b32.xlu0 %v2236, 124
      %v2308 = vpop.permute.xlu0 %2307
      %2309 = vrot.lane.b32.xlu0 0.0, 124
      %v2310 = vpop.permute.xlu0 %2309
      %2311 = vrot.lane.b32.xlu0 %v2237, 124
      %v2312 = vpop.permute.xlu0 %2311
      %2313 = vrot.lane.b32.xlu0 %v2238, 124
      %v2314 = vpop.permute.xlu0 %2313
      %2315 = vrot.lane.b32.xlu0 %v2239, 124
      %v2316 = vpop.permute.xlu0 %2315
      %2317 = vrot.lane.b32.xlu0 %v2240, 124
      %v2318 = vpop.permute.xlu0 %2317
      %2319 = vrot.lane.b32.xlu0 %v2241, 124
      %v2320 = vpop.permute.xlu0 %2319
      %2321 = vrot.lane.b32.xlu0 %v2242, 124
      %v2322 = vpop.permute.xlu0 %2321
      %2323 = vrot.lane.b32.xlu0 %v2243, 124
      %v2324 = vpop.permute.xlu0 %2323
      %2325 = vrot.lane.b32.xlu0 %v2244, 124
      %v2326 = vpop.permute.xlu0 %2325
      %2327 = vrot.lane.b32.xlu0 %v2245, 124
      %v2328 = vpop.permute.xlu0 %2327
      %2329 = vrot.lane.b32.xlu0 %v2246, 124
      %v2330 = vpop.permute.xlu0 %2329
      %2331 = vrot.lane.b32.xlu0 %v2247, 124
      %v2332 = vpop.permute.xlu0 %2331
      %2333 = vrot.lane.b32.xlu0 %v2248, 124
      %v2334 = vpop.permute.xlu0 %2333
      %2335 = vrot.lane.b32.xlu0 %v2249, 124
      %v2336 = vpop.permute.xlu0 %2335
      %2337 = vrot.lane.b32.xlu0 %v2250, 124
      %v2338 = vpop.permute.xlu0 %2337
      %2339 = vrot.lane.b32.xlu0 %v2251, 124
      %v2340 = vpop.permute.xlu0 %2339
      %2341 = vrot.lane.b32.xlu0 %v2252, 124
      %v2342 = vpop.permute.xlu0 %2341
      %2343 = vrot.lane.b32.xlu0 %v2253, 124
      %v2344 = vpop.permute.xlu0 %2343
      %2345 = vrot.lane.b32.xlu0 %v2254, 124
      %v2346 = vpop.permute.xlu0 %2345
      %2347 = vrot.lane.b32.xlu0 %v2255, 124
      %v2348 = vpop.permute.xlu0 %2347
      %2349 = vrot.lane.b32.xlu0 %v2256, 124
      %v2350 = vpop.permute.xlu0 %2349
      %2351 = vrot.lane.b32.xlu0 %v2257, 124
      %v2352 = vpop.permute.xlu0 %2351
      %2353 = vrot.lane.b32.xlu0 %v2258, 124
      %v2354 = vpop.permute.xlu0 %2353
      %2355 = vrot.lane.b32.xlu0 %v2259, 124
      %v2356 = vpop.permute.xlu0 %2355
      %2357 = vrot.lane.b32.xlu0 %v2260, 124
      %v2358 = vpop.permute.xlu0 %2357
      %vm2359 = vcmask 1014784
      %v2360 = vsel %vm2359, %v2294, %v2296
      %v2361 = vsel %vm2359, %v2296, %v2298
      %v2362 = vsel %vm2359, %v2298, %v2300
      %v2363 = vsel %vm2359, %v2300, %v2302
      %v2364 = vsel %vm2359, %v2302, %v2304
      %v2365 = vsel %vm2359, %v2304, %v2306
      %v2366 = vsel %vm2359, %v2306, %v2308
      %v2367 = vsel %vm2359, %v2308, %v2310
      %v2368 = vsel %vm2359, %v2312, %v2314
      %v2369 = vsel %vm2359, %v2314, %v2316
      %v2370 = vsel %vm2359, %v2316, %v2318
      %v2371 = vsel %vm2359, %v2318, %v2320
      %v2372 = vsel %vm2359, %v2320, %v2322
      %v2373 = vsel %vm2359, %v2322, %v2324
      %v2374 = vsel %vm2359, %v2324, %v2326
      %v2375 = vsel %vm2359, %v2326, %v2310
      %v2376 = vsel %vm2359, %v2328, %v2330
      %v2377 = vsel %vm2359, %v2330, %v2332
      %v2378 = vsel %vm2359, %v2332, %v2334
      %v2379 = vsel %vm2359, %v2334, %v2336
      %v2380 = vsel %vm2359, %v2336, %v2338
      %v2381 = vsel %vm2359, %v2338, %v2340
      %v2382 = vsel %vm2359, %v2340, %v2342
      %v2383 = vsel %vm2359, %v2342, %v2310
      %v2384 = vsel %vm2359, %v2344, %v2346
      %v2385 = vsel %vm2359, %v2346, %v2348
      %v2386 = vsel %vm2359, %v2348, %v2350
      %v2387 = vsel %vm2359, %v2350, %v2352
      %v2388 = vsel %vm2359, %v2352, %v2354
      %v2389 = vsel %vm2359, %v2354, %v2356
      %v2390 = vsel %vm2359, %v2356, %v2358
      %v2391 = vsel %vm2359, %v2358, %v2310
      %s2424 = scalar_lea.vmem %s2, 64
      %v2425 = vld [vmem:[%s2424] sm:$0xff]
      %v2426 = vld [vmem:[%s2424 + $0x8] sm:$0xff]
      %v2427 = vld [vmem:[%s2424 + $0x10] sm:$0xff]
      %v2428 = vld [vmem:[%s2424 + $0x18] sm:$0xff]
      %v2430 = vsel %vm1064, %v2425, 0
      %v2433 = vsel %vm1064, %v2426, 0
      %v2436 = vsel %vm1064, %v2427, 0
      %v2439 = vsel %vm1064, %v2428, 0
      %2441 = vmatprep.subr.mxu0 %v2230
      %2442 = vmatpush1.msra.mxu0 %v2229
      %2443 = vmatprep.subr.mxu0 %v2238
      %2444 = vmatpush1.msra.mxu0 %v2237
      %2445 = vmatprep.subr.mxu0 %v2246
      %2446 = vmatpush1.msra.mxu0 %v2245
      %2447 = vmatprep.subr.mxu0 %v2254
      %2448 = vmatpush1.msra.mxu0 %v2253
      %2449 = vmatprep.subr.mxu0 %v2361
      %2450 = vmatpush1.msra.mxu0 %v2360
      %2451 = vmatprep.subr.mxu0 %v2369
      %2452 = vmatpush1.msra.mxu0 %v2368
      %2453 = vmatprep.subr.mxu0 %v2377
      %2454 = vmatpush1.msra.mxu0 %v2376
      %2455 = vmatprep.subr.mxu0 %v2385
      %2456 = vmatpush1.msra.mxu0 %v2384
      %2457 = vmatprep.subr.mxu0 0.0
      %2458 = vmatpush1.msra.mxu0 0.0
      %2459 = vmatprep.subr.mxu0 0.0
      %2460 = vmatpush1.msra.mxu0 0.0
      %2461 = vmatprep.subr.mxu0 0.0
      %2462 = vmatpush1.msra.mxu0 0.0
      %2463 = vmatprep.subr.mxu0 0.0
      %2464 = vmatpush1.msra.mxu0 0.0
      %2465 = vmatprep.subr.mxu0 0.0
      %2466 = vmatpush1.msra.mxu0 0.0
      %2467 = vmatprep.subr.mxu0 0.0
      %2468 = vmatpush1.msra.mxu0 0.0
      %2469 = vmatprep.subr.mxu0 0.0
      %2470 = vmatpush1.msra.mxu0 0.0
      %2471 = vmatprep.subr.mxu0 0.0
      %2472 = vmatpush1.msra.mxu0 0.0
      %2473 = vmatprep.subr.mxu0 0.0
      %2474 = vmatpush1.msra.mxu0 0.0
      %2475 = vmatprep.subr.mxu0 0.0
      %2476 = vmatpush1.msra.mxu0 0.0
      %2477 = vmatprep.subr.mxu0 0.0
      %2478 = vmatpush1.msra.mxu0 0.0
      %2479 = vmatprep.subr.mxu0 0.0
      %2480 = vmatpush1.msra.mxu0 0.0
      %2481 = vmatprep.subr.mxu0 0.0
      %2482 = vmatpush1.msra.mxu0 0.0
      %2483 = vmatprep.subr.mxu0 0.0
      %2484 = vmatpush1.msra.mxu0 0.0
      %2485 = vmatprep.subr.mxu0 0.0
      %2486 = vmatpush1.msra.mxu0 0.0
      %2487 = vmatprep.subr.mxu0 0.0
      %2488 = vmatpush1.msra.mxu0 0.0
      %2489 = vmatprep.subr.mxu0 0.0
      %2490 = vmatpush1.msra.mxu0 0.0
      %2491 = vmatprep.subr.mxu0 0.0
      %2492 = vmatpush1.msra.mxu0 0.0
      %2493 = vmatprep.subr.mxu0 0.0
      %2494 = vmatpush1.msra.mxu0 0.0
      %2495 = vmatprep.subr.mxu0 0.0
      %2496 = vmatpush1.msra.mxu0 0.0
      %2497 = vmatprep.subr.mxu0 0.0
      %2498 = vmatpush1.msra.mxu0 0.0
      %2499 = vmatprep.subr.mxu0 0.0
      %2500 = vmatpush1.msra.mxu0 0.0
      %2501 = vmatprep.subr.mxu0 0.0
      %2502 = vmatpush1.msra.mxu0 0.0
      %2503 = vmatprep.subr.mxu0 0.0
      %2504 = vmatpush1.msra.mxu0 0.0
      %2505 = vmatprep.mubr.f32.mxu0 0.0
      %2506 = vmatmul.mubr.f32.gmra.mrb[0].mxu0 %v2430
      %v2507 = vpop.f32.mrb[0].mxu0
      %v2508 = vadd.f32 0.0, %v2507
      %v2509 = vpop.f32.mrb[0].mxu0
      %v2510 = vadd.f32 0.0, %v2509
      %2511 = vmatprep.mubr.f32.mxu0 0.0
      %2512 = vmatmul.mubr.f32.gmra.mrb[0].mxu0 %v2433
      %v2513 = vpop.f32.mrb[0].mxu0
      %v2514 = vadd.f32 0.0, %v2513
      %v2515 = vpop.f32.mrb[0].mxu0
      %v2516 = vadd.f32 0.0, %v2515
      %2517 = vmatprep.mubr.f32.mxu0 0.0
      %2518 = vmatmul.mubr.f32.gmra.mrb[0].mxu0 %v2436
      %v2519 = vpop.f32.mrb[0].mxu0
      %v2520 = vadd.f32 0.0, %v2519
      %v2521 = vpop.f32.mrb[0].mxu0
      %v2522 = vadd.f32 0.0, %v2521
      %2523 = vmatprep.mubr.f32.mxu0 0.0
      %2524 = vmatmul.mubr.f32.gmra.mrb[0].mxu0 %v2439
      %v2525 = vpop.f32.mrb[0].mxu0
      %v2526 = vadd.f32 0.0, %v2525
      %v2527 = vpop.f32.mrb[0].mxu0
      %v2528 = vadd.f32 0.0, %v2527
      %2529 = vdwg.mxu0
      %2530 = vmatprep.subr.mxu0 %v2232
      %2531 = vmatpush1.msra.mxu0 %v2231
      %2532 = vmatprep.subr.mxu0 %v2240
      %2533 = vmatpush1.msra.mxu0 %v2239
      %2534 = vmatprep.subr.mxu0 %v2248
      %2535 = vmatpush1.msra.mxu0 %v2247
      %2536 = vmatprep.subr.mxu0 %v2256
      %2537 = vmatpush1.msra.mxu0 %v2255
      %2538 = vmatprep.subr.mxu0 %v2363
      %2539 = vmatpush1.msra.mxu0 %v2362
      %2540 = vmatprep.subr.mxu0 %v2371
      %2541 = vmatpush1.msra.mxu0 %v2370
      %2542 = vmatprep.subr.mxu0 %v2379
      %2543 = vmatpush1.msra.mxu0 %v2378
      %2544 = vmatprep.subr.mxu0 %v2387
      %2545 = vmatpush1.msra.mxu0 %v2386
      %2546 = vmatprep.subr.mxu0 0.0
      %2547 = vmatpush1.msra.mxu0 0.0
      %2548 = vmatprep.subr.mxu0 0.0
      %2549 = vmatpush1.msra.mxu0 0.0
      %2550 = vmatprep.subr.mxu0 0.0
      %2551 = vmatpush1.msra.mxu0 0.0
      %2552 = vmatprep.subr.mxu0 0.0
      %2553 = vmatpush1.msra.mxu0 0.0
      %2554 = vmatprep.subr.mxu0 0.0
      %2555 = vmatpush1.msra.mxu0 0.0
      %2556 = vmatprep.subr.mxu0 0.0
      %2557 = vmatpush1.msra.mxu0 0.0
      %2558 = vmatprep.subr.mxu0 0.0
      %2559 = vmatpush1.msra.mxu0 0.0
      %2560 = vmatprep.subr.mxu0 0.0
      %2561 = vmatpush1.msra.mxu0 0.0
      %2562 = vmatprep.subr.mxu0 0.0
      %2563 = vmatpush1.msra.mxu0 0.0
      %2564 = vmatprep.subr.mxu0 0.0
      %2565 = vmatpush1.msra.mxu0 0.0
      %2566 = vmatprep.subr.mxu0 0.0
      %2567 = vmatpush1.msra.mxu0 0.0
      %2568 = vmatprep.subr.mxu0 0.0
      %2569 = vmatpush1.msra.mxu0 0.0
      %2570 = vmatprep.subr.mxu0 0.0
      %2571 = vmatpush1.msra.mxu0 0.0
      %2572 = vmatprep.subr.mxu0 0.0
      %2573 = vmatpush1.msra.mxu0 0.0
      %2574 = vmatprep.subr.mxu0 0.0
      %2575 = vmatpush1.msra.mxu0 0.0
      %2576 = vmatprep.subr.mxu0 0.0
      %2577 = vmatpush1.msra.mxu0 0.0
      %2578 = vmatprep.subr.mxu0 0.0
      %2579 = vmatpush1.msra.mxu0 0.0
      %2580 = vmatprep.subr.mxu0 0.0
      %2581 = vmatpush1.msra.mxu0 0.0
      %2582 = vmatprep.subr.mxu0 0.0
      %2583 = vmatpush1.msra.mxu0 0.0
      %2584 = vmatprep.subr.mxu0 0.0
      %2585 = vmatpush1.msra.mxu0 0.0
      %2586 = vmatprep.subr.mxu0 0.0
      %2587 = vmatpush1.msra.mxu0 0.0
      %2588 = vmatprep.subr.mxu0 0.0
      %2589 = vmatpush1.msra.mxu0 0.0
      %2590 = vmatprep.subr.mxu0 0.0
      %2591 = vmatpush1.msra.mxu0 0.0
      %2592 = vmatprep.subr.mxu0 0.0
      %2593 = vmatpush1.msra.mxu0 0.0
      %2594 = vmatprep.mubr.f32.mxu0 0.0
      %2595 = vmatmul.mubr.f32.gmra.mrb[0].mxu0 %v2430
      %v2596 = vpop.f32.mrb[0].mxu0
      %v2597 = vadd.f32 0.0, %v2596
      %v2598 = vpop.f32.mrb[0].mxu0
      %v2599 = vadd.f32 0.0, %v2598
      %2600 = vmatprep.mubr.f32.mxu0 0.0
      %2601 = vmatmul.mubr.f32.gmra.mrb[0].mxu0 %v2433
      %v2602 = vpop.f32.mrb[0].mxu0
      %v2603 = vadd.f32 0.0, %v2602
      %v2604 = vpop.f32.mrb[0].mxu0
      %v2605 = vadd.f32 0.0, %v2604
      %2606 = vmatprep.mubr.f32.mxu0 0.0
      %2607 = vmatmul.mubr.f32.gmra.mrb[0].mxu0 %v2436
      %v2608 = vpop.f32.mrb[0].mxu0
      %v2609 = vadd.f32 0.0, %v2608
      %v2610 = vpop.f32.mrb[0].mxu0
      %v2611 = vadd.f32 0.0, %v2610
      %2612 = vmatprep.mubr.f32.mxu0 0.0
      %2613 = vmatmul.mubr.f32.gmra.mrb[0].mxu0 %v2439
      %v2614 = vpop.f32.mrb[0].mxu0
      %v2615 = vadd.f32 0.0, %v2614
      %v2616 = vpop.f32.mrb[0].mxu0
      %v2617 = vadd.f32 0.0, %v2616
      %2618 = vdwg.mxu0
      %2619 = vmatprep.subr.mxu0 %v2234
      %2620 = vmatpush1.msra.mxu0 %v2233
      %2621 = vmatprep.subr.mxu0 %v2242
      %2622 = vmatpush1.msra.mxu0 %v2241
      %2623 = vmatprep.subr.mxu0 %v2250
      %2624 = vmatpush1.msra.mxu0 %v2249
      %2625 = vmatprep.subr.mxu0 %v2258
      %2626 = vmatpush1.msra.mxu0 %v2257
      %2627 = vmatprep.subr.mxu0 %v2365
      %2628 = vmatpush1.msra.mxu0 %v2364
      %2629 = vmatprep.subr.mxu0 %v2373
      %2630 = vmatpush1.msra.mxu0 %v2372
      %2631 = vmatprep.subr.mxu0 %v2381
      %2632 = vmatpush1.msra.mxu0 %v2380
      %2633 = vmatprep.subr.mxu0 %v2389
      %2634 = vmatpush1.msra.mxu0 %v2388
      %2635 = vmatprep.subr.mxu0 0.0
      %2636 = vmatpush1.msra.mxu0 0.0
      %2637 = vmatprep.subr.mxu0 0.0
      %2638 = vmatpush1.msra.mxu0 0.0
      %2639 = vmatprep.subr.mxu0 0.0
      %2640 = vmatpush1.msra.mxu0 0.0
      %2641 = vmatprep.subr.mxu0 0.0
      %2642 = vmatpush1.msra.mxu0 0.0
      %2643 = vmatprep.subr.mxu0 0.0
      %2644 = vmatpush1.msra.mxu0 0.0
      %2645 = vmatprep.subr.mxu0 0.0
      %2646 = vmatpush1.msra.mxu0 0.0
      %2647 = vmatprep.subr.mxu0 0.0
      %2648 = vmatpush1.msra.mxu0 0.0
      %2649 = vmatprep.subr.mxu0 0.0
      %2650 = vmatpush1.msra.mxu0 0.0
      %2651 = vmatprep.subr.mxu0 0.0
      %2652 = vmatpush1.msra.mxu0 0.0
      %2653 = vmatprep.subr.mxu0 0.0
      %2654 = vmatpush1.msra.mxu0 0.0
      %2655 = vmatprep.subr.mxu0 0.0
      %2656 = vmatpush1.msra.mxu0 0.0
      %2657 = vmatprep.subr.mxu0 0.0
      %2658 = vmatpush1.msra.mxu0 0.0
      %2659 = vmatprep.subr.mxu0 0.0
      %2660 = vmatpush1.msra.mxu0 0.0
      %2661 = vmatprep.subr.mxu0 0.0
      %2662 = vmatpush1.msra.mxu0 0.0
      %2663 = vmatprep.subr.mxu0 0.0
      %2664 = vmatpush1.msra.mxu0 0.0
      %2665 = vmatprep.subr.mxu0 0.0
      %2666 = vmatpush1.msra.mxu0 0.0
      %2667 = vmatprep.subr.mxu0 0.0
      %2668 = vmatpush1.msra.mxu0 0.0
      %2669 = vmatprep.subr.mxu0 0.0
      %2670 = vmatpush1.msra.mxu0 0.0
      %2671 = vmatprep.subr.mxu0 0.0
      %2672 = vmatpush1.msra.mxu0 0.0
      %2673 = vmatprep.subr.mxu0 0.0
      %2674 = vmatpush1.msra.mxu0 0.0
      %2675 = vmatprep.subr.mxu0 0.0
      %2676 = vmatpush1.msra.mxu0 0.0
      %2677 = vmatprep.subr.mxu0 0.0
      %2678 = vmatpush1.msra.mxu0 0.0
      %2679 = vmatprep.subr.mxu0 0.0
      %2680 = vmatpush1.msra.mxu0 0.0
      %2681 = vmatprep.subr.mxu0 0.0
      %2682 = vmatpush1.msra.mxu0 0.0
      %2683 = vmatprep.mubr.f32.mxu0 0.0
      %2684 = vmatmul.mubr.f32.gmra.mrb[0].mxu0 %v2430
      %v2685 = vpop.f32.mrb[0].mxu0
      %v2686 = vadd.f32 0.0, %v2685
      %v2687 = vpop.f32.mrb[0].mxu0
      %v2688 = vadd.f32 0.0, %v2687
      %2689 = vmatprep.mubr.f32.mxu0 0.0
      %2690 = vmatmul.mubr.f32.gmra.mrb[0].mxu0 %v2433
      %v2691 = vpop.f32.mrb[0].mxu0
      %v2692 = vadd.f32 0.0, %v2691
      %v2693 = vpop.f32.mrb[0].mxu0
      %v2694 = vadd.f32 0.0, %v2693
      %2695 = vmatprep.mubr.f32.mxu0 0.0
      %2696 = vmatmul.mubr.f32.gmra.mrb[0].mxu0 %v2436
      %v2697 = vpop.f32.mrb[0].mxu0
      %v2698 = vadd.f32 0.0, %v2697
      %v2699 = vpop.f32.mrb[0].mxu0
      %v2700 = vadd.f32 0.0, %v2699
      %2701 = vmatprep.mubr.f32.mxu0 0.0
      %2702 = vmatmul.mubr.f32.gmra.mrb[0].mxu0 %v2439
      %v2703 = vpop.f32.mrb[0].mxu0
      %v2704 = vadd.f32 0.0, %v2703
      %v2705 = vpop.f32.mrb[0].mxu0
      %v2706 = vadd.f32 0.0, %v2705
      %2707 = vdwg.mxu0
      %2708 = vmatprep.subr.mxu0 %v2236
      %2709 = vmatpush1.msra.mxu0 %v2235
      %2710 = vmatprep.subr.mxu0 %v2244
      %2711 = vmatpush1.msra.mxu0 %v2243
      %2712 = vmatprep.subr.mxu0 %v2252
      %2713 = vmatpush1.msra.mxu0 %v2251
      %2714 = vmatprep.subr.mxu0 %v2260
      %2715 = vmatpush1.msra.mxu0 %v2259
      %2716 = vmatprep.subr.mxu0 %v2367
      %2717 = vmatpush1.msra.mxu0 %v2366
      %2718 = vmatprep.subr.mxu0 %v2375
      %2719 = vmatpush1.msra.mxu0 %v2374
      %2720 = vmatprep.subr.mxu0 %v2383
      %2721 = vmatpush1.msra.mxu0 %v2382
      %2722 = vmatprep.subr.mxu0 %v2391
      %2723 = vmatpush1.msra.mxu0 %v2390
      %2724 = vmatprep.subr.mxu0 0.0
      %2725 = vmatpush1.msra.mxu0 0.0
      %2726 = vmatprep.subr.mxu0 0.0
      %2727 = vmatpush1.msra.mxu0 0.0
      %2728 = vmatprep.subr.mxu0 0.0
      %2729 = vmatpush1.msra.mxu0 0.0
      %2730 = vmatprep.subr.mxu0 0.0
      %2731 = vmatpush1.msra.mxu0 0.0
      %2732 = vmatprep.subr.mxu0 0.0
      %2733 = vmatpush1.msra.mxu0 0.0
      %2734 = vmatprep.subr.mxu0 0.0
      %2735 = vmatpush1.msra.mxu0 0.0
      %2736 = vmatprep.subr.mxu0 0.0
      %2737 = vmatpush1.msra.mxu0 0.0
      %2738 = vmatprep.subr.mxu0 0.0
      %2739 = vmatpush1.msra.mxu0 0.0
      %2740 = vmatprep.subr.mxu0 0.0
      %2741 = vmatpush1.msra.mxu0 0.0
      %2742 = vmatprep.subr.mxu0 0.0
      %2743 = vmatpush1.msra.mxu0 0.0
      %2744 = vmatprep.subr.mxu0 0.0
      %2745 = vmatpush1.msra.mxu0 0.0
      %2746 = vmatprep.subr.mxu0 0.0
      %2747 = vmatpush1.msra.mxu0 0.0
      %2748 = vmatprep.subr.mxu0 0.0
      %2749 = vmatpush1.msra.mxu0 0.0
      %2750 = vmatprep.subr.mxu0 0.0
      %2751 = vmatpush1.msra.mxu0 0.0
      %2752 = vmatprep.subr.mxu0 0.0
      %2753 = vmatpush1.msra.mxu0 0.0
      %2754 = vmatprep.subr.mxu0 0.0
      %2755 = vmatpush1.msra.mxu0 0.0
      %2756 = vmatprep.subr.mxu0 0.0
      %2757 = vmatpush1.msra.mxu0 0.0
      %2758 = vmatprep.subr.mxu0 0.0
      %2759 = vmatpush1.msra.mxu0 0.0
      %2760 = vmatprep.subr.mxu0 0.0
      %2761 = vmatpush1.msra.mxu0 0.0
      %2762 = vmatprep.subr.mxu0 0.0
      %2763 = vmatpush1.msra.mxu0 0.0
      %2764 = vmatprep.subr.mxu0 0.0
      %2765 = vmatpush1.msra.mxu0 0.0
      %2766 = vmatprep.subr.mxu0 0.0
      %2767 = vmatpush1.msra.mxu0 0.0
      %2768 = vmatprep.subr.mxu0 0.0
      %2769 = vmatpush1.msra.mxu0 0.0
      %2770 = vmatprep.subr.mxu0 0.0
      %2771 = vmatpush1.msra.mxu0 0.0
      %2772 = vmatprep.mubr.f32.mxu0 0.0
      %2773 = vmatmul.mubr.f32.gmra.mrb[0].mxu0 %v2430
      %v2774 = vpop.f32.mrb[0].mxu0
      %v2775 = vadd.f32 0.0, %v2774
      %v2776 = vpop.f32.mrb[0].mxu0
      %v2777 = vadd.f32 0.0, %v2776
      %2778 = vmatprep.mubr.f32.mxu0 0.0
      %2779 = vmatmul.mubr.f32.gmra.mrb[0].mxu0 %v2433
      %v2780 = vpop.f32.mrb[0].mxu0
      %v2781 = vadd.f32 0.0, %v2780
      %v2782 = vpop.f32.mrb[0].mxu0
      %v2783 = vadd.f32 0.0, %v2782
      %2784 = vmatprep.mubr.f32.mxu0 0.0
      %2785 = vmatmul.mubr.f32.gmra.mrb[0].mxu0 %v2436
      %v2786 = vpop.f32.mrb[0].mxu0
      %v2787 = vadd.f32 0.0, %v2786
      %v2788 = vpop.f32.mrb[0].mxu0
      %v2789 = vadd.f32 0.0, %v2788
      %2790 = vmatprep.mubr.f32.mxu0 0.0
      %2791 = vmatmul.mubr.f32.gmra.mrb[0].mxu0 %v2439
      %v2792 = vpop.f32.mrb[0].mxu0
      %v2793 = vadd.f32 0.0, %v2792
      %v2794 = vpop.f32.mrb[0].mxu0
      %v2795 = vadd.f32 0.0, %v2794
      %2796 = vdwg.mxu0
      %s2797 = scalar_lea.vmem %s3, 96
      %v2798 = vld [vmem:[%s2797] sm:$0xff]
      %v2799 = vld [vmem:[%s2797 + $0x8] sm:$0xff]
      %v2800 = vld [vmem:[%s2797 + $0x10] sm:$0xff]
      %v2801 = vld [vmem:[%s2797 + $0x18] sm:$0xff]
      %2803 = vset.pattern.permute.xlu0 0
      %2804 = vperm.xlu0 %2803, %v2798
      %v2805 = vpop.permute.xlu0 %2804
      %2808 = vset.pattern.permute.xlu0 0
      %2809 = vperm.xlu0 %2808, %v2799
      %v2810 = vpop.permute.xlu0 %2809
      %2813 = vset.pattern.permute.xlu0 0
      %2814 = vperm.xlu0 %2813, %v2800
      %v2815 = vpop.permute.xlu0 %2814
      %2818 = vset.pattern.permute.xlu0 0
      %2819 = vperm.xlu0 %2818, %v2801
      %v2820 = vpop.permute.xlu0 %2819
      %v2822 = vmul.f32 %v2508, %v2805
      %v2823 = vmul.f32 %v2510, %v2805
      %v2824 = vmul.f32 %v2597, %v2805
      %v2825 = vmul.f32 %v2599, %v2805
      %v2826 = vmul.f32 %v2686, %v2805
      %v2827 = vmul.f32 %v2688, %v2805
      %v2828 = vmul.f32 %v2775, %v2805
      %v2829 = vmul.f32 %v2777, %v2805
      %v2830 = vmul.f32 %v2514, %v2810
      %v2831 = vmul.f32 %v2516, %v2810
      %v2832 = vmul.f32 %v2603, %v2810
      %v2833 = vmul.f32 %v2605, %v2810
      %v2834 = vmul.f32 %v2692, %v2810
      %v2835 = vmul.f32 %v2694, %v2810
      %v2836 = vmul.f32 %v2781, %v2810
      %v2837 = vmul.f32 %v2783, %v2810
      %v2838 = vmul.f32 %v2520, %v2815
      %v2839 = vmul.f32 %v2522, %v2815
      %v2840 = vmul.f32 %v2609, %v2815
      %v2841 = vmul.f32 %v2611, %v2815
      %v2842 = vmul.f32 %v2698, %v2815
      %v2843 = vmul.f32 %v2700, %v2815
      %v2844 = vmul.f32 %v2787, %v2815
      %v2845 = vmul.f32 %v2789, %v2815
      %v2846 = vmul.f32 %v2526, %v2820
      %v2847 = vmul.f32 %v2528, %v2820
      %v2848 = vmul.f32 %v2615, %v2820
      %v2849 = vmul.f32 %v2617, %v2820
      %v2850 = vmul.f32 %v2704, %v2820
      %v2851 = vmul.f32 %v2706, %v2820
      %v2852 = vmul.f32 %v2793, %v2820
      %v2853 = vmul.f32 %v2795, %v2820
      %s2854 = scalar_lea.vmem %s4, 96
      %v2855 = vld [vmem:[%s2854] sm:$0xff]
      %v2856 = vld [vmem:[%s2854 + $0x8] sm:$0xff]
      %v2857 = vld [vmem:[%s2854 + $0x10] sm:$0xff]
      %v2858 = vld [vmem:[%s2854 + $0x18] sm:$0xff]
      %2860 = vset.pattern.permute.xlu0 0
      %2861 = vperm.xlu0 %2860, %v2855
      %v2862 = vpop.permute.xlu0 %2861
      %2865 = vset.pattern.permute.xlu0 0
      %2866 = vperm.xlu0 %2865, %v2856
      %v2867 = vpop.permute.xlu0 %2866
      %2870 = vset.pattern.permute.xlu0 0
      %2871 = vperm.xlu0 %2870, %v2857
      %v2872 = vpop.permute.xlu0 %2871
      %2875 = vset.pattern.permute.xlu0 0
      %2876 = vperm.xlu0 %2875, %v2858
      %v2877 = vpop.permute.xlu0 %2876
      %v2879 = vadd.f32 %v2822, %v2862
      %v2880 = vadd.f32 %v2823, %v2862
      %v2881 = vadd.f32 %v2824, %v2862
      %v2882 = vadd.f32 %v2825, %v2862
      %v2883 = vadd.f32 %v2826, %v2862
      %v2884 = vadd.f32 %v2827, %v2862
      %v2885 = vadd.f32 %v2828, %v2862
      %v2886 = vadd.f32 %v2829, %v2862
      %v2887 = vadd.f32 %v2830, %v2867
      %v2888 = vadd.f32 %v2831, %v2867
      %v2889 = vadd.f32 %v2832, %v2867
      %v2890 = vadd.f32 %v2833, %v2867
      %v2891 = vadd.f32 %v2834, %v2867
      %v2892 = vadd.f32 %v2835, %v2867
      %v2893 = vadd.f32 %v2836, %v2867
      %v2894 = vadd.f32 %v2837, %v2867
      %v2895 = vadd.f32 %v2838, %v2872
      %v2896 = vadd.f32 %v2839, %v2872
      %v2897 = vadd.f32 %v2840, %v2872
      %v2898 = vadd.f32 %v2841, %v2872
      %v2899 = vadd.f32 %v2842, %v2872
      %v2900 = vadd.f32 %v2843, %v2872
      %v2901 = vadd.f32 %v2844, %v2872
      %v2902 = vadd.f32 %v2845, %v2872
      %v2903 = vadd.f32 %v2846, %v2877
      %v2904 = vadd.f32 %v2847, %v2877
      %v2905 = vadd.f32 %v2848, %v2877
      %v2906 = vadd.f32 %v2849, %v2877
      %v2907 = vadd.f32 %v2850, %v2877
      %v2908 = vadd.f32 %v2851, %v2877
      %v2909 = vadd.f32 %v2852, %v2877
      %v2910 = vadd.f32 %v2853, %v2877
      %v2911 = vmax.f32 %v2879, 0.0
      %v2912 = vmax.f32 %v2880, 0.0
      %v2913 = vmax.f32 %v2881, 0.0
      %v2914 = vmax.f32 %v2882, 0.0
      %v2915 = vmax.f32 %v2883, 0.0
      %v2916 = vmax.f32 %v2884, 0.0
      %v2917 = vmax.f32 %v2885, 0.0
      %v2918 = vmax.f32 %v2886, 0.0
      %v2919 = vmax.f32 %v2887, 0.0
      %v2920 = vmax.f32 %v2888, 0.0
      %v2921 = vmax.f32 %v2889, 0.0
      %v2922 = vmax.f32 %v2890, 0.0
      %v2923 = vmax.f32 %v2891, 0.0
      %v2924 = vmax.f32 %v2892, 0.0
      %v2925 = vmax.f32 %v2893, 0.0
      %v2926 = vmax.f32 %v2894, 0.0
      %v2927 = vmax.f32 %v2895, 0.0
      %v2928 = vmax.f32 %v2896, 0.0
      %v2929 = vmax.f32 %v2897, 0.0
      %v2930 = vmax.f32 %v2898, 0.0
      %v2931 = vmax.f32 %v2899, 0.0
      %v2932 = vmax.f32 %v2900, 0.0
      %v2933 = vmax.f32 %v2901, 0.0
      %v2934 = vmax.f32 %v2902, 0.0
      %v2935 = vmax.f32 %v2903, 0.0
      %v2936 = vmax.f32 %v2904, 0.0
      %v2937 = vmax.f32 %v2905, 0.0
      %v2938 = vmax.f32 %v2906, 0.0
      %v2939 = vmax.f32 %v2907, 0.0
      %v2940 = vmax.f32 %v2908, 0.0
      %v2941 = vmax.f32 %v2909, 0.0
      %v2942 = vmax.f32 %v2910, 0.0
      %2975 = vrot.lane.b32.xlu0 %v2911, 120
      %v2976 = vpop.permute.xlu0 %2975
      %2977 = vrot.lane.b32.xlu0 %v2912, 120
      %v2978 = vpop.permute.xlu0 %2977
      %2979 = vrot.lane.b32.xlu0 %v2913, 120
      %v2980 = vpop.permute.xlu0 %2979
      %2981 = vrot.lane.b32.xlu0 %v2914, 120
      %v2982 = vpop.permute.xlu0 %2981
      %2983 = vrot.lane.b32.xlu0 %v2915, 120
      %v2984 = vpop.permute.xlu0 %2983
      %2985 = vrot.lane.b32.xlu0 %v2916, 120
      %v2986 = vpop.permute.xlu0 %2985
      %2987 = vrot.lane.b32.xlu0 %v2917, 120
      %v2988 = vpop.permute.xlu0 %2987
      %2989 = vrot.lane.b32.xlu0 %v2918, 120
      %v2990 = vpop.permute.xlu0 %2989
      %2991 = vrot.lane.b32.xlu0 0.0, 120
      %v2992 = vpop.permute.xlu0 %2991
      %2993 = vrot.lane.b32.xlu0 %v2919, 120
      %v2994 = vpop.permute.xlu0 %2993
      %2995 = vrot.lane.b32.xlu0 %v2920, 120
      %v2996 = vpop.permute.xlu0 %2995
      %2997 = vrot.lane.b32.xlu0 %v2921, 120
      %v2998 = vpop.permute.xlu0 %2997
      %2999 = vrot.lane.b32.xlu0 %v2922, 120
      %v3000 = vpop.permute.xlu0 %2999
      %3001 = vrot.lane.b32.xlu0 %v2923, 120
      %v3002 = vpop.permute.xlu0 %3001
      %3003 = vrot.lane.b32.xlu0 %v2924, 120
      %v3004 = vpop.permute.xlu0 %3003
      %3005 = vrot.lane.b32.xlu0 %v2925, 120
      %v3006 = vpop.permute.xlu0 %3005
      %3007 = vrot.lane.b32.xlu0 %v2926, 120
      %v3008 = vpop.permute.xlu0 %3007
      %3009 = vrot.lane.b32.xlu0 %v2927, 120
      %v3010 = vpop.permute.xlu0 %3009
      %3011 = vrot.lane.b32.xlu0 %v2928, 120
      %v3012 = vpop.permute.xlu0 %3011
      %3013 = vrot.lane.b32.xlu0 %v2929, 120
      %v3014 = vpop.permute.xlu0 %3013
      %3015 = vrot.lane.b32.xlu0 %v2930, 120
      %v3016 = vpop.permute.xlu0 %3015
      %3017 = vrot.lane.b32.xlu0 %v2931, 120
      %v3018 = vpop.permute.xlu0 %3017
      %3019 = vrot.lane.b32.xlu0 %v2932, 120
      %v3020 = vpop.permute.xlu0 %3019
      %3021 = vrot.lane.b32.xlu0 %v2933, 120
      %v3022 = vpop.permute.xlu0 %3021
      %3023 = vrot.lane.b32.xlu0 %v2934, 120
      %v3024 = vpop.permute.xlu0 %3023
      %3025 = vrot.lane.b32.xlu0 %v2935, 120
      %v3026 = vpop.permute.xlu0 %3025
      %3027 = vrot.lane.b32.xlu0 %v2936, 120
      %v3028 = vpop.permute.xlu0 %3027
      %3029 = vrot.lane.b32.xlu0 %v2937, 120
      %v3030 = vpop.permute.xlu0 %3029
      %3031 = vrot.lane.b32.xlu0 %v2938, 120
      %v3032 = vpop.permute.xlu0 %3031
      %3033 = vrot.lane.b32.xlu0 %v2939, 120
      %v3034 = vpop.permute.xlu0 %3033
      %3035 = vrot.lane.b32.xlu0 %v2940, 120
      %v3036 = vpop.permute.xlu0 %3035
      %3037 = vrot.lane.b32.xlu0 %v2941, 120
      %v3038 = vpop.permute.xlu0 %3037
      %3039 = vrot.lane.b32.xlu0 %v2942, 120
      %v3040 = vpop.permute.xlu0 %3039
      %vm3041 = vcmask 982016
      %v3042 = vsel %vm3041, %v2976, %v2978
      %v3043 = vsel %vm3041, %v2978, %v2980
      %v3044 = vsel %vm3041, %v2980, %v2982
      %v3045 = vsel %vm3041, %v2982, %v2984
      %v3046 = vsel %vm3041, %v2984, %v2986
      %v3047 = vsel %vm3041, %v2986, %v2988
      %v3048 = vsel %vm3041, %v2988, %v2990
      %v3049 = vsel %vm3041, %v2990, %v2992
      %v3050 = vsel %vm3041, %v2994, %v2996
      %v3051 = vsel %vm3041, %v2996, %v2998
      %v3052 = vsel %vm3041, %v2998, %v3000
      %v3053 = vsel %vm3041, %v3000, %v3002
      %v3054 = vsel %vm3041, %v3002, %v3004
      %v3055 = vsel %vm3041, %v3004, %v3006
      %v3056 = vsel %vm3041, %v3006, %v3008
      %v3057 = vsel %vm3041, %v3008, %v2992
      %v3058 = vsel %vm3041, %v3010, %v3012
      %v3059 = vsel %vm3041, %v3012, %v3014
      %v3060 = vsel %vm3041, %v3014, %v3016
      %v3061 = vsel %vm3041, %v3016, %v3018
      %v3062 = vsel %vm3041, %v3018, %v3020
      %v3063 = vsel %vm3041, %v3020, %v3022
      %v3064 = vsel %vm3041, %v3022, %v3024
      %v3065 = vsel %vm3041, %v3024, %v2992
      %v3066 = vsel %vm3041, %v3026, %v3028
      %v3067 = vsel %vm3041, %v3028, %v3030
      %v3068 = vsel %vm3041, %v3030, %v3032
      %v3069 = vsel %vm3041, %v3032, %v3034
      %v3070 = vsel %vm3041, %v3034, %v3036
      %v3071 = vsel %vm3041, %v3036, %v3038
      %v3072 = vsel %vm3041, %v3038, %v3040
      %v3073 = vsel %vm3041, %v3040, %v2992
      %s3106 = scalar_lea.vmem %s2, 96
      %v3107 = vld [vmem:[%s3106] sm:$0xff]
      %v3108 = vld [vmem:[%s3106 + $0x8] sm:$0xff]
      %v3109 = vld [vmem:[%s3106 + $0x10] sm:$0xff]
      %v3110 = vld [vmem:[%s3106 + $0x18] sm:$0xff]
      %v3112 = vsel %vm1064, %v3107, 0
      %v3115 = vsel %vm1064, %v3108, 0
      %v3118 = vsel %vm1064, %v3109, 0
      %v3121 = vsel %vm1064, %v3110, 0
      %3123 = vmatprep.subr.mxu0 %v2912
      %3124 = vmatpush1.msra.mxu0 %v2911
      %3125 = vmatprep.subr.mxu0 %v2920
      %3126 = vmatpush1.msra.mxu0 %v2919
      %3127 = vmatprep.subr.mxu0 %v2928
      %3128 = vmatpush1.msra.mxu0 %v2927
      %3129 = vmatprep.subr.mxu0 %v2936
      %3130 = vmatpush1.msra.mxu0 %v2935
      %3131 = vmatprep.subr.mxu0 %v3043
      %3132 = vmatpush1.msra.mxu0 %v3042
      %3133 = vmatprep.subr.mxu0 %v3051
      %3134 = vmatpush1.msra.mxu0 %v3050
      %3135 = vmatprep.subr.mxu0 %v3059
      %3136 = vmatpush1.msra.mxu0 %v3058
      %3137 = vmatprep.subr.mxu0 %v3067
      %3138 = vmatpush1.msra.mxu0 %v3066
      %3139 = vmatprep.subr.mxu0 0.0
      %3140 = vmatpush1.msra.mxu0 0.0
      %3141 = vmatprep.subr.mxu0 0.0
      %3142 = vmatpush1.msra.mxu0 0.0
      %3143 = vmatprep.subr.mxu0 0.0
      %3144 = vmatpush1.msra.mxu0 0.0
      %3145 = vmatprep.subr.mxu0 0.0
      %3146 = vmatpush1.msra.mxu0 0.0
      %3147 = vmatprep.subr.mxu0 0.0
      %3148 = vmatpush1.msra.mxu0 0.0
      %3149 = vmatprep.subr.mxu0 0.0
      %3150 = vmatpush1.msra.mxu0 0.0
      %3151 = vmatprep.subr.mxu0 0.0
      %3152 = vmatpush1.msra.mxu0 0.0
      %3153 = vmatprep.subr.mxu0 0.0
      %3154 = vmatpush1.msra.mxu0 0.0
      %3155 = vmatprep.subr.mxu0 0.0
      %3156 = vmatpush1.msra.mxu0 0.0
      %3157 = vmatprep.subr.mxu0 0.0
      %3158 = vmatpush1.msra.mxu0 0.0
      %3159 = vmatprep.subr.mxu0 0.0
      %3160 = vmatpush1.msra.mxu0 0.0
      %3161 = vmatprep.subr.mxu0 0.0
      %3162 = vmatpush1.msra.mxu0 0.0
      %3163 = vmatprep.subr.mxu0 0.0
      %3164 = vmatpush1.msra.mxu0 0.0
      %3165 = vmatprep.subr.mxu0 0.0
      %3166 = vmatpush1.msra.mxu0 0.0
      %3167 = vmatprep.subr.mxu0 0.0
      %3168 = vmatpush1.msra.mxu0 0.0
      %3169 = vmatprep.subr.mxu0 0.0
      %3170 = vmatpush1.msra.mxu0 0.0
      %3171 = vmatprep.subr.mxu0 0.0
      %3172 = vmatpush1.msra.mxu0 0.0
      %3173 = vmatprep.subr.mxu0 0.0
      %3174 = vmatpush1.msra.mxu0 0.0
      %3175 = vmatprep.subr.mxu0 0.0
      %3176 = vmatpush1.msra.mxu0 0.0
      %3177 = vmatprep.subr.mxu0 0.0
      %3178 = vmatpush1.msra.mxu0 0.0
      %3179 = vmatprep.subr.mxu0 0.0
      %3180 = vmatpush1.msra.mxu0 0.0
      %3181 = vmatprep.subr.mxu0 0.0
      %3182 = vmatpush1.msra.mxu0 0.0
      %3183 = vmatprep.subr.mxu0 0.0
      %3184 = vmatpush1.msra.mxu0 0.0
      %3185 = vmatprep.subr.mxu0 0.0
      %3186 = vmatpush1.msra.mxu0 0.0
      %3187 = vmatprep.mubr.f32.mxu0 0.0
      %3188 = vmatmul.mubr.f32.gmra.mrb[0].mxu0 %v3112
      %v3189 = vpop.f32.mrb[0].mxu0
      %v3190 = vadd.f32 0.0, %v3189
      %v3191 = vpop.f32.mrb[0].mxu0
      %v3192 = vadd.f32 0.0, %v3191
      %3193 = vmatprep.mubr.f32.mxu0 0.0
      %3194 = vmatmul.mubr.f32.gmra.mrb[0].mxu0 %v3115
      %v3195 = vpop.f32.mrb[0].mxu0
      %v3196 = vadd.f32 0.0, %v3195
      %v3197 = vpop.f32.mrb[0].mxu0
      %v3198 = vadd.f32 0.0, %v3197
      %3199 = vmatprep.mubr.f32.mxu0 0.0
      %3200 = vmatmul.mubr.f32.gmra.mrb[0].mxu0 %v3118
      %v3201 = vpop.f32.mrb[0].mxu0
      %v3202 = vadd.f32 0.0, %v3201
      %v3203 = vpop.f32.mrb[0].mxu0
      %v3204 = vadd.f32 0.0, %v3203
      %3205 = vmatprep.mubr.f32.mxu0 0.0
      %3206 = vmatmul.mubr.f32.gmra.mrb[0].mxu0 %v3121
      %v3207 = vpop.f32.mrb[0].mxu0
      %v3208 = vadd.f32 0.0, %v3207
      %v3209 = vpop.f32.mrb[0].mxu0
      %v3210 = vadd.f32 0.0, %v3209
      %3211 = vdwg.mxu0
      %3212 = vmatprep.subr.mxu0 %v2914
      %3213 = vmatpush1.msra.mxu0 %v2913
      %3214 = vmatprep.subr.mxu0 %v2922
      %3215 = vmatpush1.msra.mxu0 %v2921
      %3216 = vmatprep.subr.mxu0 %v2930
      %3217 = vmatpush1.msra.mxu0 %v2929
      %3218 = vmatprep.subr.mxu0 %v2938
      %3219 = vmatpush1.msra.mxu0 %v2937
      %3220 = vmatprep.subr.mxu0 %v3045
      %3221 = vmatpush1.msra.mxu0 %v3044
      %3222 = vmatprep.subr.mxu0 %v3053
      %3223 = vmatpush1.msra.mxu0 %v3052
      %3224 = vmatprep.subr.mxu0 %v3061
      %3225 = vmatpush1.msra.mxu0 %v3060
      %3226 = vmatprep.subr.mxu0 %v3069
      %3227 = vmatpush1.msra.mxu0 %v3068
      %3228 = vmatprep.subr.mxu0 0.0
      %3229 = vmatpush1.msra.mxu0 0.0
      %3230 = vmatprep.subr.mxu0 0.0
      %3231 = vmatpush1.msra.mxu0 0.0
      %3232 = vmatprep.subr.mxu0 0.0
      %3233 = vmatpush1.msra.mxu0 0.0
      %3234 = vmatprep.subr.mxu0 0.0
      %3235 = vmatpush1.msra.mxu0 0.0
      %3236 = vmatprep.subr.mxu0 0.0
      %3237 = vmatpush1.msra.mxu0 0.0
      %3238 = vmatprep.subr.mxu0 0.0
      %3239 = vmatpush1.msra.mxu0 0.0
      %3240 = vmatprep.subr.mxu0 0.0
      %3241 = vmatpush1.msra.mxu0 0.0
      %3242 = vmatprep.subr.mxu0 0.0
      %3243 = vmatpush1.msra.mxu0 0.0
      %3244 = vmatprep.subr.mxu0 0.0
      %3245 = vmatpush1.msra.mxu0 0.0
      %3246 = vmatprep.subr.mxu0 0.0
      %3247 = vmatpush1.msra.mxu0 0.0
      %3248 = vmatprep.subr.mxu0 0.0
      %3249 = vmatpush1.msra.mxu0 0.0
      %3250 = vmatprep.subr.mxu0 0.0
      %3251 = vmatpush1.msra.mxu0 0.0
      %3252 = vmatprep.subr.mxu0 0.0
      %3253 = vmatpush1.msra.mxu0 0.0
      %3254 = vmatprep.subr.mxu0 0.0
      %3255 = vmatpush1.msra.mxu0 0.0
      %3256 = vmatprep.subr.mxu0 0.0
      %3257 = vmatpush1.msra.mxu0 0.0
      %3258 = vmatprep.subr.mxu0 0.0
      %3259 = vmatpush1.msra.mxu0 0.0
      %3260 = vmatprep.subr.mxu0 0.0
      %3261 = vmatpush1.msra.mxu0 0.0
      %3262 = vmatprep.subr.mxu0 0.0
      %3263 = vmatpush1.msra.mxu0 0.0
      %3264 = vmatprep.subr.mxu0 0.0
      %3265 = vmatpush1.msra.mxu0 0.0
      %3266 = vmatprep.subr.mxu0 0.0
      %3267 = vmatpush1.msra.mxu0 0.0
      %3268 = vmatprep.subr.mxu0 0.0
      %3269 = vmatpush1.msra.mxu0 0.0
      %3270 = vmatprep.subr.mxu0 0.0
      %3271 = vmatpush1.msra.mxu0 0.0
      %3272 = vmatprep.subr.mxu0 0.0
      %3273 = vmatpush1.msra.mxu0 0.0
      %3274 = vmatprep.subr.mxu0 0.0
      %3275 = vmatpush1.msra.mxu0 0.0
      %3276 = vmatprep.mubr.f32.mxu0 0.0
      %3277 = vmatmul.mubr.f32.gmra.mrb[0].mxu0 %v3112
      %v3278 = vpop.f32.mrb[0].mxu0
      %v3279 = vadd.f32 0.0, %v3278
      %v3280 = vpop.f32.mrb[0].mxu0
      %v3281 = vadd.f32 0.0, %v3280
      %3282 = vmatprep.mubr.f32.mxu0 0.0
      %3283 = vmatmul.mubr.f32.gmra.mrb[0].mxu0 %v3115
      %v3284 = vpop.f32.mrb[0].mxu0
      %v3285 = vadd.f32 0.0, %v3284
      %v3286 = vpop.f32.mrb[0].mxu0
      %v3287 = vadd.f32 0.0, %v3286
      %3288 = vmatprep.mubr.f32.mxu0 0.0
      %3289 = vmatmul.mubr.f32.gmra.mrb[0].mxu0 %v3118
      %v3290 = vpop.f32.mrb[0].mxu0
      %v3291 = vadd.f32 0.0, %v3290
      %v3292 = vpop.f32.mrb[0].mxu0
      %v3293 = vadd.f32 0.0, %v3292
      %3294 = vmatprep.mubr.f32.mxu0 0.0
      %3295 = vmatmul.mubr.f32.gmra.mrb[0].mxu0 %v3121
      %v3296 = vpop.f32.mrb[0].mxu0
      %v3297 = vadd.f32 0.0, %v3296
      %v3298 = vpop.f32.mrb[0].mxu0
      %v3299 = vadd.f32 0.0, %v3298
      %3300 = vdwg.mxu0
      %3301 = vmatprep.subr.mxu0 %v2916
      %3302 = vmatpush1.msra.mxu0 %v2915
      %3303 = vmatprep.subr.mxu0 %v2924
      %3304 = vmatpush1.msra.mxu0 %v2923
      %3305 = vmatprep.subr.mxu0 %v2932
      %3306 = vmatpush1.msra.mxu0 %v2931
      %3307 = vmatprep.subr.mxu0 %v2940
      %3308 = vmatpush1.msra.mxu0 %v2939
      %3309 = vmatprep.subr.mxu0 %v3047
      %3310 = vmatpush1.msra.mxu0 %v3046
      %3311 = vmatprep.subr.mxu0 %v3055
      %3312 = vmatpush1.msra.mxu0 %v3054
      %3313 = vmatprep.subr.mxu0 %v3063
      %3314 = vmatpush1.msra.mxu0 %v3062
      %3315 = vmatprep.subr.mxu0 %v3071
      %3316 = vmatpush1.msra.mxu0 %v3070
      %3317 = vmatprep.subr.mxu0 0.0
      %3318 = vmatpush1.msra.mxu0 0.0
      %3319 = vmatprep.subr.mxu0 0.0
      %3320 = vmatpush1.msra.mxu0 0.0
      %3321 = vmatprep.subr.mxu0 0.0
      %3322 = vmatpush1.msra.mxu0 0.0
      %3323 = vmatprep.subr.mxu0 0.0
      %3324 = vmatpush1.msra.mxu0 0.0
      %3325 = vmatprep.subr.mxu0 0.0
      %3326 = vmatpush1.msra.mxu0 0.0
      %3327 = vmatprep.subr.mxu0 0.0
      %3328 = vmatpush1.msra.mxu0 0.0
      %3329 = vmatprep.subr.mxu0 0.0
      %3330 = vmatpush1.msra.mxu0 0.0
      %3331 = vmatprep.subr.mxu0 0.0
      %3332 = vmatpush1.msra.mxu0 0.0
      %3333 = vmatprep.subr.mxu0 0.0
      %3334 = vmatpush1.msra.mxu0 0.0
      %3335 = vmatprep.subr.mxu0 0.0
      %3336 = vmatpush1.msra.mxu0 0.0
      %3337 = vmatprep.subr.mxu0 0.0
      %3338 = vmatpush1.msra.mxu0 0.0
      %3339 = vmatprep.subr.mxu0 0.0
      %3340 = vmatpush1.msra.mxu0 0.0
      %3341 = vmatprep.subr.mxu0 0.0
      %3342 = vmatpush1.msra.mxu0 0.0
      %3343 = vmatprep.subr.mxu0 0.0
      %3344 = vmatpush1.msra.mxu0 0.0
      %3345 = vmatprep.subr.mxu0 0.0
      %3346 = vmatpush1.msra.mxu0 0.0
      %3347 = vmatprep.subr.mxu0 0.0
      %3348 = vmatpush1.msra.mxu0 0.0
      %3349 = vmatprep.subr.mxu0 0.0
      %3350 = vmatpush1.msra.mxu0 0.0
      %3351 = vmatprep.subr.mxu0 0.0
      %3352 = vmatpush1.msra.mxu0 0.0
      %3353 = vmatprep.subr.mxu0 0.0
      %3354 = vmatpush1.msra.mxu0 0.0
      %3355 = vmatprep.subr.mxu0 0.0
      %3356 = vmatpush1.msra.mxu0 0.0
      %3357 = vmatprep.subr.mxu0 0.0
      %3358 = vmatpush1.msra.mxu0 0.0
      %3359 = vmatprep.subr.mxu0 0.0
      %3360 = vmatpush1.msra.mxu0 0.0
      %3361 = vmatprep.subr.mxu0 0.0
      %3362 = vmatpush1.msra.mxu0 0.0
      %3363 = vmatprep.subr.mxu0 0.0
      %3364 = vmatpush1.msra.mxu0 0.0
      %3365 = vmatprep.mubr.f32.mxu0 0.0
      %3366 = vmatmul.mubr.f32.gmra.mrb[0].mxu0 %v3112
      %v3367 = vpop.f32.mrb[0].mxu0
      %v3368 = vadd.f32 0.0, %v3367
      %v3369 = vpop.f32.mrb[0].mxu0
      %v3370 = vadd.f32 0.0, %v3369
      %3371 = vmatprep.mubr.f32.mxu0 0.0
      %3372 = vmatmul.mubr.f32.gmra.mrb[0].mxu0 %v3115
      %v3373 = vpop.f32.mrb[0].mxu0
      %v3374 = vadd.f32 0.0, %v3373
      %v3375 = vpop.f32.mrb[0].mxu0
      %v3376 = vadd.f32 0.0, %v3375
      %3377 = vmatprep.mubr.f32.mxu0 0.0
      %3378 = vmatmul.mubr.f32.gmra.mrb[0].mxu0 %v3118
      %v3379 = vpop.f32.mrb[0].mxu0
      %v3380 = vadd.f32 0.0, %v3379
      %v3381 = vpop.f32.mrb[0].mxu0
      %v3382 = vadd.f32 0.0, %v3381
      %3383 = vmatprep.mubr.f32.mxu0 0.0
      %3384 = vmatmul.mubr.f32.gmra.mrb[0].mxu0 %v3121
      %v3385 = vpop.f32.mrb[0].mxu0
      %v3386 = vadd.f32 0.0, %v3385
      %v3387 = vpop.f32.mrb[0].mxu0
      %v3388 = vadd.f32 0.0, %v3387
      %3389 = vdwg.mxu0
      %3390 = vmatprep.subr.mxu0 %v2918
      %3391 = vmatpush1.msra.mxu0 %v2917
      %3392 = vmatprep.subr.mxu0 %v2926
      %3393 = vmatpush1.msra.mxu0 %v2925
      %3394 = vmatprep.subr.mxu0 %v2934
      %3395 = vmatpush1.msra.mxu0 %v2933
      %3396 = vmatprep.subr.mxu0 %v2942
      %3397 = vmatpush1.msra.mxu0 %v2941
      %3398 = vmatprep.subr.mxu0 %v3049
      %3399 = vmatpush1.msra.mxu0 %v3048
      %3400 = vmatprep.subr.mxu0 %v3057
      %3401 = vmatpush1.msra.mxu0 %v3056
      %3402 = vmatprep.subr.mxu0 %v3065
      %3403 = vmatpush1.msra.mxu0 %v3064
      %3404 = vmatprep.subr.mxu0 %v3073
      %3405 = vmatpush1.msra.mxu0 %v3072
      %3406 = vmatprep.subr.mxu0 0.0
      %3407 = vmatpush1.msra.mxu0 0.0
      %3408 = vmatprep.subr.mxu0 0.0
      %3409 = vmatpush1.msra.mxu0 0.0
      %3410 = vmatprep.subr.mxu0 0.0
      %3411 = vmatpush1.msra.mxu0 0.0
      %3412 = vmatprep.subr.mxu0 0.0
      %3413 = vmatpush1.msra.mxu0 0.0
      %3414 = vmatprep.subr.mxu0 0.0
      %3415 = vmatpush1.msra.mxu0 0.0
      %3416 = vmatprep.subr.mxu0 0.0
      %3417 = vmatpush1.msra.mxu0 0.0
      %3418 = vmatprep.subr.mxu0 0.0
      %3419 = vmatpush1.msra.mxu0 0.0
      %3420 = vmatprep.subr.mxu0 0.0
      %3421 = vmatpush1.msra.mxu0 0.0
      %3422 = vmatprep.subr.mxu0 0.0
      %3423 = vmatpush1.msra.mxu0 0.0
      %3424 = vmatprep.subr.mxu0 0.0
      %3425 = vmatpush1.msra.mxu0 0.0
      %3426 = vmatprep.subr.mxu0 0.0
      %3427 = vmatpush1.msra.mxu0 0.0
      %3428 = vmatprep.subr.mxu0 0.0
      %3429 = vmatpush1.msra.mxu0 0.0
      %3430 = vmatprep.subr.mxu0 0.0
      %3431 = vmatpush1.msra.mxu0 0.0
      %3432 = vmatprep.subr.mxu0 0.0
      %3433 = vmatpush1.msra.mxu0 0.0
      %3434 = vmatprep.subr.mxu0 0.0
      %3435 = vmatpush1.msra.mxu0 0.0
      %3436 = vmatprep.subr.mxu0 0.0
      %3437 = vmatpush1.msra.mxu0 0.0
      %3438 = vmatprep.subr.mxu0 0.0
      %3439 = vmatpush1.msra.mxu0 0.0
      %3440 = vmatprep.subr.mxu0 0.0
      %3441 = vmatpush1.msra.mxu0 0.0
      %3442 = vmatprep.subr.mxu0 0.0
      %3443 = vmatpush1.msra.mxu0 0.0
      %3444 = vmatprep.subr.mxu0 0.0
      %3445 = vmatpush1.msra.mxu0 0.0
      %3446 = vmatprep.subr.mxu0 0.0
      %3447 = vmatpush1.msra.mxu0 0.0
      %3448 = vmatprep.subr.mxu0 0.0
      %3449 = vmatpush1.msra.mxu0 0.0
      %3450 = vmatprep.subr.mxu0 0.0
      %3451 = vmatpush1.msra.mxu0 0.0
      %3452 = vmatprep.subr.mxu0 0.0
      %3453 = vmatpush1.msra.mxu0 0.0
      %3454 = vmatprep.mubr.f32.mxu0 0.0
      %3455 = vmatmul.mubr.f32.gmra.mrb[0].mxu0 %v3112
      %v3456 = vpop.f32.mrb[0].mxu0
      %v3457 = vadd.f32 0.0, %v3456
      %v3458 = vpop.f32.mrb[0].mxu0
      %v3459 = vadd.f32 0.0, %v3458
      %3460 = vmatprep.mubr.f32.mxu0 0.0
      %3461 = vmatmul.mubr.f32.gmra.mrb[0].mxu0 %v3115
      %v3462 = vpop.f32.mrb[0].mxu0
      %v3463 = vadd.f32 0.0, %v3462
      %v3464 = vpop.f32.mrb[0].mxu0
      %v3465 = vadd.f32 0.0, %v3464
      %3466 = vmatprep.mubr.f32.mxu0 0.0
      %3467 = vmatmul.mubr.f32.gmra.mrb[0].mxu0 %v3118
      %v3468 = vpop.f32.mrb[0].mxu0
      %v3469 = vadd.f32 0.0, %v3468
      %v3470 = vpop.f32.mrb[0].mxu0
      %v3471 = vadd.f32 0.0, %v3470
      %3472 = vmatprep.mubr.f32.mxu0 0.0
      %3473 = vmatmul.mubr.f32.gmra.mrb[0].mxu0 %v3121
      %v3474 = vpop.f32.mrb[0].mxu0
      %v3475 = vadd.f32 0.0, %v3474
      %v3476 = vpop.f32.mrb[0].mxu0
      %v3477 = vadd.f32 0.0, %v3476
      %3478 = vdwg.mxu0
      %s3479 = scalar_lea.vmem %s3, 128
      %v3480 = vld [vmem:[%s3479] sm:$0xff]
      %v3481 = vld [vmem:[%s3479 + $0x8] sm:$0xff]
      %v3482 = vld [vmem:[%s3479 + $0x10] sm:$0xff]
      %v3483 = vld [vmem:[%s3479 + $0x18] sm:$0xff]
      %3485 = vset.pattern.permute.xlu0 0
      %3486 = vperm.xlu0 %3485, %v3480
      %v3487 = vpop.permute.xlu0 %3486
      %3490 = vset.pattern.permute.xlu0 0
      %3491 = vperm.xlu0 %3490, %v3481
      %v3492 = vpop.permute.xlu0 %3491
      %3495 = vset.pattern.permute.xlu0 0
      %3496 = vperm.xlu0 %3495, %v3482
      %v3497 = vpop.permute.xlu0 %3496
      %3500 = vset.pattern.permute.xlu0 0
      %3501 = vperm.xlu0 %3500, %v3483
      %v3502 = vpop.permute.xlu0 %3501
      %v3504 = vmul.f32 %v3190, %v3487
      %v3505 = vmul.f32 %v3192, %v3487
      %v3506 = vmul.f32 %v3279, %v3487
      %v3507 = vmul.f32 %v3281, %v3487
      %v3508 = vmul.f32 %v3368, %v3487
      %v3509 = vmul.f32 %v3370, %v3487
      %v3510 = vmul.f32 %v3457, %v3487
      %v3511 = vmul.f32 %v3459, %v3487
      %v3512 = vmul.f32 %v3196, %v3492
      %v3513 = vmul.f32 %v3198, %v3492
      %v3514 = vmul.f32 %v3285, %v3492
      %v3515 = vmul.f32 %v3287, %v3492
      %v3516 = vmul.f32 %v3374, %v3492
      %v3517 = vmul.f32 %v3376, %v3492
      %v3518 = vmul.f32 %v3463, %v3492
      %v3519 = vmul.f32 %v3465, %v3492
      %v3520 = vmul.f32 %v3202, %v3497
      %v3521 = vmul.f32 %v3204, %v3497
      %v3522 = vmul.f32 %v3291, %v3497
      %v3523 = vmul.f32 %v3293, %v3497
      %v3524 = vmul.f32 %v3380, %v3497
      %v3525 = vmul.f32 %v3382, %v3497
      %v3526 = vmul.f32 %v3469, %v3497
      %v3527 = vmul.f32 %v3471, %v3497
      %v3528 = vmul.f32 %v3208, %v3502
      %v3529 = vmul.f32 %v3210, %v3502
      %v3530 = vmul.f32 %v3297, %v3502
      %v3531 = vmul.f32 %v3299, %v3502
      %v3532 = vmul.f32 %v3386, %v3502
      %v3533 = vmul.f32 %v3388, %v3502
      %v3534 = vmul.f32 %v3475, %v3502
      %v3535 = vmul.f32 %v3477, %v3502
      %s3536 = scalar_lea.vmem %s4, 128
      %v3537 = vld [vmem:[%s3536] sm:$0xff]
      %v3538 = vld [vmem:[%s3536 + $0x8] sm:$0xff]
      %v3539 = vld [vmem:[%s3536 + $0x10] sm:$0xff]
      %v3540 = vld [vmem:[%s3536 + $0x18] sm:$0xff]
      %3542 = vset.pattern.permute.xlu0 0
      %3543 = vperm.xlu0 %3542, %v3537
      %v3544 = vpop.permute.xlu0 %3543
      %3547 = vset.pattern.permute.xlu0 0
      %3548 = vperm.xlu0 %3547, %v3538
      %v3549 = vpop.permute.xlu0 %3548
      %3552 = vset.pattern.permute.xlu0 0
      %3553 = vperm.xlu0 %3552, %v3539
      %v3554 = vpop.permute.xlu0 %3553
      %3557 = vset.pattern.permute.xlu0 0
      %3558 = vperm.xlu0 %3557, %v3540
      %v3559 = vpop.permute.xlu0 %3558
      %v3561 = vadd.f32 %v3504, %v3544
      %v3562 = vadd.f32 %v3505, %v3544
      %v3563 = vadd.f32 %v3506, %v3544
      %v3564 = vadd.f32 %v3507, %v3544
      %v3565 = vadd.f32 %v3508, %v3544
      %v3566 = vadd.f32 %v3509, %v3544
      %v3567 = vadd.f32 %v3510, %v3544
      %v3568 = vadd.f32 %v3511, %v3544
      %v3569 = vadd.f32 %v3512, %v3549
      %v3570 = vadd.f32 %v3513, %v3549
      %v3571 = vadd.f32 %v3514, %v3549
      %v3572 = vadd.f32 %v3515, %v3549
      %v3573 = vadd.f32 %v3516, %v3549
      %v3574 = vadd.f32 %v3517, %v3549
      %v3575 = vadd.f32 %v3518, %v3549
      %v3576 = vadd.f32 %v3519, %v3549
      %v3577 = vadd.f32 %v3520, %v3554
      %v3578 = vadd.f32 %v3521, %v3554
      %v3579 = vadd.f32 %v3522, %v3554
      %v3580 = vadd.f32 %v3523, %v3554
      %v3581 = vadd.f32 %v3524, %v3554
      %v3582 = vadd.f32 %v3525, %v3554
      %v3583 = vadd.f32 %v3526, %v3554
      %v3584 = vadd.f32 %v3527, %v3554
      %v3585 = vadd.f32 %v3528, %v3559
      %v3586 = vadd.f32 %v3529, %v3559
      %v3587 = vadd.f32 %v3530, %v3559
      %v3588 = vadd.f32 %v3531, %v3559
      %v3589 = vadd.f32 %v3532, %v3559
      %v3590 = vadd.f32 %v3533, %v3559
      %v3591 = vadd.f32 %v3534, %v3559
      %v3592 = vadd.f32 %v3535, %v3559
      %v3593 = vmax.f32 %v3561, 0.0
      %v3594 = vmax.f32 %v3562, 0.0
      %v3595 = vmax.f32 %v3563, 0.0
      %v3596 = vmax.f32 %v3564, 0.0
      %v3597 = vmax.f32 %v3565, 0.0
      %v3598 = vmax.f32 %v3566, 0.0
      %v3599 = vmax.f32 %v3567, 0.0
      %v3600 = vmax.f32 %v3568, 0.0
      %v3601 = vmax.f32 %v3569, 0.0
      %v3602 = vmax.f32 %v3570, 0.0
      %v3603 = vmax.f32 %v3571, 0.0
      %v3604 = vmax.f32 %v3572, 0.0
      %v3605 = vmax.f32 %v3573, 0.0
      %v3606 = vmax.f32 %v3574, 0.0
      %v3607 = vmax.f32 %v3575, 0.0
      %v3608 = vmax.f32 %v3576, 0.0
      %v3609 = vmax.f32 %v3577, 0.0
      %v3610 = vmax.f32 %v3578, 0.0
      %v3611 = vmax.f32 %v3579, 0.0
      %v3612 = vmax.f32 %v3580, 0.0
      %v3613 = vmax.f32 %v3581, 0.0
      %v3614 = vmax.f32 %v3582, 0.0
      %v3615 = vmax.f32 %v3583, 0.0
      %v3616 = vmax.f32 %v3584, 0.0
      %v3617 = vmax.f32 %v3585, 0.0
      %v3618 = vmax.f32 %v3586, 0.0
      %v3619 = vmax.f32 %v3587, 0.0
      %v3620 = vmax.f32 %v3588, 0.0
      %v3621 = vmax.f32 %v3589, 0.0
      %v3622 = vmax.f32 %v3590, 0.0
      %v3623 = vmax.f32 %v3591, 0.0
      %v3624 = vmax.f32 %v3592, 0.0
      %3657 = vrot.lane.b32.xlu0 %v3593, 112
      %v3658 = vpop.permute.xlu0 %3657
      %3659 = vrot.lane.b32.xlu0 %v3594, 112
      %v3660 = vpop.permute.xlu0 %3659
      %3661 = vrot.lane.b32.xlu0 %v3595, 112
      %v3662 = vpop.permute.xlu0 %3661
      %3663 = vrot.lane.b32.xlu0 %v3596, 112
      %v3664 = vpop.permute.xlu0 %3663
      %3665 = vrot.lane.b32.xlu0 %v3597, 112
      %v3666 = vpop.permute.xlu0 %3665
      %3667 = vrot.lane.b32.xlu0 %v3598, 112
      %v3668 = vpop.permute.xlu0 %3667
      %3669 = vrot.lane.b32.xlu0 %v3599, 112
      %v3670 = vpop.permute.xlu0 %3669
      %3671 = vrot.lane.b32.xlu0 %v3600, 112
      %v3672 = vpop.permute.xlu0 %3671
      %3673 = vrot.lane.b32.xlu0 0.0, 112
      %v3674 = vpop.permute.xlu0 %3673
      %3675 = vrot.lane.b32.xlu0 %v3601, 112
      %v3676 = vpop.permute.xlu0 %3675
      %3677 = vrot.lane.b32.xlu0 %v3602, 112
      %v3678 = vpop.permute.xlu0 %3677
      %3679 = vrot.lane.b32.xlu0 %v3603, 112
      %v3680 = vpop.permute.xlu0 %3679
      %3681 = vrot.lane.b32.xlu0 %v3604, 112
      %v3682 = vpop.permute.xlu0 %3681
      %3683 = vrot.lane.b32.xlu0 %v3605, 112
      %v3684 = vpop.permute.xlu0 %3683
      %3685 = vrot.lane.b32.xlu0 %v3606, 112
      %v3686 = vpop.permute.xlu0 %3685
      %3687 = vrot.lane.b32.xlu0 %v3607, 112
      %v3688 = vpop.permute.xlu0 %3687
      %3689 = vrot.lane.b32.xlu0 %v3608, 112
      %v3690 = vpop.permute.xlu0 %3689
      %3691 = vrot.lane.b32.xlu0 %v3609, 112
      %v3692 = vpop.permute.xlu0 %3691
      %3693 = vrot.lane.b32.xlu0 %v3610, 112
      %v3694 = vpop.permute.xlu0 %3693
      %3695 = vrot.lane.b32.xlu0 %v3611, 112
      %v3696 = vpop.permute.xlu0 %3695
      %3697 = vrot.lane.b32.xlu0 %v3612, 112
      %v3698 = vpop.permute.xlu0 %3697
      %3699 = vrot.lane.b32.xlu0 %v3613, 112
      %v3700 = vpop.permute.xlu0 %3699
      %3701 = vrot.lane.b32.xlu0 %v3614, 112
      %v3702 = vpop.permute.xlu0 %3701
      %3703 = vrot.lane.b32.xlu0 %v3615, 112
      %v3704 = vpop.permute.xlu0 %3703
      %3705 = vrot.lane.b32.xlu0 %v3616, 112
      %v3706 = vpop.permute.xlu0 %3705
      %3707 = vrot.lane.b32.xlu0 %v3617, 112
      %v3708 = vpop.permute.xlu0 %3707
      %3709 = vrot.lane.b32.xlu0 %v3618, 112
      %v3710 = vpop.permute.xlu0 %3709
      %3711 = vrot.lane.b32.xlu0 %v3619, 112
      %v3712 = vpop.permute.xlu0 %3711
      %3713 = vrot.lane.b32.xlu0 %v3620, 112
      %v3714 = vpop.permute.xlu0 %3713
      %3715 = vrot.lane.b32.xlu0 %v3621, 112
      %v3716 = vpop.permute.xlu0 %3715
      %3717 = vrot.lane.b32.xlu0 %v3622, 112
      %v3718 = vpop.permute.xlu0 %3717
      %3719 = vrot.lane.b32.xlu0 %v3623, 112
      %v3720 = vpop.permute.xlu0 %3719
      %3721 = vrot.lane.b32.xlu0 %v3624, 112
      %v3722 = vpop.permute.xlu0 %3721
      %vm3723 = vcmask 916480
      %v3724 = vsel %vm3723, %v3658, %v3660
      %v3725 = vsel %vm3723, %v3660, %v3662
      %v3726 = vsel %vm3723, %v3662, %v3664
      %v3727 = vsel %vm3723, %v3664, %v3666
      %v3728 = vsel %vm3723, %v3666, %v3668
      %v3729 = vsel %vm3723, %v3668, %v3670
      %v3730 = vsel %vm3723, %v3670, %v3672
      %v3731 = vsel %vm3723, %v3672, %v3674
      %v3732 = vsel %vm3723, %v3676, %v3678
      %v3733 = vsel %vm3723, %v3678, %v3680
      %v3734 = vsel %vm3723, %v3680, %v3682
      %v3735 = vsel %vm3723, %v3682, %v3684
      %v3736 = vsel %vm3723, %v3684, %v3686
      %v3737 = vsel %vm3723, %v3686, %v3688
      %v3738 = vsel %vm3723, %v3688, %v3690
      %v3739 = vsel %vm3723, %v3690, %v3674
      %v3740 = vsel %vm3723, %v3692, %v3694
      %v3741 = vsel %vm3723, %v3694, %v3696
      %v3742 = vsel %vm3723, %v3696, %v3698
      %v3743 = vsel %vm3723, %v3698, %v3700
      %v3744 = vsel %vm3723, %v3700, %v3702
      %v3745 = vsel %vm3723, %v3702, %v3704
      %v3746 = vsel %vm3723, %v3704, %v3706
      %v3747 = vsel %vm3723, %v3706, %v3674
      %v3748 = vsel %vm3723, %v3708, %v3710
      %v3749 = vsel %vm3723, %v3710, %v3712
      %v3750 = vsel %vm3723, %v3712, %v3714
      %v3751 = vsel %vm3723, %v3714, %v3716
      %v3752 = vsel %vm3723, %v3716, %v3718
      %v3753 = vsel %vm3723, %v3718, %v3720
      %v3754 = vsel %vm3723, %v3720, %v3722
      %v3755 = vsel %vm3723, %v3722, %v3674
      %s3788 = scalar_lea.vmem %s2, 128
      %v3789 = vld [vmem:[%s3788] sm:$0xff]
      %v3790 = vld [vmem:[%s3788 + $0x8] sm:$0xff]
      %v3791 = vld [vmem:[%s3788 + $0x10] sm:$0xff]
      %v3792 = vld [vmem:[%s3788 + $0x18] sm:$0xff]
      %v3794 = vsel %vm1064, %v3789, 0
      %v3797 = vsel %vm1064, %v3790, 0
      %v3800 = vsel %vm1064, %v3791, 0
      %v3803 = vsel %vm1064, %v3792, 0
      %3805 = vmatprep.subr.mxu0 %v3594
      %3806 = vmatpush1.msra.mxu0 %v3593
      %3807 = vmatprep.subr.mxu0 %v3602
      %3808 = vmatpush1.msra.mxu0 %v3601
      %3809 = vmatprep.subr.mxu0 %v3610
      %3810 = vmatpush1.msra.mxu0 %v3609
      %3811 = vmatprep.subr.mxu0 %v3618
      %3812 = vmatpush1.msra.mxu0 %v3617
      %3813 = vmatprep.subr.mxu0 %v3725
      %3814 = vmatpush1.msra.mxu0 %v3724
      %3815 = vmatprep.subr.mxu0 %v3733
      %3816 = vmatpush1.msra.mxu0 %v3732
      %3817 = vmatprep.subr.mxu0 %v3741
      %3818 = vmatpush1.msra.mxu0 %v3740
      %3819 = vmatprep.subr.mxu0 %v3749
      %3820 = vmatpush1.msra.mxu0 %v3748
      %3821 = vmatprep.subr.mxu0 0.0
      %3822 = vmatpush1.msra.mxu0 0.0
      %3823 = vmatprep.subr.mxu0 0.0
      %3824 = vmatpush1.msra.mxu0 0.0
      %3825 = vmatprep.subr.mxu0 0.0
      %3826 = vmatpush1.msra.mxu0 0.0
      %3827 = vmatprep.subr.mxu0 0.0
      %3828 = vmatpush1.msra.mxu0 0.0
      %3829 = vmatprep.subr.mxu0 0.0
      %3830 = vmatpush1.msra.mxu0 0.0
      %3831 = vmatprep.subr.mxu0 0.0
      %3832 = vmatpush1.msra.mxu0 0.0
      %3833 = vmatprep.subr.mxu0 0.0
      %3834 = vmatpush1.msra.mxu0 0.0
      %3835 = vmatprep.subr.mxu0 0.0
      %3836 = vmatpush1.msra.mxu0 0.0
      %3837 = vmatprep.subr.mxu0 0.0
      %3838 = vmatpush1.msra.mxu0 0.0
      %3839 = vmatprep.subr.mxu0 0.0
      %3840 = vmatpush1.msra.mxu0 0.0
      %3841 = vmatprep.subr.mxu0 0.0
      %3842 = vmatpush1.msra.mxu0 0.0
      %3843 = vmatprep.subr.mxu0 0.0
      %3844 = vmatpush1.msra.mxu0 0.0
      %3845 = vmatprep.subr.mxu0 0.0
      %3846 = vmatpush1.msra.mxu0 0.0
      %3847 = vmatprep.subr.mxu0 0.0
      %3848 = vmatpush1.msra.mxu0 0.0
      %3849 = vmatprep.subr.mxu0 0.0
      %3850 = vmatpush1.msra.mxu0 0.0
      %3851 = vmatprep.subr.mxu0 0.0
      %3852 = vmatpush1.msra.mxu0 0.0
      %3853 = vmatprep.subr.mxu0 0.0
      %3854 = vmatpush1.msra.mxu0 0.0
      %3855 = vmatprep.subr.mxu0 0.0
      %3856 = vmatpush1.msra.mxu0 0.0
      %3857 = vmatprep.subr.mxu0 0.0
      %3858 = vmatpush1.msra.mxu0 0.0
      %3859 = vmatprep.subr.mxu0 0.0
      %3860 = vmatpush1.msra.mxu0 0.0
      %3861 = vmatprep.subr.mxu0 0.0
      %3862 = vmatpush1.msra.mxu0 0.0
      %3863 = vmatprep.subr.mxu0 0.0
      %3864 = vmatpush1.msra.mxu0 0.0
      %3865 = vmatprep.subr.mxu0 0.0
      %3866 = vmatpush1.msra.mxu0 0.0
      %3867 = vmatprep.subr.mxu0 0.0
      %3868 = vmatpush1.msra.mxu0 0.0
      %3869 = vmatprep.mubr.f32.mxu0 0.0
      %3870 = vmatmul.mubr.f32.gmra.mrb[0].mxu0 %v3794
      %v3871 = vpop.f32.mrb[0].mxu0
      %v3872 = vadd.f32 0.0, %v3871
      %v3873 = vpop.f32.mrb[0].mxu0
      %v3874 = vadd.f32 0.0, %v3873
      %3875 = vmatprep.mubr.f32.mxu0 0.0
      %3876 = vmatmul.mubr.f32.gmra.mrb[0].mxu0 %v3797
      %v3877 = vpop.f32.mrb[0].mxu0
      %v3878 = vadd.f32 0.0, %v3877
      %v3879 = vpop.f32.mrb[0].mxu0
      %v3880 = vadd.f32 0.0, %v3879
      %3881 = vmatprep.mubr.f32.mxu0 0.0
      %3882 = vmatmul.mubr.f32.gmra.mrb[0].mxu0 %v3800
      %v3883 = vpop.f32.mrb[0].mxu0
      %v3884 = vadd.f32 0.0, %v3883
      %v3885 = vpop.f32.mrb[0].mxu0
      %v3886 = vadd.f32 0.0, %v3885
      %3887 = vmatprep.mubr.f32.mxu0 0.0
      %3888 = vmatmul.mubr.f32.gmra.mrb[0].mxu0 %v3803
      %v3889 = vpop.f32.mrb[0].mxu0
      %v3890 = vadd.f32 0.0, %v3889
      %v3891 = vpop.f32.mrb[0].mxu0
      %v3892 = vadd.f32 0.0, %v3891
      %3893 = vdwg.mxu0
      %3894 = vmatprep.subr.mxu0 %v3596
      %3895 = vmatpush1.msra.mxu0 %v3595
      %3896 = vmatprep.subr.mxu0 %v3604
      %3897 = vmatpush1.msra.mxu0 %v3603
      %3898 = vmatprep.subr.mxu0 %v3612
      %3899 = vmatpush1.msra.mxu0 %v3611
      %3900 = vmatprep.subr.mxu0 %v3620
      %3901 = vmatpush1.msra.mxu0 %v3619
      %3902 = vmatprep.subr.mxu0 %v3727
      %3903 = vmatpush1.msra.mxu0 %v3726
      %3904 = vmatprep.subr.mxu0 %v3735
      %3905 = vmatpush1.msra.mxu0 %v3734
      %3906 = vmatprep.subr.mxu0 %v3743
      %3907 = vmatpush1.msra.mxu0 %v3742
      %3908 = vmatprep.subr.mxu0 %v3751
      %3909 = vmatpush1.msra.mxu0 %v3750
      %3910 = vmatprep.subr.mxu0 0.0
      %3911 = vmatpush1.msra.mxu0 0.0
      %3912 = vmatprep.subr.mxu0 0.0
      %3913 = vmatpush1.msra.mxu0 0.0
      %3914 = vmatprep.subr.mxu0 0.0
      %3915 = vmatpush1.msra.mxu0 0.0
      %3916 = vmatprep.subr.mxu0 0.0
      %3917 = vmatpush1.msra.mxu0 0.0
      %3918 = vmatprep.subr.mxu0 0.0
      %3919 = vmatpush1.msra.mxu0 0.0
      %3920 = vmatprep.subr.mxu0 0.0
      %3921 = vmatpush1.msra.mxu0 0.0
      %3922 = vmatprep.subr.mxu0 0.0
      %3923 = vmatpush1.msra.mxu0 0.0
      %3924 = vmatprep.subr.mxu0 0.0
      %3925 = vmatpush1.msra.mxu0 0.0
      %3926 = vmatprep.subr.mxu0 0.0
      %3927 = vmatpush1.msra.mxu0 0.0
      %3928 = vmatprep.subr.mxu0 0.0
      %3929 = vmatpush1.msra.mxu0 0.0
      %3930 = vmatprep.subr.mxu0 0.0
      %3931 = vmatpush1.msra.mxu0 0.0
      %3932 = vmatprep.subr.mxu0 0.0
      %3933 = vmatpush1.msra.mxu0 0.0
      %3934 = vmatprep.subr.mxu0 0.0
      %3935 = vmatpush1.msra.mxu0 0.0
      %3936 = vmatprep.subr.mxu0 0.0
      %3937 = vmatpush1.msra.mxu0 0.0
      %3938 = vmatprep.subr.mxu0 0.0
      %3939 = vmatpush1.msra.mxu0 0.0
      %3940 = vmatprep.subr.mxu0 0.0
      %3941 = vmatpush1.msra.mxu0 0.0
      %3942 = vmatprep.subr.mxu0 0.0
      %3943 = vmatpush1.msra.mxu0 0.0
      %3944 = vmatprep.subr.mxu0 0.0
      %3945 = vmatpush1.msra.mxu0 0.0
      %3946 = vmatprep.subr.mxu0 0.0
      %3947 = vmatpush1.msra.mxu0 0.0
      %3948 = vmatprep.subr.mxu0 0.0
      %3949 = vmatpush1.msra.mxu0 0.0
      %3950 = vmatprep.subr.mxu0 0.0
      %3951 = vmatpush1.msra.mxu0 0.0
      %3952 = vmatprep.subr.mxu0 0.0
      %3953 = vmatpush1.msra.mxu0 0.0
      %3954 = vmatprep.subr.mxu0 0.0
      %3955 = vmatpush1.msra.mxu0 0.0
      %3956 = vmatprep.subr.mxu0 0.0
      %3957 = vmatpush1.msra.mxu0 0.0
      %3958 = vmatprep.mubr.f32.mxu0 0.0
      %3959 = vmatmul.mubr.f32.gmra.mrb[0].mxu0 %v3794
      %v3960 = vpop.f32.mrb[0].mxu0
      %v3961 = vadd.f32 0.0, %v3960
      %v3962 = vpop.f32.mrb[0].mxu0
      %v3963 = vadd.f32 0.0, %v3962
      %3964 = vmatprep.mubr.f32.mxu0 0.0
      %3965 = vmatmul.mubr.f32.gmra.mrb[0].mxu0 %v3797
      %v3966 = vpop.f32.mrb[0].mxu0
      %v3967 = vadd.f32 0.0, %v3966
      %v3968 = vpop.f32.mrb[0].mxu0
      %v3969 = vadd.f32 0.0, %v3968
      %3970 = vmatprep.mubr.f32.mxu0 0.0
      %3971 = vmatmul.mubr.f32.gmra.mrb[0].mxu0 %v3800
      %v3972 = vpop.f32.mrb[0].mxu0
      %v3973 = vadd.f32 0.0, %v3972
      %v3974 = vpop.f32.mrb[0].mxu0
      %v3975 = vadd.f32 0.0, %v3974
      %3976 = vmatprep.mubr.f32.mxu0 0.0
      %3977 = vmatmul.mubr.f32.gmra.mrb[0].mxu0 %v3803
      %v3978 = vpop.f32.mrb[0].mxu0
      %v3979 = vadd.f32 0.0, %v3978
      %v3980 = vpop.f32.mrb[0].mxu0
      %v3981 = vadd.f32 0.0, %v3980
      %3982 = vdwg.mxu0
      %3983 = vmatprep.subr.mxu0 %v3598
      %3984 = vmatpush1.msra.mxu0 %v3597
      %3985 = vmatprep.subr.mxu0 %v3606
      %3986 = vmatpush1.msra.mxu0 %v3605
      %3987 = vmatprep.subr.mxu0 %v3614
      %3988 = vmatpush1.msra.mxu0 %v3613
      %3989 = vmatprep.subr.mxu0 %v3622
      %3990 = vmatpush1.msra.mxu0 %v3621
      %3991 = vmatprep.subr.mxu0 %v3729
      %3992 = vmatpush1.msra.mxu0 %v3728
      %3993 = vmatprep.subr.mxu0 %v3737
      %3994 = vmatpush1.msra.mxu0 %v3736
      %3995 = vmatprep.subr.mxu0 %v3745
      %3996 = vmatpush1.msra.mxu0 %v3744
      %3997 = vmatprep.subr.mxu0 %v3753
      %3998 = vmatpush1.msra.mxu0 %v3752
      %3999 = vmatprep.subr.mxu0 0.0
      %4000 = vmatpush1.msra.mxu0 0.0
      %4001 = vmatprep.subr.mxu0 0.0
      %4002 = vmatpush1.msra.mxu0 0.0
      %4003 = vmatprep.subr.mxu0 0.0
      %4004 = vmatpush1.msra.mxu0 0.0
      %4005 = vmatprep.subr.mxu0 0.0
      %4006 = vmatpush1.msra.mxu0 0.0
      %4007 = vmatprep.subr.mxu0 0.0
      %4008 = vmatpush1.msra.mxu0 0.0
      %4009 = vmatprep.subr.mxu0 0.0
      %4010 = vmatpush1.msra.mxu0 0.0
      %4011 = vmatprep.subr.mxu0 0.0
      %4012 = vmatpush1.msra.mxu0 0.0
      %4013 = vmatprep.subr.mxu0 0.0
      %4014 = vmatpush1.msra.mxu0 0.0
      %4015 = vmatprep.subr.mxu0 0.0
      %4016 = vmatpush1.msra.mxu0 0.0
      %4017 = vmatprep.subr.mxu0 0.0
      %4018 = vmatpush1.msra.mxu0 0.0
      %4019 = vmatprep.subr.mxu0 0.0
      %4020 = vmatpush1.msra.mxu0 0.0
      %4021 = vmatprep.subr.mxu0 0.0
      %4022 = vmatpush1.msra.mxu0 0.0
      %4023 = vmatprep.subr.mxu0 0.0
      %4024 = vmatpush1.msra.mxu0 0.0
      %4025 = vmatprep.subr.mxu0 0.0
      %4026 = vmatpush1.msra.mxu0 0.0
      %4027 = vmatprep.subr.mxu0 0.0
      %4028 = vmatpush1.msra.mxu0 0.0
      %4029 = vmatprep.subr.mxu0 0.0
      %4030 = vmatpush1.msra.mxu0 0.0
      %4031 = vmatprep.subr.mxu0 0.0
      %4032 = vmatpush1.msra.mxu0 0.0
      %4033 = vmatprep.subr.mxu0 0.0
      %4034 = vmatpush1.msra.mxu0 0.0
      %4035 = vmatprep.subr.mxu0 0.0
      %4036 = vmatpush1.msra.mxu0 0.0
      %4037 = vmatprep.subr.mxu0 0.0
      %4038 = vmatpush1.msra.mxu0 0.0
      %4039 = vmatprep.subr.mxu0 0.0
      %4040 = vmatpush1.msra.mxu0 0.0
      %4041 = vmatprep.subr.mxu0 0.0
      %4042 = vmatpush1.msra.mxu0 0.0
      %4043 = vmatprep.subr.mxu0 0.0
      %4044 = vmatpush1.msra.mxu0 0.0
      %4045 = vmatprep.subr.mxu0 0.0
      %4046 = vmatpush1.msra.mxu0 0.0
      %4047 = vmatprep.mubr.f32.mxu0 0.0
      %4048 = vmatmul.mubr.f32.gmra.mrb[0].mxu0 %v3794
      %v4049 = vpop.f32.mrb[0].mxu0
      %v4050 = vadd.f32 0.0, %v4049
      %v4051 = vpop.f32.mrb[0].mxu0
      %v4052 = vadd.f32 0.0, %v4051
      %4053 = vmatprep.mubr.f32.mxu0 0.0
      %4054 = vmatmul.mubr.f32.gmra.mrb[0].mxu0 %v3797
      %v4055 = vpop.f32.mrb[0].mxu0
      %v4056 = vadd.f32 0.0, %v4055
      %v4057 = vpop.f32.mrb[0].mxu0
      %v4058 = vadd.f32 0.0, %v4057
      %4059 = vmatprep.mubr.f32.mxu0 0.0
      %4060 = vmatmul.mubr.f32.gmra.mrb[0].mxu0 %v3800
      %v4061 = vpop.f32.mrb[0].mxu0
      %v4062 = vadd.f32 0.0, %v4061
      %v4063 = vpop.f32.mrb[0].mxu0
      %v4064 = vadd.f32 0.0, %v4063
      %4065 = vmatprep.mubr.f32.mxu0 0.0
      %4066 = vmatmul.mubr.f32.gmra.mrb[0].mxu0 %v3803
      %v4067 = vpop.f32.mrb[0].mxu0
      %v4068 = vadd.f32 0.0, %v4067
      %v4069 = vpop.f32.mrb[0].mxu0
      %v4070 = vadd.f32 0.0, %v4069
      %4071 = vdwg.mxu0
      %4072 = vmatprep.subr.mxu0 %v3600
      %4073 = vmatpush1.msra.mxu0 %v3599
      %4074 = vmatprep.subr.mxu0 %v3608
      %4075 = vmatpush1.msra.mxu0 %v3607
      %4076 = vmatprep.subr.mxu0 %v3616
      %4077 = vmatpush1.msra.mxu0 %v3615
      %4078 = vmatprep.subr.mxu0 %v3624
      %4079 = vmatpush1.msra.mxu0 %v3623
      %4080 = vmatprep.subr.mxu0 %v3731
      %4081 = vmatpush1.msra.mxu0 %v3730
      %4082 = vmatprep.subr.mxu0 %v3739
      %4083 = vmatpush1.msra.mxu0 %v3738
      %4084 = vmatprep.subr.mxu0 %v3747
      %4085 = vmatpush1.msra.mxu0 %v3746
      %4086 = vmatprep.subr.mxu0 %v3755
      %4087 = vmatpush1.msra.mxu0 %v3754
      %4088 = vmatprep.subr.mxu0 0.0
      %4089 = vmatpush1.msra.mxu0 0.0
      %4090 = vmatprep.subr.mxu0 0.0
      %4091 = vmatpush1.msra.mxu0 0.0
      %4092 = vmatprep.subr.mxu0 0.0
      %4093 = vmatpush1.msra.mxu0 0.0
      %4094 = vmatprep.subr.mxu0 0.0
      %4095 = vmatpush1.msra.mxu0 0.0
      %4096 = vmatprep.subr.mxu0 0.0
      %4097 = vmatpush1.msra.mxu0 0.0
      %4098 = vmatprep.subr.mxu0 0.0
      %4099 = vmatpush1.msra.mxu0 0.0
      %4100 = vmatprep.subr.mxu0 0.0
      %4101 = vmatpush1.msra.mxu0 0.0
      %4102 = vmatprep.subr.mxu0 0.0
      %4103 = vmatpush1.msra.mxu0 0.0
      %4104 = vmatprep.subr.mxu0 0.0
      %4105 = vmatpush1.msra.mxu0 0.0
      %4106 = vmatprep.subr.mxu0 0.0
      %4107 = vmatpush1.msra.mxu0 0.0
      %4108 = vmatprep.subr.mxu0 0.0
      %4109 = vmatpush1.msra.mxu0 0.0
      %4110 = vmatprep.subr.mxu0 0.0
      %4111 = vmatpush1.msra.mxu0 0.0
      %4112 = vmatprep.subr.mxu0 0.0
      %4113 = vmatpush1.msra.mxu0 0.0
      %4114 = vmatprep.subr.mxu0 0.0
      %4115 = vmatpush1.msra.mxu0 0.0
      %4116 = vmatprep.subr.mxu0 0.0
      %4117 = vmatpush1.msra.mxu0 0.0
      %4118 = vmatprep.subr.mxu0 0.0
      %4119 = vmatpush1.msra.mxu0 0.0
      %4120 = vmatprep.subr.mxu0 0.0
      %4121 = vmatpush1.msra.mxu0 0.0
      %4122 = vmatprep.subr.mxu0 0.0
      %4123 = vmatpush1.msra.mxu0 0.0
      %4124 = vmatprep.subr.mxu0 0.0
      %4125 = vmatpush1.msra.mxu0 0.0
      %4126 = vmatprep.subr.mxu0 0.0
      %4127 = vmatpush1.msra.mxu0 0.0
      %4128 = vmatprep.subr.mxu0 0.0
      %4129 = vmatpush1.msra.mxu0 0.0
      %4130 = vmatprep.subr.mxu0 0.0
      %4131 = vmatpush1.msra.mxu0 0.0
      %4132 = vmatprep.subr.mxu0 0.0
      %4133 = vmatpush1.msra.mxu0 0.0
      %4134 = vmatprep.subr.mxu0 0.0
      %4135 = vmatpush1.msra.mxu0 0.0
      %4136 = vmatprep.mubr.f32.mxu0 0.0
      %4137 = vmatmul.mubr.f32.gmra.mrb[0].mxu0 %v3794
      %v4138 = vpop.f32.mrb[0].mxu0
      %v4139 = vadd.f32 0.0, %v4138
      %v4140 = vpop.f32.mrb[0].mxu0
      %v4141 = vadd.f32 0.0, %v4140
      %4142 = vmatprep.mubr.f32.mxu0 0.0
      %4143 = vmatmul.mubr.f32.gmra.mrb[0].mxu0 %v3797
      %v4144 = vpop.f32.mrb[0].mxu0
      %v4145 = vadd.f32 0.0, %v4144
      %v4146 = vpop.f32.mrb[0].mxu0
      %v4147 = vadd.f32 0.0, %v4146
      %4148 = vmatprep.mubr.f32.mxu0 0.0
      %4149 = vmatmul.mubr.f32.gmra.mrb[0].mxu0 %v3800
      %v4150 = vpop.f32.mrb[0].mxu0
      %v4151 = vadd.f32 0.0, %v4150
      %v4152 = vpop.f32.mrb[0].mxu0
      %v4153 = vadd.f32 0.0, %v4152
      %4154 = vmatprep.mubr.f32.mxu0 0.0
      %4155 = vmatmul.mubr.f32.gmra.mrb[0].mxu0 %v3803
      %v4156 = vpop.f32.mrb[0].mxu0
      %v4157 = vadd.f32 0.0, %v4156
      %v4158 = vpop.f32.mrb[0].mxu0
      %v4159 = vadd.f32 0.0, %v4158
      %4160 = vdwg.mxu0
      %s4161 = scalar_lea.vmem %s3, 160
      %v4162 = vld [vmem:[%s4161] sm:$0xff]
      %v4163 = vld [vmem:[%s4161 + $0x8] sm:$0xff]
      %v4164 = vld [vmem:[%s4161 + $0x10] sm:$0xff]
      %v4165 = vld [vmem:[%s4161 + $0x18] sm:$0xff]
      %4167 = vset.pattern.permute.xlu0 0
      %4168 = vperm.xlu0 %4167, %v4162
      %v4169 = vpop.permute.xlu0 %4168
      %4172 = vset.pattern.permute.xlu0 0
      %4173 = vperm.xlu0 %4172, %v4163
      %v4174 = vpop.permute.xlu0 %4173
      %4177 = vset.pattern.permute.xlu0 0
      %4178 = vperm.xlu0 %4177, %v4164
      %v4179 = vpop.permute.xlu0 %4178
      %4182 = vset.pattern.permute.xlu0 0
      %4183 = vperm.xlu0 %4182, %v4165
      %v4184 = vpop.permute.xlu0 %4183
      %v4186 = vmul.f32 %v3872, %v4169
      %v4187 = vmul.f32 %v3874, %v4169
      %v4188 = vmul.f32 %v3961, %v4169
      %v4189 = vmul.f32 %v3963, %v4169
      %v4190 = vmul.f32 %v4050, %v4169
      %v4191 = vmul.f32 %v4052, %v4169
      %v4192 = vmul.f32 %v4139, %v4169
      %v4193 = vmul.f32 %v4141, %v4169
      %v4194 = vmul.f32 %v3878, %v4174
      %v4195 = vmul.f32 %v3880, %v4174
      %v4196 = vmul.f32 %v3967, %v4174
      %v4197 = vmul.f32 %v3969, %v4174
      %v4198 = vmul.f32 %v4056, %v4174
      %v4199 = vmul.f32 %v4058, %v4174
      %v4200 = vmul.f32 %v4145, %v4174
      %v4201 = vmul.f32 %v4147, %v4174
      %v4202 = vmul.f32 %v3884, %v4179
      %v4203 = vmul.f32 %v3886, %v4179
      %v4204 = vmul.f32 %v3973, %v4179
      %v4205 = vmul.f32 %v3975, %v4179
      %v4206 = vmul.f32 %v4062, %v4179
      %v4207 = vmul.f32 %v4064, %v4179
      %v4208 = vmul.f32 %v4151, %v4179
      %v4209 = vmul.f32 %v4153, %v4179
      %v4210 = vmul.f32 %v3890, %v4184
      %v4211 = vmul.f32 %v3892, %v4184
      %v4212 = vmul.f32 %v3979, %v4184
      %v4213 = vmul.f32 %v3981, %v4184
      %v4214 = vmul.f32 %v4068, %v4184
      %v4215 = vmul.f32 %v4070, %v4184
      %v4216 = vmul.f32 %v4157, %v4184
      %v4217 = vmul.f32 %v4159, %v4184
      %s4218 = scalar_lea.vmem %s4, 160
      %v4219 = vld [vmem:[%s4218] sm:$0xff]
      %v4220 = vld [vmem:[%s4218 + $0x8] sm:$0xff]
      %v4221 = vld [vmem:[%s4218 + $0x10] sm:$0xff]
      %v4222 = vld [vmem:[%s4218 + $0x18] sm:$0xff]
      %4224 = vset.pattern.permute.xlu0 0
      %4225 = vperm.xlu0 %4224, %v4219
      %v4226 = vpop.permute.xlu0 %4225
      %4229 = vset.pattern.permute.xlu0 0
      %4230 = vperm.xlu0 %4229, %v4220
      %v4231 = vpop.permute.xlu0 %4230
      %4234 = vset.pattern.permute.xlu0 0
      %4235 = vperm.xlu0 %4234, %v4221
      %v4236 = vpop.permute.xlu0 %4235
      %4239 = vset.pattern.permute.xlu0 0
      %4240 = vperm.xlu0 %4239, %v4222
      %v4241 = vpop.permute.xlu0 %4240
      %v4243 = vadd.f32 %v4186, %v4226
      %v4244 = vadd.f32 %v4187, %v4226
      %v4245 = vadd.f32 %v4188, %v4226
      %v4246 = vadd.f32 %v4189, %v4226
      %v4247 = vadd.f32 %v4190, %v4226
      %v4248 = vadd.f32 %v4191, %v4226
      %v4249 = vadd.f32 %v4192, %v4226
      %v4250 = vadd.f32 %v4193, %v4226
      %v4251 = vadd.f32 %v4194, %v4231
      %v4252 = vadd.f32 %v4195, %v4231
      %v4253 = vadd.f32 %v4196, %v4231
      %v4254 = vadd.f32 %v4197, %v4231
      %v4255 = vadd.f32 %v4198, %v4231
      %v4256 = vadd.f32 %v4199, %v4231
      %v4257 = vadd.f32 %v4200, %v4231
      %v4258 = vadd.f32 %v4201, %v4231
      %v4259 = vadd.f32 %v4202, %v4236
      %v4260 = vadd.f32 %v4203, %v4236
      %v4261 = vadd.f32 %v4204, %v4236
      %v4262 = vadd.f32 %v4205, %v4236
      %v4263 = vadd.f32 %v4206, %v4236
      %v4264 = vadd.f32 %v4207, %v4236
      %v4265 = vadd.f32 %v4208, %v4236
      %v4266 = vadd.f32 %v4209, %v4236
      %v4267 = vadd.f32 %v4210, %v4241
      %v4268 = vadd.f32 %v4211, %v4241
      %v4269 = vadd.f32 %v4212, %v4241
      %v4270 = vadd.f32 %v4213, %v4241
      %v4271 = vadd.f32 %v4214, %v4241
      %v4272 = vadd.f32 %v4215, %v4241
      %v4273 = vadd.f32 %v4216, %v4241
      %v4274 = vadd.f32 %v4217, %v4241
      %v4275 = vmax.f32 %v4243, 0.0
      %v4276 = vmax.f32 %v4244, 0.0
      %v4277 = vmax.f32 %v4245, 0.0
      %v4278 = vmax.f32 %v4246, 0.0
      %v4279 = vmax.f32 %v4247, 0.0
      %v4280 = vmax.f32 %v4248, 0.0
      %v4281 = vmax.f32 %v4249, 0.0
      %v4282 = vmax.f32 %v4250, 0.0
      %v4283 = vmax.f32 %v4251, 0.0
      %v4284 = vmax.f32 %v4252, 0.0
      %v4285 = vmax.f32 %v4253, 0.0
      %v4286 = vmax.f32 %v4254, 0.0
      %v4287 = vmax.f32 %v4255, 0.0
      %v4288 = vmax.f32 %v4256, 0.0
      %v4289 = vmax.f32 %v4257, 0.0
      %v4290 = vmax.f32 %v4258, 0.0
      %v4291 = vmax.f32 %v4259, 0.0
      %v4292 = vmax.f32 %v4260, 0.0
      %v4293 = vmax.f32 %v4261, 0.0
      %v4294 = vmax.f32 %v4262, 0.0
      %v4295 = vmax.f32 %v4263, 0.0
      %v4296 = vmax.f32 %v4264, 0.0
      %v4297 = vmax.f32 %v4265, 0.0
      %v4298 = vmax.f32 %v4266, 0.0
      %v4299 = vmax.f32 %v4267, 0.0
      %v4300 = vmax.f32 %v4268, 0.0
      %v4301 = vmax.f32 %v4269, 0.0
      %v4302 = vmax.f32 %v4270, 0.0
      %v4303 = vmax.f32 %v4271, 0.0
      %v4304 = vmax.f32 %v4272, 0.0
      %v4305 = vmax.f32 %v4273, 0.0
      %v4306 = vmax.f32 %v4274, 0.0
      %4339 = vrot.lane.b32.xlu0 %v4275, 96
      %v4340 = vpop.permute.xlu0 %4339
      %4341 = vrot.lane.b32.xlu0 %v4276, 96
      %v4342 = vpop.permute.xlu0 %4341
      %4343 = vrot.lane.b32.xlu0 %v4277, 96
      %v4344 = vpop.permute.xlu0 %4343
      %4345 = vrot.lane.b32.xlu0 %v4278, 96
      %v4346 = vpop.permute.xlu0 %4345
      %4347 = vrot.lane.b32.xlu0 %v4279, 96
      %v4348 = vpop.permute.xlu0 %4347
      %4349 = vrot.lane.b32.xlu0 %v4280, 96
      %v4350 = vpop.permute.xlu0 %4349
      %4351 = vrot.lane.b32.xlu0 %v4281, 96
      %v4352 = vpop.permute.xlu0 %4351
      %4353 = vrot.lane.b32.xlu0 %v4282, 96
      %v4354 = vpop.permute.xlu0 %4353
      %4355 = vrot.lane.b32.xlu0 0.0, 96
      %v4356 = vpop.permute.xlu0 %4355
      %4357 = vrot.lane.b32.xlu0 %v4283, 96
      %v4358 = vpop.permute.xlu0 %4357
      %4359 = vrot.lane.b32.xlu0 %v4284, 96
      %v4360 = vpop.permute.xlu0 %4359
      %4361 = vrot.lane.b32.xlu0 %v4285, 96
      %v4362 = vpop.permute.xlu0 %4361
      %4363 = vrot.lane.b32.xlu0 %v4286, 96
      %v4364 = vpop.permute.xlu0 %4363
      %4365 = vrot.lane.b32.xlu0 %v4287, 96
      %v4366 = vpop.permute.xlu0 %4365
      %4367 = vrot.lane.b32.xlu0 %v4288, 96
      %v4368 = vpop.permute.xlu0 %4367
      %4369 = vrot.lane.b32.xlu0 %v4289, 96
      %v4370 = vpop.permute.xlu0 %4369
      %4371 = vrot.lane.b32.xlu0 %v4290, 96
      %v4372 = vpop.permute.xlu0 %4371
      %4373 = vrot.lane.b32.xlu0 %v4291, 96
      %v4374 = vpop.permute.xlu0 %4373
      %4375 = vrot.lane.b32.xlu0 %v4292, 96
      %v4376 = vpop.permute.xlu0 %4375
      %4377 = vrot.lane.b32.xlu0 %v4293, 96
      %v4378 = vpop.permute.xlu0 %4377
      %4379 = vrot.lane.b32.xlu0 %v4294, 96
      %v4380 = vpop.permute.xlu0 %4379
      %4381 = vrot.lane.b32.xlu0 %v4295, 96
      %v4382 = vpop.permute.xlu0 %4381
      %4383 = vrot.lane.b32.xlu0 %v4296, 96
      %v4384 = vpop.permute.xlu0 %4383
      %4385 = vrot.lane.b32.xlu0 %v4297, 96
      %v4386 = vpop.permute.xlu0 %4385
      %4387 = vrot.lane.b32.xlu0 %v4298, 96
      %v4388 = vpop.permute.xlu0 %4387
      %4389 = vrot.lane.b32.xlu0 %v4299, 96
      %v4390 = vpop.permute.xlu0 %4389
      %4391 = vrot.lane.b32.xlu0 %v4300, 96
      %v4392 = vpop.permute.xlu0 %4391
      %4393 = vrot.lane.b32.xlu0 %v4301, 96
      %v4394 = vpop.permute.xlu0 %4393
      %4395 = vrot.lane.b32.xlu0 %v4302, 96
      %v4396 = vpop.permute.xlu0 %4395
      %4397 = vrot.lane.b32.xlu0 %v4303, 96
      %v4398 = vpop.permute.xlu0 %4397
      %4399 = vrot.lane.b32.xlu0 %v4304, 96
      %v4400 = vpop.permute.xlu0 %4399
      %4401 = vrot.lane.b32.xlu0 %v4305, 96
      %v4402 = vpop.permute.xlu0 %4401
      %4403 = vrot.lane.b32.xlu0 %v4306, 96
      %v4404 = vpop.permute.xlu0 %4403
      %vm4405 = vcmask 785408
      %v4406 = vsel %vm4405, %v4340, %v4342
      %v4407 = vsel %vm4405, %v4342, %v4344
      %v4408 = vsel %vm4405, %v4344, %v4346
      %v4409 = vsel %vm4405, %v4346, %v4348
      %v4410 = vsel %vm4405, %v4348, %v4350
      %v4411 = vsel %vm4405, %v4350, %v4352
      %v4412 = vsel %vm4405, %v4352, %v4354
      %v4413 = vsel %vm4405, %v4354, %v4356
      %v4414 = vsel %vm4405, %v4358, %v4360
      %v4415 = vsel %vm4405, %v4360, %v4362
      %v4416 = vsel %vm4405, %v4362, %v4364
      %v4417 = vsel %vm4405, %v4364, %v4366
      %v4418 = vsel %vm4405, %v4366, %v4368
      %v4419 = vsel %vm4405, %v4368, %v4370
      %v4420 = vsel %vm4405, %v4370, %v4372
      %v4421 = vsel %vm4405, %v4372, %v4356
      %v4422 = vsel %vm4405, %v4374, %v4376
      %v4423 = vsel %vm4405, %v4376, %v4378
      %v4424 = vsel %vm4405, %v4378, %v4380
      %v4425 = vsel %vm4405, %v4380, %v4382
      %v4426 = vsel %vm4405, %v4382, %v4384
      %v4427 = vsel %vm4405, %v4384, %v4386
      %v4428 = vsel %vm4405, %v4386, %v4388
      %v4429 = vsel %vm4405, %v4388, %v4356
      %v4430 = vsel %vm4405, %v4390, %v4392
      %v4431 = vsel %vm4405, %v4392, %v4394
      %v4432 = vsel %vm4405, %v4394, %v4396
      %v4433 = vsel %vm4405, %v4396, %v4398
      %v4434 = vsel %vm4405, %v4398, %v4400
      %v4435 = vsel %vm4405, %v4400, %v4402
      %v4436 = vsel %vm4405, %v4402, %v4404
      %v4437 = vsel %vm4405, %v4404, %v4356
      %s4470 = scalar_lea.vmem %s2, 160
      %v4471 = vld [vmem:[%s4470] sm:$0xff]
      %v4472 = vld [vmem:[%s4470 + $0x8] sm:$0xff]
      %v4473 = vld [vmem:[%s4470 + $0x10] sm:$0xff]
      %v4474 = vld [vmem:[%s4470 + $0x18] sm:$0xff]
      %v4476 = vsel %vm1064, %v4471, 0
      %v4479 = vsel %vm1064, %v4472, 0
      %v4482 = vsel %vm1064, %v4473, 0
      %v4485 = vsel %vm1064, %v4474, 0
      %4487 = vmatprep.subr.mxu0 %v4276
      %4488 = vmatpush1.msra.mxu0 %v4275
      %4489 = vmatprep.subr.mxu0 %v4284
      %4490 = vmatpush1.msra.mxu0 %v4283
      %4491 = vmatprep.subr.mxu0 %v4292
      %4492 = vmatpush1.msra.mxu0 %v4291
      %4493 = vmatprep.subr.mxu0 %v4300
      %4494 = vmatpush1.msra.mxu0 %v4299
      %4495 = vmatprep.subr.mxu0 %v4407
      %4496 = vmatpush1.msra.mxu0 %v4406
      %4497 = vmatprep.subr.mxu0 %v4415
      %4498 = vmatpush1.msra.mxu0 %v4414
      %4499 = vmatprep.subr.mxu0 %v4423
      %4500 = vmatpush1.msra.mxu0 %v4422
      %4501 = vmatprep.subr.mxu0 %v4431
      %4502 = vmatpush1.msra.mxu0 %v4430
      %4503 = vmatprep.subr.mxu0 0.0
      %4504 = vmatpush1.msra.mxu0 0.0
      %4505 = vmatprep.subr.mxu0 0.0
      %4506 = vmatpush1.msra.mxu0 0.0
      %4507 = vmatprep.subr.mxu0 0.0
      %4508 = vmatpush1.msra.mxu0 0.0
      %4509 = vmatprep.subr.mxu0 0.0
      %4510 = vmatpush1.msra.mxu0 0.0
      %4511 = vmatprep.subr.mxu0 0.0
      %4512 = vmatpush1.msra.mxu0 0.0
      %4513 = vmatprep.subr.mxu0 0.0
      %4514 = vmatpush1.msra.mxu0 0.0
      %4515 = vmatprep.subr.mxu0 0.0
      %4516 = vmatpush1.msra.mxu0 0.0
      %4517 = vmatprep.subr.mxu0 0.0
      %4518 = vmatpush1.msra.mxu0 0.0
      %4519 = vmatprep.subr.mxu0 0.0
      %4520 = vmatpush1.msra.mxu0 0.0
      %4521 = vmatprep.subr.mxu0 0.0
      %4522 = vmatpush1.msra.mxu0 0.0
      %4523 = vmatprep.subr.mxu0 0.0
      %4524 = vmatpush1.msra.mxu0 0.0
      %4525 = vmatprep.subr.mxu0 0.0
      %4526 = vmatpush1.msra.mxu0 0.0
      %4527 = vmatprep.subr.mxu0 0.0
      %4528 = vmatpush1.msra.mxu0 0.0
      %4529 = vmatprep.subr.mxu0 0.0
      %4530 = vmatpush1.msra.mxu0 0.0
      %4531 = vmatprep.subr.mxu0 0.0
      %4532 = vmatpush1.msra.mxu0 0.0
      %4533 = vmatprep.subr.mxu0 0.0
      %4534 = vmatpush1.msra.mxu0 0.0
      %4535 = vmatprep.subr.mxu0 0.0
      %4536 = vmatpush1.msra.mxu0 0.0
      %4537 = vmatprep.subr.mxu0 0.0
      %4538 = vmatpush1.msra.mxu0 0.0
      %4539 = vmatprep.subr.mxu0 0.0
      %4540 = vmatpush1.msra.mxu0 0.0
      %4541 = vmatprep.subr.mxu0 0.0
      %4542 = vmatpush1.msra.mxu0 0.0
      %4543 = vmatprep.subr.mxu0 0.0
      %4544 = vmatpush1.msra.mxu0 0.0
      %4545 = vmatprep.subr.mxu0 0.0
      %4546 = vmatpush1.msra.mxu0 0.0
      %4547 = vmatprep.subr.mxu0 0.0
      %4548 = vmatpush1.msra.mxu0 0.0
      %4549 = vmatprep.subr.mxu0 0.0
      %4550 = vmatpush1.msra.mxu0 0.0
      %4551 = vmatprep.mubr.f32.mxu0 0.0
      %4552 = vmatmul.mubr.f32.gmra.mrb[0].mxu0 %v4476
      %v4553 = vpop.f32.mrb[0].mxu0
      %v4554 = vadd.f32 0.0, %v4553
      %v4555 = vpop.f32.mrb[0].mxu0
      %v4556 = vadd.f32 0.0, %v4555
      %4557 = vmatprep.mubr.f32.mxu0 0.0
      %4558 = vmatmul.mubr.f32.gmra.mrb[0].mxu0 %v4479
      %v4559 = vpop.f32.mrb[0].mxu0
      %v4560 = vadd.f32 0.0, %v4559
      %v4561 = vpop.f32.mrb[0].mxu0
      %v4562 = vadd.f32 0.0, %v4561
      %4563 = vmatprep.mubr.f32.mxu0 0.0
      %4564 = vmatmul.mubr.f32.gmra.mrb[0].mxu0 %v4482
      %v4565 = vpop.f32.mrb[0].mxu0
      %v4566 = vadd.f32 0.0, %v4565
      %v4567 = vpop.f32.mrb[0].mxu0
      %v4568 = vadd.f32 0.0, %v4567
      %4569 = vmatprep.mubr.f32.mxu0 0.0
      %4570 = vmatmul.mubr.f32.gmra.mrb[0].mxu0 %v4485
      %v4571 = vpop.f32.mrb[0].mxu0
      %v4572 = vadd.f32 0.0, %v4571
      %v4573 = vpop.f32.mrb[0].mxu0
      %v4574 = vadd.f32 0.0, %v4573
      %4575 = vdwg.mxu0
      %4576 = vmatprep.subr.mxu0 %v4278
      %4577 = vmatpush1.msra.mxu0 %v4277
      %4578 = vmatprep.subr.mxu0 %v4286
      %4579 = vmatpush1.msra.mxu0 %v4285
      %4580 = vmatprep.subr.mxu0 %v4294
      %4581 = vmatpush1.msra.mxu0 %v4293
      %4582 = vmatprep.subr.mxu0 %v4302
      %4583 = vmatpush1.msra.mxu0 %v4301
      %4584 = vmatprep.subr.mxu0 %v4409
      %4585 = vmatpush1.msra.mxu0 %v4408
      %4586 = vmatprep.subr.mxu0 %v4417
      %4587 = vmatpush1.msra.mxu0 %v4416
      %4588 = vmatprep.subr.mxu0 %v4425
      %4589 = vmatpush1.msra.mxu0 %v4424
      %4590 = vmatprep.subr.mxu0 %v4433
      %4591 = vmatpush1.msra.mxu0 %v4432
      %4592 = vmatprep.subr.mxu0 0.0
      %4593 = vmatpush1.msra.mxu0 0.0
      %4594 = vmatprep.subr.mxu0 0.0
      %4595 = vmatpush1.msra.mxu0 0.0
      %4596 = vmatprep.subr.mxu0 0.0
      %4597 = vmatpush1.msra.mxu0 0.0
      %4598 = vmatprep.subr.mxu0 0.0
      %4599 = vmatpush1.msra.mxu0 0.0
      %4600 = vmatprep.subr.mxu0 0.0
      %4601 = vmatpush1.msra.mxu0 0.0
      %4602 = vmatprep.subr.mxu0 0.0
      %4603 = vmatpush1.msra.mxu0 0.0
      %4604 = vmatprep.subr.mxu0 0.0
      %4605 = vmatpush1.msra.mxu0 0.0
      %4606 = vmatprep.subr.mxu0 0.0
      %4607 = vmatpush1.msra.mxu0 0.0
      %4608 = vmatprep.subr.mxu0 0.0
      %4609 = vmatpush1.msra.mxu0 0.0
      %4610 = vmatprep.subr.mxu0 0.0
      %4611 = vmatpush1.msra.mxu0 0.0
      %4612 = vmatprep.subr.mxu0 0.0
      %4613 = vmatpush1.msra.mxu0 0.0
      %4614 = vmatprep.subr.mxu0 0.0
      %4615 = vmatpush1.msra.mxu0 0.0
      %4616 = vmatprep.subr.mxu0 0.0
      %4617 = vmatpush1.msra.mxu0 0.0
      %4618 = vmatprep.subr.mxu0 0.0
      %4619 = vmatpush1.msra.mxu0 0.0
      %4620 = vmatprep.subr.mxu0 0.0
      %4621 = vmatpush1.msra.mxu0 0.0
      %4622 = vmatprep.subr.mxu0 0.0
      %4623 = vmatpush1.msra.mxu0 0.0
      %4624 = vmatprep.subr.mxu0 0.0
      %4625 = vmatpush1.msra.mxu0 0.0
      %4626 = vmatprep.subr.mxu0 0.0
      %4627 = vmatpush1.msra.mxu0 0.0
      %4628 = vmatprep.subr.mxu0 0.0
      %4629 = vmatpush1.msra.mxu0 0.0
      %4630 = vmatprep.subr.mxu0 0.0
      %4631 = vmatpush1.msra.mxu0 0.0
      %4632 = vmatprep.subr.mxu0 0.0
      %4633 = vmatpush1.msra.mxu0 0.0
      %4634 = vmatprep.subr.mxu0 0.0
      %4635 = vmatpush1.msra.mxu0 0.0
      %4636 = vmatprep.subr.mxu0 0.0
      %4637 = vmatpush1.msra.mxu0 0.0
      %4638 = vmatprep.subr.mxu0 0.0
      %4639 = vmatpush1.msra.mxu0 0.0
      %4640 = vmatprep.mubr.f32.mxu0 0.0
      %4641 = vmatmul.mubr.f32.gmra.mrb[0].mxu0 %v4476
      %v4642 = vpop.f32.mrb[0].mxu0
      %v4643 = vadd.f32 0.0, %v4642
      %v4644 = vpop.f32.mrb[0].mxu0
      %v4645 = vadd.f32 0.0, %v4644
      %4646 = vmatprep.mubr.f32.mxu0 0.0
      %4647 = vmatmul.mubr.f32.gmra.mrb[0].mxu0 %v4479
      %v4648 = vpop.f32.mrb[0].mxu0
      %v4649 = vadd.f32 0.0, %v4648
      %v4650 = vpop.f32.mrb[0].mxu0
      %v4651 = vadd.f32 0.0, %v4650
      %4652 = vmatprep.mubr.f32.mxu0 0.0
      %4653 = vmatmul.mubr.f32.gmra.mrb[0].mxu0 %v4482
      %v4654 = vpop.f32.mrb[0].mxu0
      %v4655 = vadd.f32 0.0, %v4654
      %v4656 = vpop.f32.mrb[0].mxu0
      %v4657 = vadd.f32 0.0, %v4656
      %4658 = vmatprep.mubr.f32.mxu0 0.0
      %4659 = vmatmul.mubr.f32.gmra.mrb[0].mxu0 %v4485
      %v4660 = vpop.f32.mrb[0].mxu0
      %v4661 = vadd.f32 0.0, %v4660
      %v4662 = vpop.f32.mrb[0].mxu0
      %v4663 = vadd.f32 0.0, %v4662
      %4664 = vdwg.mxu0
      %4665 = vmatprep.subr.mxu0 %v4280
      %4666 = vmatpush1.msra.mxu0 %v4279
      %4667 = vmatprep.subr.mxu0 %v4288
      %4668 = vmatpush1.msra.mxu0 %v4287
      %4669 = vmatprep.subr.mxu0 %v4296
      %4670 = vmatpush1.msra.mxu0 %v4295
      %4671 = vmatprep.subr.mxu0 %v4304
      %4672 = vmatpush1.msra.mxu0 %v4303
      %4673 = vmatprep.subr.mxu0 %v4411
      %4674 = vmatpush1.msra.mxu0 %v4410
      %4675 = vmatprep.subr.mxu0 %v4419
      %4676 = vmatpush1.msra.mxu0 %v4418
      %4677 = vmatprep.subr.mxu0 %v4427
      %4678 = vmatpush1.msra.mxu0 %v4426
      %4679 = vmatprep.subr.mxu0 %v4435
      %4680 = vmatpush1.msra.mxu0 %v4434
      %4681 = vmatprep.subr.mxu0 0.0
      %4682 = vmatpush1.msra.mxu0 0.0
      %4683 = vmatprep.subr.mxu0 0.0
      %4684 = vmatpush1.msra.mxu0 0.0
      %4685 = vmatprep.subr.mxu0 0.0
      %4686 = vmatpush1.msra.mxu0 0.0
      %4687 = vmatprep.subr.mxu0 0.0
      %4688 = vmatpush1.msra.mxu0 0.0
      %4689 = vmatprep.subr.mxu0 0.0
      %4690 = vmatpush1.msra.mxu0 0.0
      %4691 = vmatprep.subr.mxu0 0.0
      %4692 = vmatpush1.msra.mxu0 0.0
      %4693 = vmatprep.subr.mxu0 0.0
      %4694 = vmatpush1.msra.mxu0 0.0
      %4695 = vmatprep.subr.mxu0 0.0
      %4696 = vmatpush1.msra.mxu0 0.0
      %4697 = vmatprep.subr.mxu0 0.0
      %4698 = vmatpush1.msra.mxu0 0.0
      %4699 = vmatprep.subr.mxu0 0.0
      %4700 = vmatpush1.msra.mxu0 0.0
      %4701 = vmatprep.subr.mxu0 0.0
      %4702 = vmatpush1.msra.mxu0 0.0
      %4703 = vmatprep.subr.mxu0 0.0
      %4704 = vmatpush1.msra.mxu0 0.0
      %4705 = vmatprep.subr.mxu0 0.0
      %4706 = vmatpush1.msra.mxu0 0.0
      %4707 = vmatprep.subr.mxu0 0.0
      %4708 = vmatpush1.msra.mxu0 0.0
      %4709 = vmatprep.subr.mxu0 0.0
      %4710 = vmatpush1.msra.mxu0 0.0
      %4711 = vmatprep.subr.mxu0 0.0
      %4712 = vmatpush1.msra.mxu0 0.0
      %4713 = vmatprep.subr.mxu0 0.0
      %4714 = vmatpush1.msra.mxu0 0.0
      %4715 = vmatprep.subr.mxu0 0.0
      %4716 = vmatpush1.msra.mxu0 0.0
      %4717 = vmatprep.subr.mxu0 0.0
      %4718 = vmatpush1.msra.mxu0 0.0
      %4719 = vmatprep.subr.mxu0 0.0
      %4720 = vmatpush1.msra.mxu0 0.0
      %4721 = vmatprep.subr.mxu0 0.0
      %4722 = vmatpush1.msra.mxu0 0.0
      %4723 = vmatprep.subr.mxu0 0.0
      %4724 = vmatpush1.msra.mxu0 0.0
      %4725 = vmatprep.subr.mxu0 0.0
      %4726 = vmatpush1.msra.mxu0 0.0
      %4727 = vmatprep.subr.mxu0 0.0
      %4728 = vmatpush1.msra.mxu0 0.0
      %4729 = vmatprep.mubr.f32.mxu0 0.0
      %4730 = vmatmul.mubr.f32.gmra.mrb[0].mxu0 %v4476
      %v4731 = vpop.f32.mrb[0].mxu0
      %v4732 = vadd.f32 0.0, %v4731
      %v4733 = vpop.f32.mrb[0].mxu0
      %v4734 = vadd.f32 0.0, %v4733
      %4735 = vmatprep.mubr.f32.mxu0 0.0
      %4736 = vmatmul.mubr.f32.gmra.mrb[0].mxu0 %v4479
      %v4737 = vpop.f32.mrb[0].mxu0
      %v4738 = vadd.f32 0.0, %v4737
      %v4739 = vpop.f32.mrb[0].mxu0
      %v4740 = vadd.f32 0.0, %v4739
      %4741 = vmatprep.mubr.f32.mxu0 0.0
      %4742 = vmatmul.mubr.f32.gmra.mrb[0].mxu0 %v4482
      %v4743 = vpop.f32.mrb[0].mxu0
      %v4744 = vadd.f32 0.0, %v4743
      %v4745 = vpop.f32.mrb[0].mxu0
      %v4746 = vadd.f32 0.0, %v4745
      %4747 = vmatprep.mubr.f32.mxu0 0.0
      %4748 = vmatmul.mubr.f32.gmra.mrb[0].mxu0 %v4485
      %v4749 = vpop.f32.mrb[0].mxu0
      %v4750 = vadd.f32 0.0, %v4749
      %v4751 = vpop.f32.mrb[0].mxu0
      %v4752 = vadd.f32 0.0, %v4751
      %4753 = vdwg.mxu0
      %4754 = vmatprep.subr.mxu0 %v4282
      %4755 = vmatpush1.msra.mxu0 %v4281
      %4756 = vmatprep.subr.mxu0 %v4290
      %4757 = vmatpush1.msra.mxu0 %v4289
      %4758 = vmatprep.subr.mxu0 %v4298
      %4759 = vmatpush1.msra.mxu0 %v4297
      %4760 = vmatprep.subr.mxu0 %v4306
      %4761 = vmatpush1.msra.mxu0 %v4305
      %4762 = vmatprep.subr.mxu0 %v4413
      %4763 = vmatpush1.msra.mxu0 %v4412
      %4764 = vmatprep.subr.mxu0 %v4421
      %4765 = vmatpush1.msra.mxu0 %v4420
      %4766 = vmatprep.subr.mxu0 %v4429
      %4767 = vmatpush1.msra.mxu0 %v4428
      %4768 = vmatprep.subr.mxu0 %v4437
      %4769 = vmatpush1.msra.mxu0 %v4436
      %4770 = vmatprep.subr.mxu0 0.0
      %4771 = vmatpush1.msra.mxu0 0.0
      %4772 = vmatprep.subr.mxu0 0.0
      %4773 = vmatpush1.msra.mxu0 0.0
      %4774 = vmatprep.subr.mxu0 0.0
      %4775 = vmatpush1.msra.mxu0 0.0
      %4776 = vmatprep.subr.mxu0 0.0
      %4777 = vmatpush1.msra.mxu0 0.0
      %4778 = vmatprep.subr.mxu0 0.0
      %4779 = vmatpush1.msra.mxu0 0.0
      %4780 = vmatprep.subr.mxu0 0.0
      %4781 = vmatpush1.msra.mxu0 0.0
      %4782 = vmatprep.subr.mxu0 0.0
      %4783 = vmatpush1.msra.mxu0 0.0
      %4784 = vmatprep.subr.mxu0 0.0
      %4785 = vmatpush1.msra.mxu0 0.0
      %4786 = vmatprep.subr.mxu0 0.0
      %4787 = vmatpush1.msra.mxu0 0.0
      %4788 = vmatprep.subr.mxu0 0.0
      %4789 = vmatpush1.msra.mxu0 0.0
      %4790 = vmatprep.subr.mxu0 0.0
      %4791 = vmatpush1.msra.mxu0 0.0
      %4792 = vmatprep.subr.mxu0 0.0
      %4793 = vmatpush1.msra.mxu0 0.0
      %4794 = vmatprep.subr.mxu0 0.0
      %4795 = vmatpush1.msra.mxu0 0.0
      %4796 = vmatprep.subr.mxu0 0.0
      %4797 = vmatpush1.msra.mxu0 0.0
      %4798 = vmatprep.subr.mxu0 0.0
      %4799 = vmatpush1.msra.mxu0 0.0
      %4800 = vmatprep.subr.mxu0 0.0
      %4801 = vmatpush1.msra.mxu0 0.0
      %4802 = vmatprep.subr.mxu0 0.0
      %4803 = vmatpush1.msra.mxu0 0.0
      %4804 = vmatprep.subr.mxu0 0.0
      %4805 = vmatpush1.msra.mxu0 0.0
      %4806 = vmatprep.subr.mxu0 0.0
      %4807 = vmatpush1.msra.mxu0 0.0
      %4808 = vmatprep.subr.mxu0 0.0
      %4809 = vmatpush1.msra.mxu0 0.0
      %4810 = vmatprep.subr.mxu0 0.0
      %4811 = vmatpush1.msra.mxu0 0.0
      %4812 = vmatprep.subr.mxu0 0.0
      %4813 = vmatpush1.msra.mxu0 0.0
      %4814 = vmatprep.subr.mxu0 0.0
      %4815 = vmatpush1.msra.mxu0 0.0
      %4816 = vmatprep.subr.mxu0 0.0
      %4817 = vmatpush1.msra.mxu0 0.0
      %4818 = vmatprep.mubr.f32.mxu0 0.0
      %4819 = vmatmul.mubr.f32.gmra.mrb[0].mxu0 %v4476
      %v4820 = vpop.f32.mrb[0].mxu0
      %v4821 = vadd.f32 0.0, %v4820
      %v4822 = vpop.f32.mrb[0].mxu0
      %v4823 = vadd.f32 0.0, %v4822
      %4824 = vmatprep.mubr.f32.mxu0 0.0
      %4825 = vmatmul.mubr.f32.gmra.mrb[0].mxu0 %v4479
      %v4826 = vpop.f32.mrb[0].mxu0
      %v4827 = vadd.f32 0.0, %v4826
      %v4828 = vpop.f32.mrb[0].mxu0
      %v4829 = vadd.f32 0.0, %v4828
      %4830 = vmatprep.mubr.f32.mxu0 0.0
      %4831 = vmatmul.mubr.f32.gmra.mrb[0].mxu0 %v4482
      %v4832 = vpop.f32.mrb[0].mxu0
      %v4833 = vadd.f32 0.0, %v4832
      %v4834 = vpop.f32.mrb[0].mxu0
      %v4835 = vadd.f32 0.0, %v4834
      %4836 = vmatprep.mubr.f32.mxu0 0.0
      %4837 = vmatmul.mubr.f32.gmra.mrb[0].mxu0 %v4485
      %v4838 = vpop.f32.mrb[0].mxu0
      %v4839 = vadd.f32 0.0, %v4838
      %v4840 = vpop.f32.mrb[0].mxu0
      %v4841 = vadd.f32 0.0, %v4840
      %4842 = vdwg.mxu0
      %s4843 = scalar_lea.vmem %s3, 192
      %v4844 = vld [vmem:[%s4843] sm:$0xff]
      %v4845 = vld [vmem:[%s4843 + $0x8] sm:$0xff]
      %v4846 = vld [vmem:[%s4843 + $0x10] sm:$0xff]
      %v4847 = vld [vmem:[%s4843 + $0x18] sm:$0xff]
      %4849 = vset.pattern.permute.xlu0 0
      %4850 = vperm.xlu0 %4849, %v4844
      %v4851 = vpop.permute.xlu0 %4850
      %4854 = vset.pattern.permute.xlu0 0
      %4855 = vperm.xlu0 %4854, %v4845
      %v4856 = vpop.permute.xlu0 %4855
      %4859 = vset.pattern.permute.xlu0 0
      %4860 = vperm.xlu0 %4859, %v4846
      %v4861 = vpop.permute.xlu0 %4860
      %4864 = vset.pattern.permute.xlu0 0
      %4865 = vperm.xlu0 %4864, %v4847
      %v4866 = vpop.permute.xlu0 %4865
      %v4868 = vmul.f32 %v4554, %v4851
      %v4869 = vmul.f32 %v4556, %v4851
      %v4870 = vmul.f32 %v4643, %v4851
      %v4871 = vmul.f32 %v4645, %v4851
      %v4872 = vmul.f32 %v4732, %v4851
      %v4873 = vmul.f32 %v4734, %v4851
      %v4874 = vmul.f32 %v4821, %v4851
      %v4875 = vmul.f32 %v4823, %v4851
      %v4876 = vmul.f32 %v4560, %v4856
      %v4877 = vmul.f32 %v4562, %v4856
      %v4878 = vmul.f32 %v4649, %v4856
      %v4879 = vmul.f32 %v4651, %v4856
      %v4880 = vmul.f32 %v4738, %v4856
      %v4881 = vmul.f32 %v4740, %v4856
      %v4882 = vmul.f32 %v4827, %v4856
      %v4883 = vmul.f32 %v4829, %v4856
      %v4884 = vmul.f32 %v4566, %v4861
      %v4885 = vmul.f32 %v4568, %v4861
      %v4886 = vmul.f32 %v4655, %v4861
      %v4887 = vmul.f32 %v4657, %v4861
      %v4888 = vmul.f32 %v4744, %v4861
      %v4889 = vmul.f32 %v4746, %v4861
      %v4890 = vmul.f32 %v4833, %v4861
      %v4891 = vmul.f32 %v4835, %v4861
      %v4892 = vmul.f32 %v4572, %v4866
      %v4893 = vmul.f32 %v4574, %v4866
      %v4894 = vmul.f32 %v4661, %v4866
      %v4895 = vmul.f32 %v4663, %v4866
      %v4896 = vmul.f32 %v4750, %v4866
      %v4897 = vmul.f32 %v4752, %v4866
      %v4898 = vmul.f32 %v4839, %v4866
      %v4899 = vmul.f32 %v4841, %v4866
      %s4900 = scalar_lea.vmem %s4, 192
      %v4901 = vld [vmem:[%s4900] sm:$0xff]
      %v4902 = vld [vmem:[%s4900 + $0x8] sm:$0xff]
      %v4903 = vld [vmem:[%s4900 + $0x10] sm:$0xff]
      %v4904 = vld [vmem:[%s4900 + $0x18] sm:$0xff]
      %4906 = vset.pattern.permute.xlu0 0
      %4907 = vperm.xlu0 %4906, %v4901
      %v4908 = vpop.permute.xlu0 %4907
      %4911 = vset.pattern.permute.xlu0 0
      %4912 = vperm.xlu0 %4911, %v4902
      %v4913 = vpop.permute.xlu0 %4912
      %4916 = vset.pattern.permute.xlu0 0
      %4917 = vperm.xlu0 %4916, %v4903
      %v4918 = vpop.permute.xlu0 %4917
      %4921 = vset.pattern.permute.xlu0 0
      %4922 = vperm.xlu0 %4921, %v4904
      %v4923 = vpop.permute.xlu0 %4922
      %v4925 = vadd.f32 %v4868, %v4908
      %v4926 = vadd.f32 %v4869, %v4908
      %v4927 = vadd.f32 %v4870, %v4908
      %v4928 = vadd.f32 %v4871, %v4908
      %v4929 = vadd.f32 %v4872, %v4908
      %v4930 = vadd.f32 %v4873, %v4908
      %v4931 = vadd.f32 %v4874, %v4908
      %v4932 = vadd.f32 %v4875, %v4908
      %v4933 = vadd.f32 %v4876, %v4913
      %v4934 = vadd.f32 %v4877, %v4913
      %v4935 = vadd.f32 %v4878, %v4913
      %v4936 = vadd.f32 %v4879, %v4913
      %v4937 = vadd.f32 %v4880, %v4913
      %v4938 = vadd.f32 %v4881, %v4913
      %v4939 = vadd.f32 %v4882, %v4913
      %v4940 = vadd.f32 %v4883, %v4913
      %v4941 = vadd.f32 %v4884, %v4918
      %v4942 = vadd.f32 %v4885, %v4918
      %v4943 = vadd.f32 %v4886, %v4918
      %v4944 = vadd.f32 %v4887, %v4918
      %v4945 = vadd.f32 %v4888, %v4918
      %v4946 = vadd.f32 %v4889, %v4918
      %v4947 = vadd.f32 %v4890, %v4918
      %v4948 = vadd.f32 %v4891, %v4918
      %v4949 = vadd.f32 %v4892, %v4923
      %v4950 = vadd.f32 %v4893, %v4923
      %v4951 = vadd.f32 %v4894, %v4923
      %v4952 = vadd.f32 %v4895, %v4923
      %v4953 = vadd.f32 %v4896, %v4923
      %v4954 = vadd.f32 %v4897, %v4923
      %v4955 = vadd.f32 %v4898, %v4923
      %v4956 = vadd.f32 %v4899, %v4923
      %v4957 = vmax.f32 %v4925, 0.0
      %v4958 = vmax.f32 %v4926, 0.0
      %v4959 = vmax.f32 %v4927, 0.0
      %v4960 = vmax.f32 %v4928, 0.0
      %v4961 = vmax.f32 %v4929, 0.0
      %v4962 = vmax.f32 %v4930, 0.0
      %v4963 = vmax.f32 %v4931, 0.0
      %v4964 = vmax.f32 %v4932, 0.0
      %v4965 = vmax.f32 %v4933, 0.0
      %v4966 = vmax.f32 %v4934, 0.0
      %v4967 = vmax.f32 %v4935, 0.0
      %v4968 = vmax.f32 %v4936, 0.0
      %v4969 = vmax.f32 %v4937, 0.0
      %v4970 = vmax.f32 %v4938, 0.0
      %v4971 = vmax.f32 %v4939, 0.0
      %v4972 = vmax.f32 %v4940, 0.0
      %v4973 = vmax.f32 %v4941, 0.0
      %v4974 = vmax.f32 %v4942, 0.0
      %v4975 = vmax.f32 %v4943, 0.0
      %v4976 = vmax.f32 %v4944, 0.0
      %v4977 = vmax.f32 %v4945, 0.0
      %v4978 = vmax.f32 %v4946, 0.0
      %v4979 = vmax.f32 %v4947, 0.0
      %v4980 = vmax.f32 %v4948, 0.0
      %v4981 = vmax.f32 %v4949, 0.0
      %v4982 = vmax.f32 %v4950, 0.0
      %v4983 = vmax.f32 %v4951, 0.0
      %v4984 = vmax.f32 %v4952, 0.0
      %v4985 = vmax.f32 %v4953, 0.0
      %v4986 = vmax.f32 %v4954, 0.0
      %v4987 = vmax.f32 %v4955, 0.0
      %v4988 = vmax.f32 %v4956, 0.0
      %5021 = vrot.lane.b32.xlu0 %v4957, 64
      %v5022 = vpop.permute.xlu0 %5021
      %5023 = vrot.lane.b32.xlu0 %v4958, 64
      %v5024 = vpop.permute.xlu0 %5023
      %5025 = vrot.lane.b32.xlu0 %v4959, 64
      %v5026 = vpop.permute.xlu0 %5025
      %5027 = vrot.lane.b32.xlu0 %v4960, 64
      %v5028 = vpop.permute.xlu0 %5027
      %5029 = vrot.lane.b32.xlu0 %v4961, 64
      %v5030 = vpop.permute.xlu0 %5029
      %5031 = vrot.lane.b32.xlu0 %v4962, 64
      %v5032 = vpop.permute.xlu0 %5031
      %5033 = vrot.lane.b32.xlu0 %v4963, 64
      %v5034 = vpop.permute.xlu0 %5033
      %5035 = vrot.lane.b32.xlu0 %v4964, 64
      %v5036 = vpop.permute.xlu0 %5035
      %5037 = vrot.lane.b32.xlu0 0.0, 64
      %v5038 = vpop.permute.xlu0 %5037
      %5039 = vrot.lane.b32.xlu0 %v4965, 64
      %v5040 = vpop.permute.xlu0 %5039
      %5041 = vrot.lane.b32.xlu0 %v4966, 64
      %v5042 = vpop.permute.xlu0 %5041
      %5043 = vrot.lane.b32.xlu0 %v4967, 64
      %v5044 = vpop.permute.xlu0 %5043
      %5045 = vrot.lane.b32.xlu0 %v4968, 64
      %v5046 = vpop.permute.xlu0 %5045
      %5047 = vrot.lane.b32.xlu0 %v4969, 64
      %v5048 = vpop.permute.xlu0 %5047
      %5049 = vrot.lane.b32.xlu0 %v4970, 64
      %v5050 = vpop.permute.xlu0 %5049
      %5051 = vrot.lane.b32.xlu0 %v4971, 64
      %v5052 = vpop.permute.xlu0 %5051
      %5053 = vrot.lane.b32.xlu0 %v4972, 64
      %v5054 = vpop.permute.xlu0 %5053
      %5055 = vrot.lane.b32.xlu0 %v4973, 64
      %v5056 = vpop.permute.xlu0 %5055
      %5057 = vrot.lane.b32.xlu0 %v4974, 64
      %v5058 = vpop.permute.xlu0 %5057
      %5059 = vrot.lane.b32.xlu0 %v4975, 64
      %v5060 = vpop.permute.xlu0 %5059
      %5061 = vrot.lane.b32.xlu0 %v4976, 64
      %v5062 = vpop.permute.xlu0 %5061
      %5063 = vrot.lane.b32.xlu0 %v4977, 64
      %v5064 = vpop.permute.xlu0 %5063
      %5065 = vrot.lane.b32.xlu0 %v4978, 64
      %v5066 = vpop.permute.xlu0 %5065
      %5067 = vrot.lane.b32.xlu0 %v4979, 64
      %v5068 = vpop.permute.xlu0 %5067
      %5069 = vrot.lane.b32.xlu0 %v4980, 64
      %v5070 = vpop.permute.xlu0 %5069
      %5071 = vrot.lane.b32.xlu0 %v4981, 64
      %v5072 = vpop.permute.xlu0 %5071
      %5073 = vrot.lane.b32.xlu0 %v4982, 64
      %v5074 = vpop.permute.xlu0 %5073
      %5075 = vrot.lane.b32.xlu0 %v4983, 64
      %v5076 = vpop.permute.xlu0 %5075
      %5077 = vrot.lane.b32.xlu0 %v4984, 64
      %v5078 = vpop.permute.xlu0 %5077
      %5079 = vrot.lane.b32.xlu0 %v4985, 64
      %v5080 = vpop.permute.xlu0 %5079
      %5081 = vrot.lane.b32.xlu0 %v4986, 64
      %v5082 = vpop.permute.xlu0 %5081
      %5083 = vrot.lane.b32.xlu0 %v4987, 64
      %v5084 = vpop.permute.xlu0 %5083
      %5085 = vrot.lane.b32.xlu0 %v4988, 64
      %v5086 = vpop.permute.xlu0 %5085
      %v5087 = vsel %vm1064, %v5022, %v5024
      %v5088 = vsel %vm1064, %v5024, %v5026
      %v5089 = vsel %vm1064, %v5026, %v5028
      %v5090 = vsel %vm1064, %v5028, %v5030
      %v5091 = vsel %vm1064, %v5030, %v5032
      %v5092 = vsel %vm1064, %v5032, %v5034
      %v5093 = vsel %vm1064, %v5034, %v5036
      %v5094 = vsel %vm1064, %v5036, %v5038
      %v5095 = vsel %vm1064, %v5040, %v5042
      %v5096 = vsel %vm1064, %v5042, %v5044
      %v5097 = vsel %vm1064, %v5044, %v5046
      %v5098 = vsel %vm1064, %v5046, %v5048
      %v5099 = vsel %vm1064, %v5048, %v5050
      %v5100 = vsel %vm1064, %v5050, %v5052
      %v5101 = vsel %vm1064, %v5052, %v5054
      %v5102 = vsel %vm1064, %v5054, %v5038
      %v5103 = vsel %vm1064, %v5056, %v5058
      %v5104 = vsel %vm1064, %v5058, %v5060
      %v5105 = vsel %vm1064, %v5060, %v5062
      %v5106 = vsel %vm1064, %v5062, %v5064
      %v5107 = vsel %vm1064, %v5064, %v5066
      %v5108 = vsel %vm1064, %v5066, %v5068
      %v5109 = vsel %vm1064, %v5068, %v5070
      %v5110 = vsel %vm1064, %v5070, %v5038
      %v5111 = vsel %vm1064, %v5072, %v5074
      %v5112 = vsel %vm1064, %v5074, %v5076
      %v5113 = vsel %vm1064, %v5076, %v5078
      %v5114 = vsel %vm1064, %v5078, %v5080
      %v5115 = vsel %vm1064, %v5080, %v5082
      %v5116 = vsel %vm1064, %v5082, %v5084
      %v5117 = vsel %vm1064, %v5084, %v5086
      %v5118 = vsel %vm1064, %v5086, %v5038
      %s5151 = scalar_lea.vmem %s2, 192
      %v5152 = vld [vmem:[%s5151] sm:$0xff]
      %v5153 = vld [vmem:[%s5151 + $0x8] sm:$0xff]
      %v5154 = vld [vmem:[%s5151 + $0x10] sm:$0xff]
      %v5155 = vld [vmem:[%s5151 + $0x18] sm:$0xff]
      %v5157 = vsel %vm1064, %v5152, 0
      %v5160 = vsel %vm1064, %v5153, 0
      %v5163 = vsel %vm1064, %v5154, 0
      %v5166 = vsel %vm1064, %v5155, 0
      %5168 = vmatprep.subr.mxu0 %v4958
      %5169 = vmatpush1.msra.mxu0 %v4957
      %5170 = vmatprep.subr.mxu0 %v4966
      %5171 = vmatpush1.msra.mxu0 %v4965
      %5172 = vmatprep.subr.mxu0 %v4974
      %5173 = vmatpush1.msra.mxu0 %v4973
      %5174 = vmatprep.subr.mxu0 %v4982
      %5175 = vmatpush1.msra.mxu0 %v4981
      %5176 = vmatprep.subr.mxu0 %v5088
      %5177 = vmatpush1.msra.mxu0 %v5087
      %5178 = vmatprep.subr.mxu0 %v5096
      %5179 = vmatpush1.msra.mxu0 %v5095
      %5180 = vmatprep.subr.mxu0 %v5104
      %5181 = vmatpush1.msra.mxu0 %v5103
      %5182 = vmatprep.subr.mxu0 %v5112
      %5183 = vmatpush1.msra.mxu0 %v5111
      %5184 = vmatprep.subr.mxu0 0.0
      %5185 = vmatpush1.msra.mxu0 0.0
      %5186 = vmatprep.subr.mxu0 0.0
      %5187 = vmatpush1.msra.mxu0 0.0
      %5188 = vmatprep.subr.mxu0 0.0
      %5189 = vmatpush1.msra.mxu0 0.0
      %5190 = vmatprep.subr.mxu0 0.0
      %5191 = vmatpush1.msra.mxu0 0.0
      %5192 = vmatprep.subr.mxu0 0.0
      %5193 = vmatpush1.msra.mxu0 0.0
      %5194 = vmatprep.subr.mxu0 0.0
      %5195 = vmatpush1.msra.mxu0 0.0
      %5196 = vmatprep.subr.mxu0 0.0
      %5197 = vmatpush1.msra.mxu0 0.0
      %5198 = vmatprep.subr.mxu0 0.0
      %5199 = vmatpush1.msra.mxu0 0.0
      %5200 = vmatprep.subr.mxu0 0.0
      %5201 = vmatpush1.msra.mxu0 0.0
      %5202 = vmatprep.subr.mxu0 0.0
      %5203 = vmatpush1.msra.mxu0 0.0
      %5204 = vmatprep.subr.mxu0 0.0
      %5205 = vmatpush1.msra.mxu0 0.0
      %5206 = vmatprep.subr.mxu0 0.0
      %5207 = vmatpush1.msra.mxu0 0.0
      %5208 = vmatprep.subr.mxu0 0.0
      %5209 = vmatpush1.msra.mxu0 0.0
      %5210 = vmatprep.subr.mxu0 0.0
      %5211 = vmatpush1.msra.mxu0 0.0
      %5212 = vmatprep.subr.mxu0 0.0
      %5213 = vmatpush1.msra.mxu0 0.0
      %5214 = vmatprep.subr.mxu0 0.0
      %5215 = vmatpush1.msra.mxu0 0.0
      %5216 = vmatprep.subr.mxu0 0.0
      %5217 = vmatpush1.msra.mxu0 0.0
      %5218 = vmatprep.subr.mxu0 0.0
      %5219 = vmatpush1.msra.mxu0 0.0
      %5220 = vmatprep.subr.mxu0 0.0
      %5221 = vmatpush1.msra.mxu0 0.0
      %5222 = vmatprep.subr.mxu0 0.0
      %5223 = vmatpush1.msra.mxu0 0.0
      %5224 = vmatprep.subr.mxu0 0.0
      %5225 = vmatpush1.msra.mxu0 0.0
      %5226 = vmatprep.subr.mxu0 0.0
      %5227 = vmatpush1.msra.mxu0 0.0
      %5228 = vmatprep.subr.mxu0 0.0
      %5229 = vmatpush1.msra.mxu0 0.0
      %5230 = vmatprep.subr.mxu0 0.0
      %5231 = vmatpush1.msra.mxu0 0.0
      %5232 = vmatprep.mubr.f32.mxu0 0.0
      %5233 = vmatmul.mubr.f32.gmra.mrb[0].mxu0 %v5157
      %v5234 = vpop.f32.mrb[0].mxu0
      %v5235 = vadd.f32 0.0, %v5234
      %v5236 = vpop.f32.mrb[0].mxu0
      %v5237 = vadd.f32 0.0, %v5236
      %5238 = vmatprep.mubr.f32.mxu0 0.0
      %5239 = vmatmul.mubr.f32.gmra.mrb[0].mxu0 %v5160
      %v5240 = vpop.f32.mrb[0].mxu0
      %v5241 = vadd.f32 0.0, %v5240
      %v5242 = vpop.f32.mrb[0].mxu0
      %v5243 = vadd.f32 0.0, %v5242
      %5244 = vmatprep.mubr.f32.mxu0 0.0
      %5245 = vmatmul.mubr.f32.gmra.mrb[0].mxu0 %v5163
      %v5246 = vpop.f32.mrb[0].mxu0
      %v5247 = vadd.f32 0.0, %v5246
      %v5248 = vpop.f32.mrb[0].mxu0
      %v5249 = vadd.f32 0.0, %v5248
      %5250 = vmatprep.mubr.f32.mxu0 0.0
      %5251 = vmatmul.mubr.f32.gmra.mrb[0].mxu0 %v5166
      %v5252 = vpop.f32.mrb[0].mxu0
      %v5253 = vadd.f32 0.0, %v5252
      %v5254 = vpop.f32.mrb[0].mxu0
      %v5255 = vadd.f32 0.0, %v5254
      %5256 = vdwg.mxu0
      %5257 = vmatprep.subr.mxu0 %v4960
      %5258 = vmatpush1.msra.mxu0 %v4959
      %5259 = vmatprep.subr.mxu0 %v4968
      %5260 = vmatpush1.msra.mxu0 %v4967
      %5261 = vmatprep.subr.mxu0 %v4976
      %5262 = vmatpush1.msra.mxu0 %v4975
      %5263 = vmatprep.subr.mxu0 %v4984
      %5264 = vmatpush1.msra.mxu0 %v4983
      %5265 = vmatprep.subr.mxu0 %v5090
      %5266 = vmatpush1.msra.mxu0 %v5089
      %5267 = vmatprep.subr.mxu0 %v5098
      %5268 = vmatpush1.msra.mxu0 %v5097
      %5269 = vmatprep.subr.mxu0 %v5106
      %5270 = vmatpush1.msra.mxu0 %v5105
      %5271 = vmatprep.subr.mxu0 %v5114
      %5272 = vmatpush1.msra.mxu0 %v5113
      %5273 = vmatprep.subr.mxu0 0.0
      %5274 = vmatpush1.msra.mxu0 0.0
      %5275 = vmatprep.subr.mxu0 0.0
      %5276 = vmatpush1.msra.mxu0 0.0
      %5277 = vmatprep.subr.mxu0 0.0
      %5278 = vmatpush1.msra.mxu0 0.0
      %5279 = vmatprep.subr.mxu0 0.0
      %5280 = vmatpush1.msra.mxu0 0.0
      %5281 = vmatprep.subr.mxu0 0.0
      %5282 = vmatpush1.msra.mxu0 0.0
      %5283 = vmatprep.subr.mxu0 0.0
      %5284 = vmatpush1.msra.mxu0 0.0
      %5285 = vmatprep.subr.mxu0 0.0
      %5286 = vmatpush1.msra.mxu0 0.0
      %5287 = vmatprep.subr.mxu0 0.0
      %5288 = vmatpush1.msra.mxu0 0.0
      %5289 = vmatprep.subr.mxu0 0.0
      %5290 = vmatpush1.msra.mxu0 0.0
      %5291 = vmatprep.subr.mxu0 0.0
      %5292 = vmatpush1.msra.mxu0 0.0
      %5293 = vmatprep.subr.mxu0 0.0
      %5294 = vmatpush1.msra.mxu0 0.0
      %5295 = vmatprep.subr.mxu0 0.0
      %5296 = vmatpush1.msra.mxu0 0.0
      %5297 = vmatprep.subr.mxu0 0.0
      %5298 = vmatpush1.msra.mxu0 0.0
      %5299 = vmatprep.subr.mxu0 0.0
      %5300 = vmatpush1.msra.mxu0 0.0
      %5301 = vmatprep.subr.mxu0 0.0
      %5302 = vmatpush1.msra.mxu0 0.0
      %5303 = vmatprep.subr.mxu0 0.0
      %5304 = vmatpush1.msra.mxu0 0.0
      %5305 = vmatprep.subr.mxu0 0.0
      %5306 = vmatpush1.msra.mxu0 0.0
      %5307 = vmatprep.subr.mxu0 0.0
      %5308 = vmatpush1.msra.mxu0 0.0
      %5309 = vmatprep.subr.mxu0 0.0
      %5310 = vmatpush1.msra.mxu0 0.0
      %5311 = vmatprep.subr.mxu0 0.0
      %5312 = vmatpush1.msra.mxu0 0.0
      %5313 = vmatprep.subr.mxu0 0.0
      %5314 = vmatpush1.msra.mxu0 0.0
      %5315 = vmatprep.subr.mxu0 0.0
      %5316 = vmatpush1.msra.mxu0 0.0
      %5317 = vmatprep.subr.mxu0 0.0
      %5318 = vmatpush1.msra.mxu0 0.0
      %5319 = vmatprep.subr.mxu0 0.0
      %5320 = vmatpush1.msra.mxu0 0.0
      %5321 = vmatprep.mubr.f32.mxu0 0.0
      %5322 = vmatmul.mubr.f32.gmra.mrb[0].mxu0 %v5157
      %v5323 = vpop.f32.mrb[0].mxu0
      %v5324 = vadd.f32 0.0, %v5323
      %v5325 = vpop.f32.mrb[0].mxu0
      %v5326 = vadd.f32 0.0, %v5325
      %5327 = vmatprep.mubr.f32.mxu0 0.0
      %5328 = vmatmul.mubr.f32.gmra.mrb[0].mxu0 %v5160
      %v5329 = vpop.f32.mrb[0].mxu0
      %v5330 = vadd.f32 0.0, %v5329
      %v5331 = vpop.f32.mrb[0].mxu0
      %v5332 = vadd.f32 0.0, %v5331
      %5333 = vmatprep.mubr.f32.mxu0 0.0
      %5334 = vmatmul.mubr.f32.gmra.mrb[0].mxu0 %v5163
      %v5335 = vpop.f32.mrb[0].mxu0
      %v5336 = vadd.f32 0.0, %v5335
      %v5337 = vpop.f32.mrb[0].mxu0
      %v5338 = vadd.f32 0.0, %v5337
      %5339 = vmatprep.mubr.f32.mxu0 0.0
      %5340 = vmatmul.mubr.f32.gmra.mrb[0].mxu0 %v5166
      %v5341 = vpop.f32.mrb[0].mxu0
      %v5342 = vadd.f32 0.0, %v5341
      %v5343 = vpop.f32.mrb[0].mxu0
      %v5344 = vadd.f32 0.0, %v5343
      %5345 = vdwg.mxu0
      %5346 = vmatprep.subr.mxu0 %v4962
      %5347 = vmatpush1.msra.mxu0 %v4961
      %5348 = vmatprep.subr.mxu0 %v4970
      %5349 = vmatpush1.msra.mxu0 %v4969
      %5350 = vmatprep.subr.mxu0 %v4978
      %5351 = vmatpush1.msra.mxu0 %v4977
      %5352 = vmatprep.subr.mxu0 %v4986
      %5353 = vmatpush1.msra.mxu0 %v4985
      %5354 = vmatprep.subr.mxu0 %v5092
      %5355 = vmatpush1.msra.mxu0 %v5091
      %5356 = vmatprep.subr.mxu0 %v5100
      %5357 = vmatpush1.msra.mxu0 %v5099
      %5358 = vmatprep.subr.mxu0 %v5108
      %5359 = vmatpush1.msra.mxu0 %v5107
      %5360 = vmatprep.subr.mxu0 %v5116
      %5361 = vmatpush1.msra.mxu0 %v5115
      %5362 = vmatprep.subr.mxu0 0.0
      %5363 = vmatpush1.msra.mxu0 0.0
      %5364 = vmatprep.subr.mxu0 0.0
      %5365 = vmatpush1.msra.mxu0 0.0
      %5366 = vmatprep.subr.mxu0 0.0
      %5367 = vmatpush1.msra.mxu0 0.0
      %5368 = vmatprep.subr.mxu0 0.0
      %5369 = vmatpush1.msra.mxu0 0.0
      %5370 = vmatprep.subr.mxu0 0.0
      %5371 = vmatpush1.msra.mxu0 0.0
      %5372 = vmatprep.subr.mxu0 0.0
      %5373 = vmatpush1.msra.mxu0 0.0
      %5374 = vmatprep.subr.mxu0 0.0
      %5375 = vmatpush1.msra.mxu0 0.0
      %5376 = vmatprep.subr.mxu0 0.0
      %5377 = vmatpush1.msra.mxu0 0.0
      %5378 = vmatprep.subr.mxu0 0.0
      %5379 = vmatpush1.msra.mxu0 0.0
      %5380 = vmatprep.subr.mxu0 0.0
      %5381 = vmatpush1.msra.mxu0 0.0
      %5382 = vmatprep.subr.mxu0 0.0
      %5383 = vmatpush1.msra.mxu0 0.0
      %5384 = vmatprep.subr.mxu0 0.0
      %5385 = vmatpush1.msra.mxu0 0.0
      %5386 = vmatprep.subr.mxu0 0.0
      %5387 = vmatpush1.msra.mxu0 0.0
      %5388 = vmatprep.subr.mxu0 0.0
      %5389 = vmatpush1.msra.mxu0 0.0
      %5390 = vmatprep.subr.mxu0 0.0
      %5391 = vmatpush1.msra.mxu0 0.0
      %5392 = vmatprep.subr.mxu0 0.0
      %5393 = vmatpush1.msra.mxu0 0.0
      %5394 = vmatprep.subr.mxu0 0.0
      %5395 = vmatpush1.msra.mxu0 0.0
      %5396 = vmatprep.subr.mxu0 0.0
      %5397 = vmatpush1.msra.mxu0 0.0
      %5398 = vmatprep.subr.mxu0 0.0
      %5399 = vmatpush1.msra.mxu0 0.0
      %5400 = vmatprep.subr.mxu0 0.0
      %5401 = vmatpush1.msra.mxu0 0.0
      %5402 = vmatprep.subr.mxu0 0.0
      %5403 = vmatpush1.msra.mxu0 0.0
      %5404 = vmatprep.subr.mxu0 0.0
      %5405 = vmatpush1.msra.mxu0 0.0
      %5406 = vmatprep.subr.mxu0 0.0
      %5407 = vmatpush1.msra.mxu0 0.0
      %5408 = vmatprep.subr.mxu0 0.0
      %5409 = vmatpush1.msra.mxu0 0.0
      %5410 = vmatprep.mubr.f32.mxu0 0.0
      %5411 = vmatmul.mubr.f32.gmra.mrb[0].mxu0 %v5157
      %v5412 = vpop.f32.mrb[0].mxu0
      %v5413 = vadd.f32 0.0, %v5412
      %v5414 = vpop.f32.mrb[0].mxu0
      %v5415 = vadd.f32 0.0, %v5414
      %5416 = vmatprep.mubr.f32.mxu0 0.0
      %5417 = vmatmul.mubr.f32.gmra.mrb[0].mxu0 %v5160
      %v5418 = vpop.f32.mrb[0].mxu0
      %v5419 = vadd.f32 0.0, %v5418
      %v5420 = vpop.f32.mrb[0].mxu0
      %v5421 = vadd.f32 0.0, %v5420
      %5422 = vmatprep.mubr.f32.mxu0 0.0
      %5423 = vmatmul.mubr.f32.gmra.mrb[0].mxu0 %v5163
      %v5424 = vpop.f32.mrb[0].mxu0
      %v5425 = vadd.f32 0.0, %v5424
      %v5426 = vpop.f32.mrb[0].mxu0
      %v5427 = vadd.f32 0.0, %v5426
      %5428 = vmatprep.mubr.f32.mxu0 0.0
      %5429 = vmatmul.mubr.f32.gmra.mrb[0].mxu0 %v5166
      %v5430 = vpop.f32.mrb[0].mxu0
      %v5431 = vadd.f32 0.0, %v5430
      %v5432 = vpop.f32.mrb[0].mxu0
      %v5433 = vadd.f32 0.0, %v5432
      %5434 = vdwg.mxu0
      %5435 = vmatprep.subr.mxu0 %v4964
      %5436 = vmatpush1.msra.mxu0 %v4963
      %5437 = vmatprep.subr.mxu0 %v4972
      %5438 = vmatpush1.msra.mxu0 %v4971
      %5439 = vmatprep.subr.mxu0 %v4980
      %5440 = vmatpush1.msra.mxu0 %v4979
      %5441 = vmatprep.subr.mxu0 %v4988
      %5442 = vmatpush1.msra.mxu0 %v4987
      %5443 = vmatprep.subr.mxu0 %v5094
      %5444 = vmatpush1.msra.mxu0 %v5093
      %5445 = vmatprep.subr.mxu0 %v5102
      %5446 = vmatpush1.msra.mxu0 %v5101
      %5447 = vmatprep.subr.mxu0 %v5110
      %5448 = vmatpush1.msra.mxu0 %v5109
      %5449 = vmatprep.subr.mxu0 %v5118
      %5450 = vmatpush1.msra.mxu0 %v5117
      %5451 = vmatprep.subr.mxu0 0.0
      %5452 = vmatpush1.msra.mxu0 0.0
      %5453 = vmatprep.subr.mxu0 0.0
      %5454 = vmatpush1.msra.mxu0 0.0
      %5455 = vmatprep.subr.mxu0 0.0
      %5456 = vmatpush1.msra.mxu0 0.0
      %5457 = vmatprep.subr.mxu0 0.0
      %5458 = vmatpush1.msra.mxu0 0.0
      %5459 = vmatprep.subr.mxu0 0.0
      %5460 = vmatpush1.msra.mxu0 0.0
      %5461 = vmatprep.subr.mxu0 0.0
      %5462 = vmatpush1.msra.mxu0 0.0
      %5463 = vmatprep.subr.mxu0 0.0
      %5464 = vmatpush1.msra.mxu0 0.0
      %5465 = vmatprep.subr.mxu0 0.0
      %5466 = vmatpush1.msra.mxu0 0.0
      %5467 = vmatprep.subr.mxu0 0.0
      %5468 = vmatpush1.msra.mxu0 0.0
      %5469 = vmatprep.subr.mxu0 0.0
      %5470 = vmatpush1.msra.mxu0 0.0
      %5471 = vmatprep.subr.mxu0 0.0
      %5472 = vmatpush1.msra.mxu0 0.0
      %5473 = vmatprep.subr.mxu0 0.0
      %5474 = vmatpush1.msra.mxu0 0.0
      %5475 = vmatprep.subr.mxu0 0.0
      %5476 = vmatpush1.msra.mxu0 0.0
      %5477 = vmatprep.subr.mxu0 0.0
      %5478 = vmatpush1.msra.mxu0 0.0
      %5479 = vmatprep.subr.mxu0 0.0
      %5480 = vmatpush1.msra.mxu0 0.0
      %5481 = vmatprep.subr.mxu0 0.0
      %5482 = vmatpush1.msra.mxu0 0.0
      %5483 = vmatprep.subr.mxu0 0.0
      %5484 = vmatpush1.msra.mxu0 0.0
      %5485 = vmatprep.subr.mxu0 0.0
      %5486 = vmatpush1.msra.mxu0 0.0
      %5487 = vmatprep.subr.mxu0 0.0
      %5488 = vmatpush1.msra.mxu0 0.0
      %5489 = vmatprep.subr.mxu0 0.0
      %5490 = vmatpush1.msra.mxu0 0.0
      %5491 = vmatprep.subr.mxu0 0.0
      %5492 = vmatpush1.msra.mxu0 0.0
      %5493 = vmatprep.subr.mxu0 0.0
      %5494 = vmatpush1.msra.mxu0 0.0
      %5495 = vmatprep.subr.mxu0 0.0
      %5496 = vmatpush1.msra.mxu0 0.0
      %5497 = vmatprep.subr.mxu0 0.0
      %5498 = vmatpush1.msra.mxu0 0.0
      %5499 = vmatprep.mubr.f32.mxu0 0.0
      %5500 = vmatmul.mubr.f32.gmra.mrb[0].mxu0 %v5157
      %v5501 = vpop.f32.mrb[0].mxu0
      %v5502 = vadd.f32 0.0, %v5501
      %v5503 = vpop.f32.mrb[0].mxu0
      %v5504 = vadd.f32 0.0, %v5503
      %5505 = vmatprep.mubr.f32.mxu0 0.0
      %5506 = vmatmul.mubr.f32.gmra.mrb[0].mxu0 %v5160
      %v5507 = vpop.f32.mrb[0].mxu0
      %v5508 = vadd.f32 0.0, %v5507
      %v5509 = vpop.f32.mrb[0].mxu0
      %v5510 = vadd.f32 0.0, %v5509
      %5511 = vmatprep.mubr.f32.mxu0 0.0
      %5512 = vmatmul.mubr.f32.gmra.mrb[0].mxu0 %v5163
      %v5513 = vpop.f32.mrb[0].mxu0
      %v5514 = vadd.f32 0.0, %v5513
      %v5515 = vpop.f32.mrb[0].mxu0
      %v5516 = vadd.f32 0.0, %v5515
      %5517 = vmatprep.mubr.f32.mxu0 0.0
      %5518 = vmatmul.mubr.f32.gmra.mrb[0].mxu0 %v5166
      %v5519 = vpop.f32.mrb[0].mxu0
      %v5520 = vadd.f32 0.0, %v5519
      %v5521 = vpop.f32.mrb[0].mxu0
      %v5522 = vadd.f32 0.0, %v5521
      %5523 = vdwg.mxu0
      %s5524 = scalar_lea.vmem %s3, 224
      %v5525 = vld [vmem:[%s5524] sm:$0xff]
      %v5526 = vld [vmem:[%s5524 + $0x8] sm:$0xff]
      %v5527 = vld [vmem:[%s5524 + $0x10] sm:$0xff]
      %v5528 = vld [vmem:[%s5524 + $0x18] sm:$0xff]
      %5530 = vset.pattern.permute.xlu0 0
      %5531 = vperm.xlu0 %5530, %v5525
      %v5532 = vpop.permute.xlu0 %5531
      %5535 = vset.pattern.permute.xlu0 0
      %5536 = vperm.xlu0 %5535, %v5526
      %v5537 = vpop.permute.xlu0 %5536
      %5540 = vset.pattern.permute.xlu0 0
      %5541 = vperm.xlu0 %5540, %v5527
      %v5542 = vpop.permute.xlu0 %5541
      %5545 = vset.pattern.permute.xlu0 0
      %5546 = vperm.xlu0 %5545, %v5528
      %v5547 = vpop.permute.xlu0 %5546
      %v5549 = vmul.f32 %v5235, %v5532
      %v5550 = vmul.f32 %v5237, %v5532
      %v5551 = vmul.f32 %v5324, %v5532
      %v5552 = vmul.f32 %v5326, %v5532
      %v5553 = vmul.f32 %v5413, %v5532
      %v5554 = vmul.f32 %v5415, %v5532
      %v5555 = vmul.f32 %v5502, %v5532
      %v5556 = vmul.f32 %v5504, %v5532
      %v5557 = vmul.f32 %v5241, %v5537
      %v5558 = vmul.f32 %v5243, %v5537
      %v5559 = vmul.f32 %v5330, %v5537
      %v5560 = vmul.f32 %v5332, %v5537
      %v5561 = vmul.f32 %v5419, %v5537
      %v5562 = vmul.f32 %v5421, %v5537
      %v5563 = vmul.f32 %v5508, %v5537
      %v5564 = vmul.f32 %v5510, %v5537
      %v5565 = vmul.f32 %v5247, %v5542
      %v5566 = vmul.f32 %v5249, %v5542
      %v5567 = vmul.f32 %v5336, %v5542
      %v5568 = vmul.f32 %v5338, %v5542
      %v5569 = vmul.f32 %v5425, %v5542
      %v5570 = vmul.f32 %v5427, %v5542
      %v5571 = vmul.f32 %v5514, %v5542
      %v5572 = vmul.f32 %v5516, %v5542
      %v5573 = vmul.f32 %v5253, %v5547
      %v5574 = vmul.f32 %v5255, %v5547
      %v5575 = vmul.f32 %v5342, %v5547
      %v5576 = vmul.f32 %v5344, %v5547
      %v5577 = vmul.f32 %v5431, %v5547
      %v5578 = vmul.f32 %v5433, %v5547
      %v5579 = vmul.f32 %v5520, %v5547
      %v5580 = vmul.f32 %v5522, %v5547
      %s5581 = scalar_lea.vmem %s4, 224
      %v5582 = vld [vmem:[%s5581] sm:$0xff]
      %v5583 = vld [vmem:[%s5581 + $0x8] sm:$0xff]
      %v5584 = vld [vmem:[%s5581 + $0x10] sm:$0xff]
      %v5585 = vld [vmem:[%s5581 + $0x18] sm:$0xff]
      %5587 = vset.pattern.permute.xlu0 0
      %5588 = vperm.xlu0 %5587, %v5582
      %v5589 = vpop.permute.xlu0 %5588
      %5592 = vset.pattern.permute.xlu0 0
      %5593 = vperm.xlu0 %5592, %v5583
      %v5594 = vpop.permute.xlu0 %5593
      %5597 = vset.pattern.permute.xlu0 0
      %5598 = vperm.xlu0 %5597, %v5584
      %v5599 = vpop.permute.xlu0 %5598
      %5602 = vset.pattern.permute.xlu0 0
      %5603 = vperm.xlu0 %5602, %v5585
      %v5604 = vpop.permute.xlu0 %5603
      %v5606 = vadd.f32 %v5549, %v5589
      %v5607 = vadd.f32 %v5550, %v5589
      %v5608 = vadd.f32 %v5551, %v5589
      %v5609 = vadd.f32 %v5552, %v5589
      %v5610 = vadd.f32 %v5553, %v5589
      %v5611 = vadd.f32 %v5554, %v5589
      %v5612 = vadd.f32 %v5555, %v5589
      %v5613 = vadd.f32 %v5556, %v5589
      %v5614 = vadd.f32 %v5557, %v5594
      %v5615 = vadd.f32 %v5558, %v5594
      %v5616 = vadd.f32 %v5559, %v5594
      %v5617 = vadd.f32 %v5560, %v5594
      %v5618 = vadd.f32 %v5561, %v5594
      %v5619 = vadd.f32 %v5562, %v5594
      %v5620 = vadd.f32 %v5563, %v5594
      %v5621 = vadd.f32 %v5564, %v5594
      %v5622 = vadd.f32 %v5565, %v5599
      %v5623 = vadd.f32 %v5566, %v5599
      %v5624 = vadd.f32 %v5567, %v5599
      %v5625 = vadd.f32 %v5568, %v5599
      %v5626 = vadd.f32 %v5569, %v5599
      %v5627 = vadd.f32 %v5570, %v5599
      %v5628 = vadd.f32 %v5571, %v5599
      %v5629 = vadd.f32 %v5572, %v5599
      %v5630 = vadd.f32 %v5573, %v5604
      %v5631 = vadd.f32 %v5574, %v5604
      %v5632 = vadd.f32 %v5575, %v5604
      %v5633 = vadd.f32 %v5576, %v5604
      %v5634 = vadd.f32 %v5577, %v5604
      %v5635 = vadd.f32 %v5578, %v5604
      %v5636 = vadd.f32 %v5579, %v5604
      %v5637 = vadd.f32 %v5580, %v5604
      %v5638 = vmax.f32 %v5606, 0.0
      %v5639 = vmax.f32 %v5607, 0.0
      %v5640 = vmax.f32 %v5608, 0.0
      %v5641 = vmax.f32 %v5609, 0.0
      %v5642 = vmax.f32 %v5610, 0.0
      %v5643 = vmax.f32 %v5611, 0.0
      %v5644 = vmax.f32 %v5612, 0.0
      %v5645 = vmax.f32 %v5613, 0.0
      %v5646 = vmax.f32 %v5614, 0.0
      %v5647 = vmax.f32 %v5615, 0.0
      %v5648 = vmax.f32 %v5616, 0.0
      %v5649 = vmax.f32 %v5617, 0.0
      %v5650 = vmax.f32 %v5618, 0.0
      %v5651 = vmax.f32 %v5619, 0.0
      %v5652 = vmax.f32 %v5620, 0.0
      %v5653 = vmax.f32 %v5621, 0.0
      %v5654 = vmax.f32 %v5622, 0.0
      %v5655 = vmax.f32 %v5623, 0.0
      %v5656 = vmax.f32 %v5624, 0.0
      %v5657 = vmax.f32 %v5625, 0.0
      %v5658 = vmax.f32 %v5626, 0.0
      %v5659 = vmax.f32 %v5627, 0.0
      %v5660 = vmax.f32 %v5628, 0.0
      %v5661 = vmax.f32 %v5629, 0.0
      %v5662 = vmax.f32 %v5630, 0.0
      %v5663 = vmax.f32 %v5631, 0.0
      %v5664 = vmax.f32 %v5632, 0.0
      %v5665 = vmax.f32 %v5633, 0.0
      %v5666 = vmax.f32 %v5634, 0.0
      %v5667 = vmax.f32 %v5635, 0.0
      %v5668 = vmax.f32 %v5636, 0.0
      %v5669 = vmax.f32 %v5637, 0.0
      %v5670 = vld [vmem:[%s7] sm:$0xff]
      %v5671 = vld [vmem:[%s7 + $0x8] sm:$0xff]
      %v5672 = vld [vmem:[%s7 + $0x10] sm:$0xff]
      %v5673 = vld [vmem:[%s7 + $0x18] sm:$0xff]
      %v5674 = vld [vmem:[%s7 + $0x20] sm:$0xff]
      %v5675 = vld [vmem:[%s7 + $0x28] sm:$0xff]
      %v5676 = vld [vmem:[%s7 + $0x30] sm:$0xff]
      %v5677 = vld [vmem:[%s7 + $0x38] sm:$0xff]
      %v5678 = vld [vmem:[%s7 + $0x40] sm:$0xff]
      %v5679 = vld [vmem:[%s7 + $0x48] sm:$0xff]
      %v5680 = vld [vmem:[%s7 + $0x50] sm:$0xff]
      %v5681 = vld [vmem:[%s7 + $0x58] sm:$0xff]
      %v5682 = vld [vmem:[%s7 + $0x60] sm:$0xff]
      %v5683 = vld [vmem:[%s7 + $0x68] sm:$0xff]
      %v5684 = vld [vmem:[%s7 + $0x70] sm:$0xff]
      %v5685 = vld [vmem:[%s7 + $0x78] sm:$0xff]
      %v5686 = vld [vmem:[%s7 + $0x80] sm:$0xff]
      %v5687 = vld [vmem:[%s7 + $0x88] sm:$0xff]
      %v5688 = vld [vmem:[%s7 + $0x90] sm:$0xff]
      %v5689 = vld [vmem:[%s7 + $0x98] sm:$0xff]
      %v5690 = vld [vmem:[%s7 + $0xa0] sm:$0xff]
      %v5691 = vld [vmem:[%s7 + $0xa8] sm:$0xff]
      %v5692 = vld [vmem:[%s7 + $0xb0] sm:$0xff]
      %v5693 = vld [vmem:[%s7 + $0xb8] sm:$0xff]
      %v5694 = vld [vmem:[%s7 + $0xc0] sm:$0xff]
      %v5695 = vld [vmem:[%s7 + $0xc8] sm:$0xff]
      %v5696 = vld [vmem:[%s7 + $0xd0] sm:$0xff]
      %v5697 = vld [vmem:[%s7 + $0xd8] sm:$0xff]
      %v5698 = vld [vmem:[%s7 + $0xe0] sm:$0xff]
      %v5699 = vld [vmem:[%s7 + $0xe8] sm:$0xff]
      %v5700 = vld [vmem:[%s7 + $0xf0] sm:$0xff]
      %v5701 = vld [vmem:[%s7 + $0xf8] sm:$0xff]
      %v5702 = vld [vmem:[%s7 + $0x100] sm:$0xff]
      %v5703 = vld [vmem:[%s7 + $0x108] sm:$0xff]
      %v5704 = vld [vmem:[%s7 + $0x110] sm:$0xff]
      %v5705 = vld [vmem:[%s7 + $0x118] sm:$0xff]
      %v5706 = vld [vmem:[%s7 + $0x120] sm:$0xff]
      %v5707 = vld [vmem:[%s7 + $0x128] sm:$0xff]
      %v5708 = vld [vmem:[%s7 + $0x130] sm:$0xff]
      %v5709 = vld [vmem:[%s7 + $0x138] sm:$0xff]
      %v5710 = vld [vmem:[%s7 + $0x140] sm:$0xff]
      %v5711 = vld [vmem:[%s7 + $0x148] sm:$0xff]
      %v5712 = vld [vmem:[%s7 + $0x150] sm:$0xff]
      %v5713 = vld [vmem:[%s7 + $0x158] sm:$0xff]
      %v5714 = vld [vmem:[%s7 + $0x160] sm:$0xff]
      %v5715 = vld [vmem:[%s7 + $0x168] sm:$0xff]
      %v5716 = vld [vmem:[%s7 + $0x170] sm:$0xff]
      %v5717 = vld [vmem:[%s7 + $0x178] sm:$0xff]
      %v5718 = vld [vmem:[%s7 + $0x180] sm:$0xff]
      %v5719 = vld [vmem:[%s7 + $0x188] sm:$0xff]
      %v5720 = vld [vmem:[%s7 + $0x190] sm:$0xff]
      %v5721 = vld [vmem:[%s7 + $0x198] sm:$0xff]
      %v5722 = vld [vmem:[%s7 + $0x1a0] sm:$0xff]
      %v5723 = vld [vmem:[%s7 + $0x1a8] sm:$0xff]
      %v5724 = vld [vmem:[%s7 + $0x1b0] sm:$0xff]
      %v5725 = vld [vmem:[%s7 + $0x1b8] sm:$0xff]
      %v5726 = vld [vmem:[%s7 + $0x1c0] sm:$0xff]
      %v5727 = vld [vmem:[%s7 + $0x1c8] sm:$0xff]
      %v5728 = vld [vmem:[%s7 + $0x1d0] sm:$0xff]
      %v5729 = vld [vmem:[%s7 + $0x1d8] sm:$0xff]
      %v5730 = vld [vmem:[%s7 + $0x1e0] sm:$0xff]
      %v5731 = vld [vmem:[%s7 + $0x1e8] sm:$0xff]
      %v5732 = vld [vmem:[%s7 + $0x1f0] sm:$0xff]
      %v5733 = vld [vmem:[%s7 + $0x1f8] sm:$0xff]
      %v5734 = vld [vmem:[%s7 + $0x200] sm:$0xff]
      %v5735 = vld [vmem:[%s7 + $0x208] sm:$0xff]
      %v5736 = vld [vmem:[%s7 + $0x210] sm:$0xff]
      %v5737 = vld [vmem:[%s7 + $0x218] sm:$0xff]
      %v5738 = vld [vmem:[%s7 + $0x220] sm:$0xff]
      %v5739 = vld [vmem:[%s7 + $0x228] sm:$0xff]
      %v5740 = vld [vmem:[%s7 + $0x230] sm:$0xff]
      %v5741 = vld [vmem:[%s7 + $0x238] sm:$0xff]
      %v5742 = vld [vmem:[%s7 + $0x240] sm:$0xff]
      %v5743 = vld [vmem:[%s7 + $0x248] sm:$0xff]
      %v5744 = vld [vmem:[%s7 + $0x250] sm:$0xff]
      %v5745 = vld [vmem:[%s7 + $0x258] sm:$0xff]
      %v5746 = vld [vmem:[%s7 + $0x260] sm:$0xff]
      %v5747 = vld [vmem:[%s7 + $0x268] sm:$0xff]
      %v5748 = vld [vmem:[%s7 + $0x270] sm:$0xff]
      %v5749 = vld [vmem:[%s7 + $0x278] sm:$0xff]
      %v5750 = vld [vmem:[%s7 + $0x280] sm:$0xff]
      %v5751 = vld [vmem:[%s7 + $0x288] sm:$0xff]
      %v5752 = vld [vmem:[%s7 + $0x290] sm:$0xff]
      %v5753 = vld [vmem:[%s7 + $0x298] sm:$0xff]
      %v5754 = vld [vmem:[%s7 + $0x2a0] sm:$0xff]
      %v5755 = vld [vmem:[%s7 + $0x2a8] sm:$0xff]
      %v5756 = vld [vmem:[%s7 + $0x2b0] sm:$0xff]
      %v5757 = vld [vmem:[%s7 + $0x2b8] sm:$0xff]
      %v5758 = vld [vmem:[%s7 + $0x2c0] sm:$0xff]
      %v5759 = vld [vmem:[%s7 + $0x2c8] sm:$0xff]
      %v5760 = vld [vmem:[%s7 + $0x2d0] sm:$0xff]
      %v5761 = vld [vmem:[%s7 + $0x2d8] sm:$0xff]
      %v5762 = vld [vmem:[%s7 + $0x2e0] sm:$0xff]
      %v5763 = vld [vmem:[%s7 + $0x2e8] sm:$0xff]
      %v5764 = vld [vmem:[%s7 + $0x2f0] sm:$0xff]
      %v5765 = vld [vmem:[%s7 + $0x2f8] sm:$0xff]
      %v5766 = vld [vmem:[%s7 + $0x300] sm:$0xff]
      %v5767 = vld [vmem:[%s7 + $0x308] sm:$0xff]
      %v5768 = vld [vmem:[%s7 + $0x310] sm:$0xff]
      %v5769 = vld [vmem:[%s7 + $0x318] sm:$0xff]
      %v5770 = vld [vmem:[%s7 + $0x320] sm:$0xff]
      %v5771 = vld [vmem:[%s7 + $0x328] sm:$0xff]
      %v5772 = vld [vmem:[%s7 + $0x330] sm:$0xff]
      %v5773 = vld [vmem:[%s7 + $0x338] sm:$0xff]
      %v5774 = vld [vmem:[%s7 + $0x340] sm:$0xff]
      %v5775 = vld [vmem:[%s7 + $0x348] sm:$0xff]
      %v5776 = vld [vmem:[%s7 + $0x350] sm:$0xff]
      %v5777 = vld [vmem:[%s7 + $0x358] sm:$0xff]
      %v5778 = vld [vmem:[%s7 + $0x360] sm:$0xff]
      %v5779 = vld [vmem:[%s7 + $0x368] sm:$0xff]
      %v5780 = vld [vmem:[%s7 + $0x370] sm:$0xff]
      %v5781 = vld [vmem:[%s7 + $0x378] sm:$0xff]
      %v5782 = vld [vmem:[%s7 + $0x380] sm:$0xff]
      %v5783 = vld [vmem:[%s7 + $0x388] sm:$0xff]
      %v5784 = vld [vmem:[%s7 + $0x390] sm:$0xff]
      %v5785 = vld [vmem:[%s7 + $0x398] sm:$0xff]
      %v5786 = vld [vmem:[%s7 + $0x3a0] sm:$0xff]
      %v5787 = vld [vmem:[%s7 + $0x3a8] sm:$0xff]
      %v5788 = vld [vmem:[%s7 + $0x3b0] sm:$0xff]
      %v5789 = vld [vmem:[%s7 + $0x3b8] sm:$0xff]
      %v5790 = vld [vmem:[%s7 + $0x3c0] sm:$0xff]
      %v5791 = vld [vmem:[%s7 + $0x3c8] sm:$0xff]
      %v5792 = vld [vmem:[%s7 + $0x3d0] sm:$0xff]
      %v5793 = vld [vmem:[%s7 + $0x3d8] sm:$0xff]
      %v5794 = vld [vmem:[%s7 + $0x3e0] sm:$0xff]
      %v5795 = vld [vmem:[%s7 + $0x3e8] sm:$0xff]
      %v5796 = vld [vmem:[%s7 + $0x3f0] sm:$0xff]
      %v5797 = vld [vmem:[%s7 + $0x3f8] sm:$0xff]
      %5798 = vmatprep.subr.mxu0 0.0
      %5799 = vmatpush1.msra.mxu0 %v5670
      %5800 = vmatprep.subr.mxu0 0.0
      %5801 = vmatpush1.msra.mxu0 %v5671
      %5802 = vmatprep.subr.mxu0 0.0
      %5803 = vmatpush1.msra.mxu0 %v5672
      %5804 = vmatprep.subr.mxu0 0.0
      %5805 = vmatpush1.msra.mxu0 %v5673
      %5806 = vmatprep.subr.mxu0 0.0
      %5807 = vmatpush1.msra.mxu0 %v5674
      %5808 = vmatprep.subr.mxu0 0.0
      %5809 = vmatpush1.msra.mxu0 %v5675
      %5810 = vmatprep.subr.mxu0 0.0
      %5811 = vmatpush1.msra.mxu0 %v5676
      %5812 = vmatprep.subr.mxu0 0.0
      %5813 = vmatpush1.msra.mxu0 %v5677
      %5814 = vmatprep.subr.mxu0 0.0
      %5815 = vmatpush1.msra.mxu0 %v5678
      %5816 = vmatprep.subr.mxu0 0.0
      %5817 = vmatpush1.msra.mxu0 %v5679
      %5818 = vmatprep.subr.mxu0 0.0
      %5819 = vmatpush1.msra.mxu0 %v5680
      %5820 = vmatprep.subr.mxu0 0.0
      %5821 = vmatpush1.msra.mxu0 %v5681
      %5822 = vmatprep.subr.mxu0 0.0
      %5823 = vmatpush1.msra.mxu0 %v5682
      %5824 = vmatprep.subr.mxu0 0.0
      %5825 = vmatpush1.msra.mxu0 %v5683
      %5826 = vmatprep.subr.mxu0 0.0
      %5827 = vmatpush1.msra.mxu0 %v5684
      %5828 = vmatprep.subr.mxu0 0.0
      %5829 = vmatpush1.msra.mxu0 %v5685
      %5830 = vmatprep.subr.mxu0 0.0
      %5831 = vmatpush1.msra.mxu0 %v5686
      %5832 = vmatprep.subr.mxu0 0.0
      %5833 = vmatpush1.msra.mxu0 %v5687
      %5834 = vmatprep.subr.mxu0 0.0
      %5835 = vmatpush1.msra.mxu0 %v5688
      %5836 = vmatprep.subr.mxu0 0.0
      %5837 = vmatpush1.msra.mxu0 %v5689
      %5838 = vmatprep.subr.mxu0 0.0
      %5839 = vmatpush1.msra.mxu0 %v5690
      %5840 = vmatprep.subr.mxu0 0.0
      %5841 = vmatpush1.msra.mxu0 %v5691
      %5842 = vmatprep.subr.mxu0 0.0
      %5843 = vmatpush1.msra.mxu0 %v5692
      %5844 = vmatprep.subr.mxu0 0.0
      %5845 = vmatpush1.msra.mxu0 %v5693
      %5846 = vmatprep.subr.mxu0 0.0
      %5847 = vmatpush1.msra.mxu0 %v5694
      %5848 = vmatprep.subr.mxu0 0.0
      %5849 = vmatpush1.msra.mxu0 %v5695
      %5850 = vmatprep.subr.mxu0 0.0
      %5851 = vmatpush1.msra.mxu0 %v5696
      %5852 = vmatprep.subr.mxu0 0.0
      %5853 = vmatpush1.msra.mxu0 %v5697
      %5854 = vmatprep.subr.mxu0 0.0
      %5855 = vmatpush1.msra.mxu0 %v5698
      %5856 = vmatprep.subr.mxu0 0.0
      %5857 = vmatpush1.msra.mxu0 %v5699
      %5858 = vmatprep.subr.mxu0 0.0
      %5859 = vmatpush1.msra.mxu0 %v5700
      %5860 = vmatprep.subr.mxu0 0.0
      %5861 = vmatpush1.msra.mxu0 %v5701
      %5862 = vmatprep.mubr.f32.mxu0 %v5639
      %5863 = vmatmul.mubr.f32.gmra.mrb[0].mxu0 %v5638
      %v5864 = vpop.f32.mrb[0].mxu0
      %v5865 = vadd.f32 0.0, %v5864
      %v5866 = vpop.f32.mrb[0].mxu0
      %5867 = vmatprep.mubr.f32.mxu0 %v5647
      %5868 = vmatmul.mubr.f32.gmra.mrb[0].mxu0 %v5646
      %v5869 = vpop.f32.mrb[0].mxu0
      %v5870 = vadd.f32 0.0, %v5869
      %v5871 = vpop.f32.mrb[0].mxu0
      %5872 = vmatprep.mubr.f32.mxu0 %v5655
      %5873 = vmatmul.mubr.f32.gmra.mrb[0].mxu0 %v5654
      %v5874 = vpop.f32.mrb[0].mxu0
      %v5875 = vadd.f32 0.0, %v5874
      %v5876 = vpop.f32.mrb[0].mxu0
      %5877 = vmatprep.mubr.f32.mxu0 %v5663
      %5878 = vmatmul.mubr.f32.gmra.mrb[0].mxu0 %v5662
      %v5879 = vpop.f32.mrb[0].mxu0
      %v5880 = vadd.f32 0.0, %v5879
      %v5881 = vpop.f32.mrb[0].mxu0
      %5882 = vdwg.mxu0
      %5883 = vmatprep.subr.mxu0 0.0
      %5884 = vmatpush1.msra.mxu0 %v5702
      %5885 = vmatprep.subr.mxu0 0.0
      %5886 = vmatpush1.msra.mxu0 %v5703
      %5887 = vmatprep.subr.mxu0 0.0
      %5888 = vmatpush1.msra.mxu0 %v5704
      %5889 = vmatprep.subr.mxu0 0.0
      %5890 = vmatpush1.msra.mxu0 %v5705
      %5891 = vmatprep.subr.mxu0 0.0
      %5892 = vmatpush1.msra.mxu0 %v5706
      %5893 = vmatprep.subr.mxu0 0.0
      %5894 = vmatpush1.msra.mxu0 %v5707
      %5895 = vmatprep.subr.mxu0 0.0
      %5896 = vmatpush1.msra.mxu0 %v5708
      %5897 = vmatprep.subr.mxu0 0.0
      %5898 = vmatpush1.msra.mxu0 %v5709
      %5899 = vmatprep.subr.mxu0 0.0
      %5900 = vmatpush1.msra.mxu0 %v5710
      %5901 = vmatprep.subr.mxu0 0.0
      %5902 = vmatpush1.msra.mxu0 %v5711
      %5903 = vmatprep.subr.mxu0 0.0
      %5904 = vmatpush1.msra.mxu0 %v5712
      %5905 = vmatprep.subr.mxu0 0.0
      %5906 = vmatpush1.msra.mxu0 %v5713
      %5907 = vmatprep.subr.mxu0 0.0
      %5908 = vmatpush1.msra.mxu0 %v5714
      %5909 = vmatprep.subr.mxu0 0.0
      %5910 = vmatpush1.msra.mxu0 %v5715
      %5911 = vmatprep.subr.mxu0 0.0
      %5912 = vmatpush1.msra.mxu0 %v5716
      %5913 = vmatprep.subr.mxu0 0.0
      %5914 = vmatpush1.msra.mxu0 %v5717
      %5915 = vmatprep.subr.mxu0 0.0
      %5916 = vmatpush1.msra.mxu0 %v5718
      %5917 = vmatprep.subr.mxu0 0.0
      %5918 = vmatpush1.msra.mxu0 %v5719
      %5919 = vmatprep.subr.mxu0 0.0
      %5920 = vmatpush1.msra.mxu0 %v5720
      %5921 = vmatprep.subr.mxu0 0.0
      %5922 = vmatpush1.msra.mxu0 %v5721
      %5923 = vmatprep.subr.mxu0 0.0
      %5924 = vmatpush1.msra.mxu0 %v5722
      %5925 = vmatprep.subr.mxu0 0.0
      %5926 = vmatpush1.msra.mxu0 %v5723
      %5927 = vmatprep.subr.mxu0 0.0
      %5928 = vmatpush1.msra.mxu0 %v5724
      %5929 = vmatprep.subr.mxu0 0.0
      %5930 = vmatpush1.msra.mxu0 %v5725
      %5931 = vmatprep.subr.mxu0 0.0
      %5932 = vmatpush1.msra.mxu0 %v5726
      %5933 = vmatprep.subr.mxu0 0.0
      %5934 = vmatpush1.msra.mxu0 %v5727
      %5935 = vmatprep.subr.mxu0 0.0
      %5936 = vmatpush1.msra.mxu0 %v5728
      %5937 = vmatprep.subr.mxu0 0.0
      %5938 = vmatpush1.msra.mxu0 %v5729
      %5939 = vmatprep.subr.mxu0 0.0
      %5940 = vmatpush1.msra.mxu0 %v5730
      %5941 = vmatprep.subr.mxu0 0.0
      %5942 = vmatpush1.msra.mxu0 %v5731
      %5943 = vmatprep.subr.mxu0 0.0
      %5944 = vmatpush1.msra.mxu0 %v5732
      %5945 = vmatprep.subr.mxu0 0.0
      %5946 = vmatpush1.msra.mxu0 %v5733
      %5947 = vmatprep.mubr.f32.mxu0 %v5641
      %5948 = vmatmul.mubr.f32.gmra.mrb[0].mxu0 %v5640
      %v5949 = vpop.f32.mrb[0].mxu0
      %v5950 = vadd.f32 %v5865, %v5949
      %v5951 = vpop.f32.mrb[0].mxu0
      %5952 = vmatprep.mubr.f32.mxu0 %v5649
      %5953 = vmatmul.mubr.f32.gmra.mrb[0].mxu0 %v5648
      %v5954 = vpop.f32.mrb[0].mxu0
      %v5955 = vadd.f32 %v5870, %v5954
      %v5956 = vpop.f32.mrb[0].mxu0
      %5957 = vmatprep.mubr.f32.mxu0 %v5657
      %5958 = vmatmul.mubr.f32.gmra.mrb[0].mxu0 %v5656
      %v5959 = vpop.f32.mrb[0].mxu0
      %v5960 = vadd.f32 %v5875, %v5959
      %v5961 = vpop.f32.mrb[0].mxu0
      %5962 = vmatprep.mubr.f32.mxu0 %v5665
      %5963 = vmatmul.mubr.f32.gmra.mrb[0].mxu0 %v5664
      %v5964 = vpop.f32.mrb[0].mxu0
      %v5965 = vadd.f32 %v5880, %v5964
      %v5966 = vpop.f32.mrb[0].mxu0
      %5967 = vdwg.mxu0
      %5968 = vmatprep.subr.mxu0 0.0
      %5969 = vmatpush1.msra.mxu0 %v5734
      %5970 = vmatprep.subr.mxu0 0.0
      %5971 = vmatpush1.msra.mxu0 %v5735
      %5972 = vmatprep.subr.mxu0 0.0
      %5973 = vmatpush1.msra.mxu0 %v5736
      %5974 = vmatprep.subr.mxu0 0.0
      %5975 = vmatpush1.msra.mxu0 %v5737
      %5976 = vmatprep.subr.mxu0 0.0
      %5977 = vmatpush1.msra.mxu0 %v5738
      %5978 = vmatprep.subr.mxu0 0.0
      %5979 = vmatpush1.msra.mxu0 %v5739
      %5980 = vmatprep.subr.mxu0 0.0
      %5981 = vmatpush1.msra.mxu0 %v5740
      %5982 = vmatprep.subr.mxu0 0.0
      %5983 = vmatpush1.msra.mxu0 %v5741
      %5984 = vmatprep.subr.mxu0 0.0
      %5985 = vmatpush1.msra.mxu0 %v5742
      %5986 = vmatprep.subr.mxu0 0.0
      %5987 = vmatpush1.msra.mxu0 %v5743
      %5988 = vmatprep.subr.mxu0 0.0
      %5989 = vmatpush1.msra.mxu0 %v5744
      %5990 = vmatprep.subr.mxu0 0.0
      %5991 = vmatpush1.msra.mxu0 %v5745
      %5992 = vmatprep.subr.mxu0 0.0
      %5993 = vmatpush1.msra.mxu0 %v5746
      %5994 = vmatprep.subr.mxu0 0.0
      %5995 = vmatpush1.msra.mxu0 %v5747
      %5996 = vmatprep.subr.mxu0 0.0
      %5997 = vmatpush1.msra.mxu0 %v5748
      %5998 = vmatprep.subr.mxu0 0.0
      %5999 = vmatpush1.msra.mxu0 %v5749
      %6000 = vmatprep.subr.mxu0 0.0
      %6001 = vmatpush1.msra.mxu0 %v5750
      %6002 = vmatprep.subr.mxu0 0.0
      %6003 = vmatpush1.msra.mxu0 %v5751
      %6004 = vmatprep.subr.mxu0 0.0
      %6005 = vmatpush1.msra.mxu0 %v5752
      %6006 = vmatprep.subr.mxu0 0.0
      %6007 = vmatpush1.msra.mxu0 %v5753
      %6008 = vmatprep.subr.mxu0 0.0
      %6009 = vmatpush1.msra.mxu0 %v5754
      %6010 = vmatprep.subr.mxu0 0.0
      %6011 = vmatpush1.msra.mxu0 %v5755
      %6012 = vmatprep.subr.mxu0 0.0
      %6013 = vmatpush1.msra.mxu0 %v5756
      %6014 = vmatprep.subr.mxu0 0.0
      %6015 = vmatpush1.msra.mxu0 %v5757
      %6016 = vmatprep.subr.mxu0 0.0
      %6017 = vmatpush1.msra.mxu0 %v5758
      %6018 = vmatprep.subr.mxu0 0.0
      %6019 = vmatpush1.msra.mxu0 %v5759
      %6020 = vmatprep.subr.mxu0 0.0
      %6021 = vmatpush1.msra.mxu0 %v5760
      %6022 = vmatprep.subr.mxu0 0.0
      %6023 = vmatpush1.msra.mxu0 %v5761
      %6024 = vmatprep.subr.mxu0 0.0
      %6025 = vmatpush1.msra.mxu0 %v5762
      %6026 = vmatprep.subr.mxu0 0.0
      %6027 = vmatpush1.msra.mxu0 %v5763
      %6028 = vmatprep.subr.mxu0 0.0
      %6029 = vmatpush1.msra.mxu0 %v5764
      %6030 = vmatprep.subr.mxu0 0.0
      %6031 = vmatpush1.msra.mxu0 %v5765
      %6032 = vmatprep.mubr.f32.mxu0 %v5643
      %6033 = vmatmul.mubr.f32.gmra.mrb[0].mxu0 %v5642
      %v6034 = vpop.f32.mrb[0].mxu0
      %v6035 = vadd.f32 %v5950, %v6034
      %v6036 = vpop.f32.mrb[0].mxu0
      %6037 = vmatprep.mubr.f32.mxu0 %v5651
      %6038 = vmatmul.mubr.f32.gmra.mrb[0].mxu0 %v5650
      %v6039 = vpop.f32.mrb[0].mxu0
      %v6040 = vadd.f32 %v5955, %v6039
      %v6041 = vpop.f32.mrb[0].mxu0
      %6042 = vmatprep.mubr.f32.mxu0 %v5659
      %6043 = vmatmul.mubr.f32.gmra.mrb[0].mxu0 %v5658
      %v6044 = vpop.f32.mrb[0].mxu0
      %v6045 = vadd.f32 %v5960, %v6044
      %v6046 = vpop.f32.mrb[0].mxu0
      %6047 = vmatprep.mubr.f32.mxu0 %v5667
      %6048 = vmatmul.mubr.f32.gmra.mrb[0].mxu0 %v5666
      %v6049 = vpop.f32.mrb[0].mxu0
      %v6050 = vadd.f32 %v5965, %v6049
      %v6051 = vpop.f32.mrb[0].mxu0
      %6052 = vdwg.mxu0
      %6053 = vmatprep.subr.mxu0 0.0
      %6054 = vmatpush1.msra.mxu0 %v5766
      %6055 = vmatprep.subr.mxu0 0.0
      %6056 = vmatpush1.msra.mxu0 %v5767
      %6057 = vmatprep.subr.mxu0 0.0
      %6058 = vmatpush1.msra.mxu0 %v5768
      %6059 = vmatprep.subr.mxu0 0.0
      %6060 = vmatpush1.msra.mxu0 %v5769
      %6061 = vmatprep.subr.mxu0 0.0
      %6062 = vmatpush1.msra.mxu0 %v5770
      %6063 = vmatprep.subr.mxu0 0.0
      %6064 = vmatpush1.msra.mxu0 %v5771
      %6065 = vmatprep.subr.mxu0 0.0
      %6066 = vmatpush1.msra.mxu0 %v5772
      %6067 = vmatprep.subr.mxu0 0.0
      %6068 = vmatpush1.msra.mxu0 %v5773
      %6069 = vmatprep.subr.mxu0 0.0
      %6070 = vmatpush1.msra.mxu0 %v5774
      %6071 = vmatprep.subr.mxu0 0.0
      %6072 = vmatpush1.msra.mxu0 %v5775
      %6073 = vmatprep.subr.mxu0 0.0
      %6074 = vmatpush1.msra.mxu0 %v5776
      %6075 = vmatprep.subr.mxu0 0.0
      %6076 = vmatpush1.msra.mxu0 %v5777
      %6077 = vmatprep.subr.mxu0 0.0
      %6078 = vmatpush1.msra.mxu0 %v5778
      %6079 = vmatprep.subr.mxu0 0.0
      %6080 = vmatpush1.msra.mxu0 %v5779
      %6081 = vmatprep.subr.mxu0 0.0
      %6082 = vmatpush1.msra.mxu0 %v5780
      %6083 = vmatprep.subr.mxu0 0.0
      %6084 = vmatpush1.msra.mxu0 %v5781
      %6085 = vmatprep.subr.mxu0 0.0
      %6086 = vmatpush1.msra.mxu0 %v5782
      %6087 = vmatprep.subr.mxu0 0.0
      %6088 = vmatpush1.msra.mxu0 %v5783
      %6089 = vmatprep.subr.mxu0 0.0
      %6090 = vmatpush1.msra.mxu0 %v5784
      %6091 = vmatprep.subr.mxu0 0.0
      %6092 = vmatpush1.msra.mxu0 %v5785
      %6093 = vmatprep.subr.mxu0 0.0
      %6094 = vmatpush1.msra.mxu0 %v5786
      %6095 = vmatprep.subr.mxu0 0.0
      %6096 = vmatpush1.msra.mxu0 %v5787
      %6097 = vmatprep.subr.mxu0 0.0
      %6098 = vmatpush1.msra.mxu0 %v5788
      %6099 = vmatprep.subr.mxu0 0.0
      %6100 = vmatpush1.msra.mxu0 %v5789
      %6101 = vmatprep.subr.mxu0 0.0
      %6102 = vmatpush1.msra.mxu0 %v5790
      %6103 = vmatprep.subr.mxu0 0.0
      %6104 = vmatpush1.msra.mxu0 %v5791
      %6105 = vmatprep.subr.mxu0 0.0
      %6106 = vmatpush1.msra.mxu0 %v5792
      %6107 = vmatprep.subr.mxu0 0.0
      %6108 = vmatpush1.msra.mxu0 %v5793
      %6109 = vmatprep.subr.mxu0 0.0
      %6110 = vmatpush1.msra.mxu0 %v5794
      %6111 = vmatprep.subr.mxu0 0.0
      %6112 = vmatpush1.msra.mxu0 %v5795
      %6113 = vmatprep.subr.mxu0 0.0
      %6114 = vmatpush1.msra.mxu0 %v5796
      %6115 = vmatprep.subr.mxu0 0.0
      %6116 = vmatpush1.msra.mxu0 %v5797
      %6117 = vmatprep.mubr.f32.mxu0 %v5645
      %6118 = vmatmul.mubr.f32.gmra.mrb[0].mxu0 %v5644
      %v6119 = vpop.f32.mrb[0].mxu0
      %v6120 = vadd.f32 %v6035, %v6119
      %v6121 = vpop.f32.mrb[0].mxu0
      %6122 = vmatprep.mubr.f32.mxu0 %v5653
      %6123 = vmatmul.mubr.f32.gmra.mrb[0].mxu0 %v5652
      %v6124 = vpop.f32.mrb[0].mxu0
      %v6125 = vadd.f32 %v6040, %v6124
      %v6126 = vpop.f32.mrb[0].mxu0
      %6127 = vmatprep.mubr.f32.mxu0 %v5661
      %6128 = vmatmul.mubr.f32.gmra.mrb[0].mxu0 %v5660
      %v6129 = vpop.f32.mrb[0].mxu0
      %v6130 = vadd.f32 %v6045, %v6129
      %v6131 = vpop.f32.mrb[0].mxu0
      %6132 = vmatprep.mubr.f32.mxu0 %v5669
      %6133 = vmatmul.mubr.f32.gmra.mrb[0].mxu0 %v5668
      %v6134 = vpop.f32.mrb[0].mxu0
      %v6135 = vadd.f32 %v6050, %v6134
      %v6136 = vpop.f32.mrb[0].mxu0
      %6137 = vdwg.mxu0
      %v6138 = vld [vmem:[%s5] sm:$0xff]
      %v6139 = vld [vmem:[%s5 + $0x8] sm:$0xff]
      %v6140 = vld [vmem:[%s6] sm:$0xff]
      %v6141 = vld [vmem:[%s6 + $0x8] sm:$0xff]
      %6143 = vset.pattern.permute.xlu0 0
      %6144 = vperm.xlu0 %6143, %v6140
      %v6145 = vpop.permute.xlu0 %6144
      %6148 = vset.pattern.permute.xlu0 0
      %6149 = vperm.xlu0 %6148, %v6141
      %v6150 = vpop.permute.xlu0 %6149
      %vm6152 = vcmask 261120
      %v6154 = vsel %vm6152, %v6138, 0
      %v6157 = vsel %vm6152, %v6139, 0
      %6159 = vmatprep.subr.mxu0 0.0
      %6160 = vmatpush1.msra.mxu0 %v6120
      %6161 = vmatprep.subr.mxu0 0.0
      %6162 = vmatpush1.msra.mxu0 %v6125
      %6163 = vmatprep.subr.mxu0 0.0
      %6164 = vmatpush1.msra.mxu0 %v6130
      %6165 = vmatprep.subr.mxu0 0.0
      %6166 = vmatpush1.msra.mxu0 %v6135
      %6167 = vmatprep.subr.mxu0 0.0
      %6168 = vmatpush1.msra.mxu0 0.0
      %6169 = vmatprep.subr.mxu0 0.0
      %6170 = vmatpush1.msra.mxu0 0.0
      %6171 = vmatprep.subr.mxu0 0.0
      %6172 = vmatpush1.msra.mxu0 0.0
      %6173 = vmatprep.subr.mxu0 0.0
      %6174 = vmatpush1.msra.mxu0 0.0
      %6175 = vmatprep.subr.mxu0 0.0
      %6176 = vmatpush1.msra.mxu0 0.0
      %6177 = vmatprep.subr.mxu0 0.0
      %6178 = vmatpush1.msra.mxu0 0.0
      %6179 = vmatprep.subr.mxu0 0.0
      %6180 = vmatpush1.msra.mxu0 0.0
      %6181 = vmatprep.subr.mxu0 0.0
      %6182 = vmatpush1.msra.mxu0 0.0
      %6183 = vmatprep.subr.mxu0 0.0
      %6184 = vmatpush1.msra.mxu0 0.0
      %6185 = vmatprep.subr.mxu0 0.0
      %6186 = vmatpush1.msra.mxu0 0.0
      %6187 = vmatprep.subr.mxu0 0.0
      %6188 = vmatpush1.msra.mxu0 0.0
      %6189 = vmatprep.subr.mxu0 0.0
      %6190 = vmatpush1.msra.mxu0 0.0
      %6191 = vmatprep.subr.mxu0 0.0
      %6192 = vmatpush1.msra.mxu0 0.0
      %6193 = vmatprep.subr.mxu0 0.0
      %6194 = vmatpush1.msra.mxu0 0.0
      %6195 = vmatprep.subr.mxu0 0.0
      %6196 = vmatpush1.msra.mxu0 0.0
      %6197 = vmatprep.subr.mxu0 0.0
      %6198 = vmatpush1.msra.mxu0 0.0
      %6199 = vmatprep.subr.mxu0 0.0
      %6200 = vmatpush1.msra.mxu0 0.0
      %6201 = vmatprep.subr.mxu0 0.0
      %6202 = vmatpush1.msra.mxu0 0.0
      %6203 = vmatprep.subr.mxu0 0.0
      %6204 = vmatpush1.msra.mxu0 0.0
      %6205 = vmatprep.subr.mxu0 0.0
      %6206 = vmatpush1.msra.mxu0 0.0
      %6207 = vmatprep.subr.mxu0 0.0
      %6208 = vmatpush1.msra.mxu0 0.0
      %6209 = vmatprep.subr.mxu0 0.0
      %6210 = vmatpush1.msra.mxu0 0.0
      %6211 = vmatprep.subr.mxu0 0.0
      %6212 = vmatpush1.msra.mxu0 0.0
      %6213 = vmatprep.subr.mxu0 0.0
      %6214 = vmatpush1.msra.mxu0 0.0
      %6215 = vmatprep.subr.mxu0 0.0
      %6216 = vmatpush1.msra.mxu0 0.0
      %6217 = vmatprep.subr.mxu0 0.0
      %6218 = vmatpush1.msra.mxu0 0.0
      %6219 = vmatprep.subr.mxu0 0.0
      %6220 = vmatpush1.msra.mxu0 0.0
      %6221 = vmatprep.subr.mxu0 0.0
      %6222 = vmatpush1.msra.mxu0 0.0
      %6223 = vmatprep.mubr.f32.mxu0 0.0
      %6224 = vmatmul.mubr.f32.gmra.mrb[0].mxu0 %v6154
      %v6225 = vpop.f32.mrb[0].mxu0
      %v6226 = vadd.f32 %v6145, %v6225
      %v6227 = vpop.f32.mrb[0].mxu0
      %6228 = vmatprep.mubr.f32.mxu0 0.0
      %6229 = vmatmul.mubr.f32.gmra.mrb[0].mxu0 %v6157
      %v6230 = vpop.f32.mrb[0].mxu0
      %v6231 = vadd.f32 %v6150, %v6230
      %v6232 = vpop.f32.mrb[0].mxu0
      %6233 = vdwg.mxu0
      %v6234 = vmul.f32 %v6231, 0.5
      %v6235 = vmul.f32 %v6234, 1.442695
      %v6236 = vpow.pop %v6235
      %v6237 = vld [vmem:[%s344] sm:$0xff]
      %v6238 = vmul.f32 %v6236, %v6237
      %v6239 = vadd.f32 %v6226, %v6238
      %vm6240 = vcmask 64512
      %6241 = vst.msk [vmem:[%s349] sm:$0xff] %vm6240, %v6239
      %6242 = vst.msk [vmem:[%s349 + $0x8] sm:$0xff] %vm6240, %v6226
      %6243 = vst.msk [vmem:[%s349 + $0x10] sm:$0xff] %vm6240, %v6231
      %p6244 = scmp.lt.s32.totalorder %s20, 1
      %s6245 = scalar_select %p6244, %s20, 1
      %s6246 = smul.addr %s6245, 3
      %s6247 = smul.addr %s6246, 8
      %s6248 = scalar_lea.vmem %s9, %s6247
      // Predicated region
      $region57: #{tpu_custom_call.1} parent=55 // pred_check
        %p6249 = pneg %p237
      $region58: #{tpu_custom_call.1} parent=55 // pred_check_branch
        %6251 = sbr.rel (%p6249) target = $region60
      $region59: #{tpu_custom_call.1} parent=55 // pred_region
        _
      $region60: #{tpu_custom_call.1} parent=55 // pred_fallthru
        _
    $region56: #{tpu_custom_call.1} parent=5 // pred_fallthru
      _
    %p6252 = scmp.le.s32.totalorder 2, %s15
    // Predicated region
    $region61: #{tpu_custom_call.1} parent=5 // pred_check
      %p6253 = pneg %p6252
    $region62: #{tpu_custom_call.1} parent=5 // pred_check_branch
      %6255 = sbr.rel (%p6253) target = $region64
    $region63: #{tpu_custom_call.1} parent=5 // pred_region
      %s6256 = ssub.s32 %s15, 2
      // Predicated region
      $region65: #{tpu_custom_call.1} parent=63 // pred_check
        %p6257 = pneg %p243
      $region66: #{tpu_custom_call.1} parent=63 // pred_check_branch
        %6259 = sbr.rel (%p6257) target = $region68
      $region67: #{tpu_custom_call.1} parent=63 // pred_region
        %p6260 = scmp.lt.s32.totalorder %s21, 1
        %s6261 = scalar_select %p6260, %s21, 1
        %s6262 = smul.addr %s6261, 3
        %s6263 = smul.addr %s6262, 8
        %s6264 = scalar_lea.vmem %s9, %s6263
      $region68: #{tpu_custom_call.1} parent=63 // pred_fallthru
        _
    $region64: #{tpu_custom_call.1} parent=5 // pred_fallthru
      _
  $region6: #{tpu_custom_call.1} parent=0 // loop_footer
    %s19 = sadd.s32 1, %s15
  $region7: #{tpu_custom_call.1} parent=0 // loop_footer_branch
    %14 = sbr.rel target = $region3
  $region8: #{tpu_custom_call.1} parent=0 // loop_exit
    _

</llo_original>
